<compile_context>
chip_gen: v6e
topology: v6e:2x2x1
jax: 0.10.0
libtpu: 0.0.40
codegen_flags: <defaults>
</compile_context>

<pallas_src>
import functools

import jax
import jax.numpy as jnp
from jax.experimental import pallas as pl
from jax.experimental.pallas import tpu as pltpu


LEAKY_SLOPE = 0.01                 # PyTorch nn.LeakyReLU default
RES_WIDTHS = (512, 256, 128, 32)   # ResMLP block widths in PNet
LANE_PAD = 128                     # lane-dense padding for narrow layers
SLAB_WIDTHS = (512, 256, 128)      # weight slabs grouped by padded fan_out


def _leaky_relu(x):
    # Exact for 0 < slope < 1: max(x, slope*x) == leaky_relu(x).
    # 2 VALU ops (mul+max) instead of 3 (cmp+mul+select).
    return jnp.maximum(x, LEAKY_SLOPE * x)


def _round_up(x, m):
    return ((x + m - 1) // m) * m


def layer_shapes(input_size, output_size):
    """Real (fan_in, fan_out) of the 13 Linear layers in forward order."""
    dims = []
    prev = input_size
    for w in RES_WIDTHS:
        dims += [(prev, w), (w, w), (w, w)]   # fc1, fc11, fc12
        prev = w
    dims.append((prev, output_size))          # final fc
    return dims


def build_layer_meta(input_size, output_size):
    """Static packing metadata.

    meta[i] = (slab_idx, row_offset, fan_in_padded, fan_out_padded,
               fan_in_real, fan_out_real)
    slab_rows = {slab_width: total_rows}
    """
    assert output_size <= LANE_PAD, "final layer padding assumes output<=128"
    real = layer_shapes(input_size, output_size)
    slab_rows = {w: 0 for w in SLAB_WIDTHS}
    meta = []
    fin_pad = input_size             # network input itself is not lane-padded
    for (fin, fout) in real:
        fout_pad = max(fout, LANE_PAD)
        slab_idx = SLAB_WIDTHS.index(fout_pad)
        row = slab_rows[fout_pad]
        slab_rows[fout_pad] += fin_pad
        meta.append((slab_idx, row, fin_pad, fout_pad, fin, fout))
        fin_pad = fout_pad
    return tuple(meta), slab_rows


def make_pnet_params(key, input_size, output_size):
    """PyTorch-default Linear init: [(w (in,out) f32, b (out,) f32), ...]."""
    params = []
    for i, (fan_in, fan_out) in enumerate(layer_shapes(input_size, output_size)):
        kw, kb = jax.random.split(jax.random.fold_in(key, i))
        bound = 1.0 / (fan_in ** 0.5)
        w = jax.random.uniform(kw, (fan_in, fan_out), jnp.float32, -bound, bound)
        b = jax.random.uniform(kb, (fan_out,), jnp.float32, -bound, bound)
        params.append((w, b))
    return params


def pack_params(params, meta, slab_rows):
    """Pack per-layer params into 3 bf16 weight slabs + one f32 bias slab.

    All padding is exact zeros, so padded lanes stay zero through the net.
    """
    slabs = {w: jnp.zeros((slab_rows[w], w), jnp.bfloat16) for w in SLAB_WIDTHS}
    bias = jnp.zeros((len(meta), max(SLAB_WIDTHS)), jnp.float32)
    for i, ((w, b), (slab_idx, row, _fin_pad, _fout_pad, fin, fout)) in enumerate(
            zip(params, meta)):
        width = SLAB_WIDTHS[slab_idx]
        slabs[width] = slabs[width].at[row:row + fin, :fout].set(
            w.astype(jnp.bfloat16))
        bias = bias.at[i, :fout].set(b)
    return slabs[512], slabs[256], slabs[128], bias


def pnet_kernel(x_ref, w512_ref, w256_ref, w128_ref, b_ref, out_ref, *,
                layer_meta):
    """Fused PNet forward for one (TB, in_features) batch tile.

    Weights are bf16 slabs resident in VMEM; activations are bf16 between
    layers; every dot runs on the MXU with bf16 inputs and f32 accumulation.
    Bias add happens in f32 on the accumulator, then one cast back to bf16.
    Dropout = identity (eval mode).
    """
    w_refs = (w512_ref, w256_ref, w128_ref)

    def linear(x_bf16, i):
        slab_idx, row, fin_pad, fout_pad, _, _ = layer_meta[i]
        w = w_refs[slab_idx][row:row + fin_pad, :]       # bf16 (fin_pad, fout_pad)
        b = b_ref[i:i + 1, :fout_pad]                    # f32  (1, fout_pad)
        y = jnp.dot(x_bf16, w,
                    preferred_element_type=jnp.float32)  # MXU, f32 accumulation
        return (y + b).astype(jnp.bfloat16)              # single cast per layer

    x = x_ref[...].astype(jnp.bfloat16)
    li = 0
    for _ in range(4):                                   # 4 ResMLP blocks
        h = _leaky_relu(linear(x, li)); li += 1          # fc1
        dh = _leaky_relu(linear(h, li)); li += 1         # fc11 (+dropout=id)
        dh = _leaky_relu(linear(dh, li)); li += 1        # fc12 (+dropout=id)
        x = h + dh                                       # residual (bf16)
    out_ref[...] = linear(x, li).astype(out_ref.dtype)   # final fc (lane-padded)


@functools.partial(jax.jit,
                   static_argnames=("output_size", "layer_meta", "tile_b"))
def pnet_forward(x, w512, w256, w128, bias, *, output_size, layer_meta,
                 tile_b=512):
    batch, in_features = x.shape

    # Batch tile: big enough to amortize per-step overhead, multiple of 16
    # rows (bf16 sublane packing), and split so the grid has >=2 steps when
    # possible (lets v7x's two TensorCores share the "parallel" batch axis).
    tile_b = max(16, (tile_b // 16) * 16)
    tb = min(tile_b, max(16, _round_up(pl.cdiv(batch, 2), 16)))
    if tb >= batch:
        tb = batch                      # single full-extent tile
    grid = (pl.cdiv(batch, tb),)

    flops = 2 * batch * sum(m[2] * m[3] for m in layer_meta)
    bytes_accessed = (x.size * x.dtype.itemsize
                      + w512.size * 2 + w256.size * 2 + w128.size * 2
                      + bias.size * 4
                      + batch * LANE_PAD * 2)            # bf16 padded output

    out_padded = pl.pallas_call(
        functools.partial(pnet_kernel, layer_meta=layer_meta),
        out_shape=jax.ShapeDtypeStruct((batch, LANE_PAD), jnp.bfloat16),
        grid=grid,
        in_specs=[
            # streaming activation tile
            pl.BlockSpec((tb, in_features), lambda i: (i, 0)),
            # parameter slabs: constant block index -> stay VMEM-resident
            pl.BlockSpec(w512.shape, lambda i: (0, 0)),
            pl.BlockSpec(w256.shape, lambda i: (0, 0)),
            pl.BlockSpec(w128.shape, lambda i: (0, 0)),
            pl.BlockSpec(bias.shape, lambda i: (0, 0)),
        ],
        out_specs=pl.BlockSpec((tb, LANE_PAD), lambda i: (i, 0)),
        compiler_params=pltpu.CompilerParams(
            dimension_semantics=("parallel",)),
        cost_estimate=pl.CostEstimate(
            flops=flops, transcendentals=0, bytes_accessed=bytes_accessed),
    )(x, w512, w256, w128, bias)
    # Tiny (B, output_size) slice; cast back to f32 for a friendly interface.
    return out_padded[:, :output_size].astype(jnp.float32)


def pnet_reference(x, params):
    """Pure-JAX reference mirroring the kernel's bf16-weight / bf16-activation
    arithmetic (f32 MXU accumulation, f32 bias add, bf16 between layers)."""
    def linear(x_bf16, i):
        w, b = params[i]
        y = jnp.dot(x_bf16, w.astype(jnp.bfloat16),
                    preferred_element_type=jnp.float32)
        return (y + b).astype(jnp.bfloat16)

    x = x.astype(jnp.bfloat16)
    li = 0
    for _ in range(4):
        h = _leaky_relu(linear(x, li)); li += 1
        dh = _leaky_relu(linear(h, li)); li += 1
        dh = _leaky_relu(linear(dh, li)); li += 1
        x = h + dh
    return linear(x, li).astype(jnp.float32)


if __name__ == "__main__":
    INPUT_SIZE = 32
    OUTPUT_SIZE = 8

    key = jax.random.PRNGKey(0)
    kx, kp = jax.random.split(key)
    params = make_pnet_params(kp, INPUT_SIZE, OUTPUT_SIZE)
    layer_meta, slab_rows = build_layer_meta(INPUT_SIZE, OUTPUT_SIZE)
    w512, w256, w128, bias = pack_params(params, layer_meta, slab_rows)

    # Small shape (single tile) and a multi-tile batch to exercise the grid
    # path (>=2 steps) with resident weights.
    for batch in (8, 512):
        xb = jax.random.normal(jax.random.fold_in(kx, batch),
                               (batch, INPUT_SIZE), jnp.float32)
        out = pnet_forward(xb, w512, w256, w128, bias,
                           output_size=OUTPUT_SIZE, layer_meta=layer_meta)
        out = jax.block_until_ready(out)
        ref = pnet_reference(xb, params)
        assert out.shape == (batch, OUTPUT_SIZE)
        # bf16 weights + bf16 intermediate activations in both kernel and
        # reference; tolerance covers MXU vs XLA accumulation-order deltas
        # crossing bf16 rounding boundaries across 13 layers.
        assert jnp.allclose(out, ref, atol=3e-2, rtol=3e-2), (
            f"mismatch at batch={batch}: "
            f"max_abs_err={float(jnp.max(jnp.abs(out - ref)))}")

    print("KERNEL_OK")
</pallas_src>

<mosaic_0001>
module attributes {stable_mosaic.version = 11 : i64} {
  func.func @pnet_kernel(%arg0: i32, %arg1: memref<8x32xf32, #tpu.memory_space<vmem>>, %arg2: memref<1056x512xbf16, #tpu.memory_space<vmem>>, %arg3: memref<1024x256xbf16, #tpu.memory_space<vmem>>, %arg4: memref<1024x128xbf16, #tpu.memory_space<vmem>>, %arg5: memref<13x512xf32, #tpu.memory_space<vmem>>, %arg6: memref<8x128xbf16, #tpu.memory_space<vmem>>) attributes {dimension_semantics = [#tpu.dimension_semantics<parallel>], iteration_bounds = array<i64: 1>, scalar_prefetch = 0 : i64, scratch_operands = 0 : i64, tpu.core_type = #tpu.core_type<tc>, window_params = [{transform_indices = @transform_0, window_bounds = array<i64: 8, 32>}, {pipeline_mode = #tpu.pipeline_mode<synchronous>, transform_indices = @transform_1, window_bounds = array<i64: 1056, 512>}, {pipeline_mode = #tpu.pipeline_mode<synchronous>, transform_indices = @transform_2, window_bounds = array<i64: 1024, 256>}, {pipeline_mode = #tpu.pipeline_mode<synchronous>, transform_indices = @transform_3, window_bounds = array<i64: 1024, 128>}, {pipeline_mode = #tpu.pipeline_mode<synchronous>, transform_indices = @transform_4, window_bounds = array<i64: 13, 512>}, {transform_indices = @transform_5, window_bounds = array<i64: 8, 128>}]} {
    %c0 = arith.constant 0 : index
    %c0_0 = arith.constant 0 : index
    %0 = vector.load %arg1[%c0, %c0_0] : memref<8x32xf32, #tpu.memory_space<vmem>>, vector<8x32xf32>
    %1 = arith.truncf %0 : vector<8x32xf32> to vector<8x32xbf16>
    %c0_1 = arith.constant 0 : index
    %c0_2 = arith.constant 0 : index
    %2 = vector.load %arg2[%c0_1, %c0_2] : memref<1056x512xbf16, #tpu.memory_space<vmem>>, vector<32x512xbf16>
    %c0_3 = arith.constant 0 : index
    %c0_4 = arith.constant 0 : index
    %3 = vector.load %arg5[%c0_3, %c0_4] : memref<13x512xf32, #tpu.memory_space<vmem>>, vector<1x512xf32>
    %cst = arith.constant dense<0.000000e+00> : vector<8x512xf32>
    %4 = tpu.matmul %1, %2, %cst {dimension_numbers = #tpu.dot_dimension_numbers<[1], [0], [0], [1], [0, 0, 1, 1], [], []>} : vector<8x32xbf16>, vector<32x512xbf16>, vector<8x512xf32> -> vector<8x512xf32>
    %5 = vector.broadcast %3 : vector<1x512xf32> to vector<8x512xf32>
    %6 = arith.addf %4, %5 : vector<8x512xf32>
    %7 = arith.truncf %6 : vector<8x512xf32> to vector<8x512xbf16>
    %cst_5 = arith.constant 1.000980e-02 : bf16
    %8 = vector.broadcast %cst_5 : bf16 to vector<8x512xbf16>
    %9 = arith.mulf %8, %7 : vector<8x512xbf16>
    %10 = arith.maximumf %7, %9 : vector<8x512xbf16>
    %c32 = arith.constant 32 : index
    %c0_6 = arith.constant 0 : index
    %11 = vector.load %arg2[%c32, %c0_6] : memref<1056x512xbf16, #tpu.memory_space<vmem>>, vector<512x512xbf16>
    %c1 = arith.constant 1 : index
    %c0_7 = arith.constant 0 : index
    %12 = vector.load %arg5[%c1, %c0_7] : memref<13x512xf32, #tpu.memory_space<vmem>>, vector<1x512xf32>
    %cst_8 = arith.constant dense<0.000000e+00> : vector<8x512xf32>
    %13 = tpu.matmul %10, %11, %cst_8 {dimension_numbers = #tpu.dot_dimension_numbers<[1], [0], [0], [1], [0, 0, 1, 1], [], []>} : vector<8x512xbf16>, vector<512x512xbf16>, vector<8x512xf32> -> vector<8x512xf32>
    %14 = vector.broadcast %12 : vector<1x512xf32> to vector<8x512xf32>
    %15 = arith.addf %13, %14 : vector<8x512xf32>
    %16 = arith.truncf %15 : vector<8x512xf32> to vector<8x512xbf16>
    %cst_9 = arith.constant 1.000980e-02 : bf16
    %17 = vector.broadcast %cst_9 : bf16 to vector<8x512xbf16>
    %18 = arith.mulf %17, %16 : vector<8x512xbf16>
    %19 = arith.maximumf %16, %18 : vector<8x512xbf16>
    %c544 = arith.constant 544 : index
    %c0_10 = arith.constant 0 : index
    %20 = vector.load %arg2[%c544, %c0_10] : memref<1056x512xbf16, #tpu.memory_space<vmem>>, vector<512x512xbf16>
    %c2 = arith.constant 2 : index
    %c0_11 = arith.constant 0 : index
    %21 = vector.load %arg5[%c2, %c0_11] : memref<13x512xf32, #tpu.memory_space<vmem>>, vector<1x512xf32>
    %cst_12 = arith.constant dense<0.000000e+00> : vector<8x512xf32>
    %22 = tpu.matmul %19, %20, %cst_12 {dimension_numbers = #tpu.dot_dimension_numbers<[1], [0], [0], [1], [0, 0, 1, 1], [], []>} : vector<8x512xbf16>, vector<512x512xbf16>, vector<8x512xf32> -> vector<8x512xf32>
    %23 = vector.broadcast %21 : vector<1x512xf32> to vector<8x512xf32>
    %24 = arith.addf %22, %23 : vector<8x512xf32>
    %25 = arith.truncf %24 : vector<8x512xf32> to vector<8x512xbf16>
    %cst_13 = arith.constant 1.000980e-02 : bf16
    %26 = vector.broadcast %cst_13 : bf16 to vector<8x512xbf16>
    %27 = arith.mulf %26, %25 : vector<8x512xbf16>
    %28 = arith.maximumf %25, %27 : vector<8x512xbf16>
    %29 = arith.addf %10, %28 : vector<8x512xbf16>
    %c0_14 = arith.constant 0 : index
    %c0_15 = arith.constant 0 : index
    %30 = vector.load %arg3[%c0_14, %c0_15] : memref<1024x256xbf16, #tpu.memory_space<vmem>>, vector<512x256xbf16>
    %c3 = arith.constant 3 : index
    %c0_16 = arith.constant 0 : index
    %31 = vector.load %arg5[%c3, %c0_16] : memref<13x512xf32, #tpu.memory_space<vmem>>, vector<1x256xf32>
    %cst_17 = arith.constant dense<0.000000e+00> : vector<8x256xf32>
    %32 = tpu.matmul %29, %30, %cst_17 {dimension_numbers = #tpu.dot_dimension_numbers<[1], [0], [0], [1], [0, 0, 1, 1], [], []>} : vector<8x512xbf16>, vector<512x256xbf16>, vector<8x256xf32> -> vector<8x256xf32>
    %33 = vector.broadcast %31 : vector<1x256xf32> to vector<8x256xf32>
    %34 = arith.addf %32, %33 : vector<8x256xf32>
    %35 = arith.truncf %34 : vector<8x256xf32> to vector<8x256xbf16>
    %cst_18 = arith.constant 1.000980e-02 : bf16
    %36 = vector.broadcast %cst_18 : bf16 to vector<8x256xbf16>
    %37 = arith.mulf %36, %35 : vector<8x256xbf16>
    %38 = arith.maximumf %35, %37 : vector<8x256xbf16>
    %c512 = arith.constant 512 : index
    %c0_19 = arith.constant 0 : index
    %39 = vector.load %arg3[%c512, %c0_19] : memref<1024x256xbf16, #tpu.memory_space<vmem>>, vector<256x256xbf16>
    %c4 = arith.constant 4 : index
    %c0_20 = arith.constant 0 : index
    %40 = vector.load %arg5[%c4, %c0_20] : memref<13x512xf32, #tpu.memory_space<vmem>>, vector<1x256xf32>
    %cst_21 = arith.constant dense<0.000000e+00> : vector<8x256xf32>
    %41 = tpu.matmul %38, %39, %cst_21 {dimension_numbers = #tpu.dot_dimension_numbers<[1], [0], [0], [1], [0, 0, 1, 1], [], []>} : vector<8x256xbf16>, vector<256x256xbf16>, vector<8x256xf32> -> vector<8x256xf32>
    %42 = vector.broadcast %40 : vector<1x256xf32> to vector<8x256xf32>
    %43 = arith.addf %41, %42 : vector<8x256xf32>
    %44 = arith.truncf %43 : vector<8x256xf32> to vector<8x256xbf16>
    %cst_22 = arith.constant 1.000980e-02 : bf16
    %45 = vector.broadcast %cst_22 : bf16 to vector<8x256xbf16>
    %46 = arith.mulf %45, %44 : vector<8x256xbf16>
    %47 = arith.maximumf %44, %46 : vector<8x256xbf16>
    %c768 = arith.constant 768 : index
    %c0_23 = arith.constant 0 : index
    %48 = vector.load %arg3[%c768, %c0_23] : memref<1024x256xbf16, #tpu.memory_space<vmem>>, vector<256x256xbf16>
    %c5 = arith.constant 5 : index
    %c0_24 = arith.constant 0 : index
    %49 = vector.load %arg5[%c5, %c0_24] : memref<13x512xf32, #tpu.memory_space<vmem>>, vector<1x256xf32>
    %cst_25 = arith.constant dense<0.000000e+00> : vector<8x256xf32>
    %50 = tpu.matmul %47, %48, %cst_25 {dimension_numbers = #tpu.dot_dimension_numbers<[1], [0], [0], [1], [0, 0, 1, 1], [], []>} : vector<8x256xbf16>, vector<256x256xbf16>, vector<8x256xf32> -> vector<8x256xf32>
    %51 = vector.broadcast %49 : vector<1x256xf32> to vector<8x256xf32>
    %52 = arith.addf %50, %51 : vector<8x256xf32>
    %53 = arith.truncf %52 : vector<8x256xf32> to vector<8x256xbf16>
    %cst_26 = arith.constant 1.000980e-02 : bf16
    %54 = vector.broadcast %cst_26 : bf16 to vector<8x256xbf16>
    %55 = arith.mulf %54, %53 : vector<8x256xbf16>
    %56 = arith.maximumf %53, %55 : vector<8x256xbf16>
    %57 = arith.addf %38, %56 : vector<8x256xbf16>
    %c0_27 = arith.constant 0 : index
    %c0_28 = arith.constant 0 : index
    %58 = vector.load %arg4[%c0_27, %c0_28] : memref<1024x128xbf16, #tpu.memory_space<vmem>>, vector<256x128xbf16>
    %c6 = arith.constant 6 : index
    %c0_29 = arith.constant 0 : index
    %59 = vector.load %arg5[%c6, %c0_29] : memref<13x512xf32, #tpu.memory_space<vmem>>, vector<1x128xf32>
    %cst_30 = arith.constant dense<0.000000e+00> : vector<8x128xf32>
    %60 = tpu.matmul %57, %58, %cst_30 {dimension_numbers = #tpu.dot_dimension_numbers<[1], [0], [0], [1], [0, 0, 1, 1], [], []>} : vector<8x256xbf16>, vector<256x128xbf16>, vector<8x128xf32> -> vector<8x128xf32>
    %61 = vector.broadcast %59 : vector<1x128xf32> to vector<8x128xf32>
    %62 = arith.addf %60, %61 : vector<8x128xf32>
    %63 = arith.truncf %62 : vector<8x128xf32> to vector<8x128xbf16>
    %cst_31 = arith.constant 1.000980e-02 : bf16
    %64 = vector.broadcast %cst_31 : bf16 to vector<8x128xbf16>
    %65 = arith.mulf %64, %63 : vector<8x128xbf16>
    %66 = arith.maximumf %63, %65 : vector<8x128xbf16>
    %c256 = arith.constant 256 : index
    %c0_32 = arith.constant 0 : index
    %67 = vector.load %arg4[%c256, %c0_32] : memref<1024x128xbf16, #tpu.memory_space<vmem>>, vector<128x128xbf16>
    %c7 = arith.constant 7 : index
    %c0_33 = arith.constant 0 : index
    %68 = vector.load %arg5[%c7, %c0_33] : memref<13x512xf32, #tpu.memory_space<vmem>>, vector<1x128xf32>
    %cst_34 = arith.constant dense<0.000000e+00> : vector<8x128xf32>
    %69 = tpu.matmul %66, %67, %cst_34 {dimension_numbers = #tpu.dot_dimension_numbers<[1], [0], [0], [1], [0, 0, 1, 1], [], []>} : vector<8x128xbf16>, vector<128x128xbf16>, vector<8x128xf32> -> vector<8x128xf32>
    %70 = vector.broadcast %68 : vector<1x128xf32> to vector<8x128xf32>
    %71 = arith.addf %69, %70 : vector<8x128xf32>
    %72 = arith.truncf %71 : vector<8x128xf32> to vector<8x128xbf16>
    %cst_35 = arith.constant 1.000980e-02 : bf16
    %73 = vector.broadcast %cst_35 : bf16 to vector<8x128xbf16>
    %74 = arith.mulf %73, %72 : vector<8x128xbf16>
    %75 = arith.maximumf %72, %74 : vector<8x128xbf16>
    %c384 = arith.constant 384 : index
    %c0_36 = arith.constant 0 : index
    %76 = vector.load %arg4[%c384, %c0_36] : memref<1024x128xbf16, #tpu.memory_space<vmem>>, vector<128x128xbf16>
    %c8 = arith.constant 8 : index
    %c0_37 = arith.constant 0 : index
    %77 = vector.load %arg5[%c8, %c0_37] : memref<13x512xf32, #tpu.memory_space<vmem>>, vector<1x128xf32>
    %cst_38 = arith.constant dense<0.000000e+00> : vector<8x128xf32>
    %78 = tpu.matmul %75, %76, %cst_38 {dimension_numbers = #tpu.dot_dimension_numbers<[1], [0], [0], [1], [0, 0, 1, 1], [], []>} : vector<8x128xbf16>, vector<128x128xbf16>, vector<8x128xf32> -> vector<8x128xf32>
    %79 = vector.broadcast %77 : vector<1x128xf32> to vector<8x128xf32>
    %80 = arith.addf %78, %79 : vector<8x128xf32>
    %81 = arith.truncf %80 : vector<8x128xf32> to vector<8x128xbf16>
    %cst_39 = arith.constant 1.000980e-02 : bf16
    %82 = vector.broadcast %cst_39 : bf16 to vector<8x128xbf16>
    %83 = arith.mulf %82, %81 : vector<8x128xbf16>
    %84 = arith.maximumf %81, %83 : vector<8x128xbf16>
    %85 = arith.addf %66, %84 : vector<8x128xbf16>
    %c512_40 = arith.constant 512 : index
    %c0_41 = arith.constant 0 : index
    %86 = vector.load %arg4[%c512_40, %c0_41] : memref<1024x128xbf16, #tpu.memory_space<vmem>>, vector<128x128xbf16>
    %c9 = arith.constant 9 : index
    %c0_42 = arith.constant 0 : index
    %87 = vector.load %arg5[%c9, %c0_42] : memref<13x512xf32, #tpu.memory_space<vmem>>, vector<1x128xf32>
    %cst_43 = arith.constant dense<0.000000e+00> : vector<8x128xf32>
    %88 = tpu.matmul %85, %86, %cst_43 {dimension_numbers = #tpu.dot_dimension_numbers<[1], [0], [0], [1], [0, 0, 1, 1], [], []>} : vector<8x128xbf16>, vector<128x128xbf16>, vector<8x128xf32> -> vector<8x128xf32>
    %89 = vector.broadcast %87 : vector<1x128xf32> to vector<8x128xf32>
    %90 = arith.addf %88, %89 : vector<8x128xf32>
    %91 = arith.truncf %90 : vector<8x128xf32> to vector<8x128xbf16>
    %cst_44 = arith.constant 1.000980e-02 : bf16
    %92 = vector.broadcast %cst_44 : bf16 to vector<8x128xbf16>
    %93 = arith.mulf %92, %91 : vector<8x128xbf16>
    %94 = arith.maximumf %91, %93 : vector<8x128xbf16>
    %c640 = arith.constant 640 : index
    %c0_45 = arith.constant 0 : index
    %95 = vector.load %arg4[%c640, %c0_45] : memref<1024x128xbf16, #tpu.memory_space<vmem>>, vector<128x128xbf16>
    %c10 = arith.constant 10 : index
    %c0_46 = arith.constant 0 : index
    %96 = vector.load %arg5[%c10, %c0_46] : memref<13x512xf32, #tpu.memory_space<vmem>>, vector<1x128xf32>
    %cst_47 = arith.constant dense<0.000000e+00> : vector<8x128xf32>
    %97 = tpu.matmul %94, %95, %cst_47 {dimension_numbers = #tpu.dot_dimension_numbers<[1], [0], [0], [1], [0, 0, 1, 1], [], []>} : vector<8x128xbf16>, vector<128x128xbf16>, vector<8x128xf32> -> vector<8x128xf32>
    %98 = vector.broadcast %96 : vector<1x128xf32> to vector<8x128xf32>
    %99 = arith.addf %97, %98 : vector<8x128xf32>
    %100 = arith.truncf %99 : vector<8x128xf32> to vector<8x128xbf16>
    %cst_48 = arith.constant 1.000980e-02 : bf16
    %101 = vector.broadcast %cst_48 : bf16 to vector<8x128xbf16>
    %102 = arith.mulf %101, %100 : vector<8x128xbf16>
    %103 = arith.maximumf %100, %102 : vector<8x128xbf16>
    %c768_49 = arith.constant 768 : index
    %c0_50 = arith.constant 0 : index
    %104 = vector.load %arg4[%c768_49, %c0_50] : memref<1024x128xbf16, #tpu.memory_space<vmem>>, vector<128x128xbf16>
    %c11 = arith.constant 11 : index
    %c0_51 = arith.constant 0 : index
    %105 = vector.load %arg5[%c11, %c0_51] : memref<13x512xf32, #tpu.memory_space<vmem>>, vector<1x128xf32>
    %cst_52 = arith.constant dense<0.000000e+00> : vector<8x128xf32>
    %106 = tpu.matmul %103, %104, %cst_52 {dimension_numbers = #tpu.dot_dimension_numbers<[1], [0], [0], [1], [0, 0, 1, 1], [], []>} : vector<8x128xbf16>, vector<128x128xbf16>, vector<8x128xf32> -> vector<8x128xf32>
    %107 = vector.broadcast %105 : vector<1x128xf32> to vector<8x128xf32>
    %108 = arith.addf %106, %107 : vector<8x128xf32>
    %109 = arith.truncf %108 : vector<8x128xf32> to vector<8x128xbf16>
    %cst_53 = arith.constant 1.000980e-02 : bf16
    %110 = vector.broadcast %cst_53 : bf16 to vector<8x128xbf16>
    %111 = arith.mulf %110, %109 : vector<8x128xbf16>
    %112 = arith.maximumf %109, %111 : vector<8x128xbf16>
    %113 = arith.addf %94, %112 : vector<8x128xbf16>
    %c896 = arith.constant 896 : index
    %c0_54 = arith.constant 0 : index
    %114 = vector.load %arg4[%c896, %c0_54] : memref<1024x128xbf16, #tpu.memory_space<vmem>>, vector<128x128xbf16>
    %c12 = arith.constant 12 : index
    %c0_55 = arith.constant 0 : index
    %115 = vector.load %arg5[%c12, %c0_55] : memref<13x512xf32, #tpu.memory_space<vmem>>, vector<1x128xf32>
    %cst_56 = arith.constant dense<0.000000e+00> : vector<8x128xf32>
    %116 = tpu.matmul %113, %114, %cst_56 {dimension_numbers = #tpu.dot_dimension_numbers<[1], [0], [0], [1], [0, 0, 1, 1], [], []>} : vector<8x128xbf16>, vector<128x128xbf16>, vector<8x128xf32> -> vector<8x128xf32>
    %117 = vector.broadcast %115 : vector<1x128xf32> to vector<8x128xf32>
    %118 = arith.addf %116, %117 : vector<8x128xf32>
    %119 = arith.truncf %118 : vector<8x128xf32> to vector<8x128xbf16>
    %c0_57 = arith.constant 0 : index
    %c0_58 = arith.constant 0 : index
    %120 = vector.load %arg6[%c0_57, %c0_58] : memref<8x128xbf16, #tpu.memory_space<vmem>>, vector<8x128xbf16>
    tpu.vector_store %arg6[%c0_57, %c0_58], %119 {strides = array<i32>} : memref<8x128xbf16, #tpu.memory_space<vmem>>, vector<8x128xbf16>,
    return
  }
  func.func @transform_0(%arg0: i32) -> (i32, i32) {
    %c0_i32 = arith.constant 0 : i32
    %c0_i32_0 = arith.constant 0 : i32
    return %arg0, %c0_i32 : i32, i32
  }
  func.func @transform_1(%arg0: i32) -> (i32, i32) {
    %c0_i32 = arith.constant 0 : i32
    %c0_i32_0 = arith.constant 0 : i32
    %c0_i32_1 = arith.constant 0 : i32
    return %c0_i32, %c0_i32_0 : i32, i32
  }
  func.func @transform_2(%arg0: i32) -> (i32, i32) {
    %c0_i32 = arith.constant 0 : i32
    %c0_i32_0 = arith.constant 0 : i32
    %c0_i32_1 = arith.constant 0 : i32
    return %c0_i32, %c0_i32_0 : i32, i32
  }
  func.func @transform_3(%arg0: i32) -> (i32, i32) {
    %c0_i32 = arith.constant 0 : i32
    %c0_i32_0 = arith.constant 0 : i32
    %c0_i32_1 = arith.constant 0 : i32
    return %c0_i32, %c0_i32_0 : i32, i32
  }
  func.func @transform_4(%arg0: i32) -> (i32, i32) {
    %c0_i32 = arith.constant 0 : i32
    %c0_i32_0 = arith.constant 0 : i32
    %c0_i32_1 = arith.constant 0 : i32
    return %c0_i32, %c0_i32_0 : i32, i32
  }
  func.func @transform_5(%arg0: i32) -> (i32, i32) {
    %c0_i32 = arith.constant 0 : i32
    %c0_i32_0 = arith.constant 0 : i32
    return %arg0, %c0_i32 : i32, i32
  }
}

</mosaic_0001>

<llo_original>
// kernel: pnet_forward.1
$region0: #{pnet_forward.1}
  #allocation0 [shape = 'u32[]', space=smem, size = 0x4, offset = 0x4, fixed_abs, tag = 'smem constant byte address 0x4 - core index']
  #allocation1 [shape = 'u32[144,128]{1,0:T(1,128)}', space=vmem, size = 0x12000, scoped, tag = 'internal scratch']
  %s0 = inlined_call_operand.hbm [shape: f32[8,32], index: 0, kind: input, shape index: {}]
  %s1 = inlined_call_operand.hbm [shape: bf16[1056,512], index: 1, kind: input, shape index: {}]
  %s2 = inlined_call_operand.hbm [shape: bf16[1024,256], index: 2, kind: input, shape index: {}]
  %s3 = inlined_call_operand.hbm [shape: bf16[1024,128], index: 3, kind: input, shape index: {}]
  %s4 = inlined_call_operand.hbm [shape: f32[13,512], index: 4, kind: input, shape index: {}]
  %s5 = inlined_call_operand.vmem [shape: bf16[8,128], index: 5, kind: output, shape index: {}]
  %s6 = sld [smem:[#allocation0]]
  $region50: #{pnet_forward.1} parent=0
    _
  %s8 = ssub.s32 1, %s6
  %s9 = scalar_select 0, %s8, %s6
  $region1: #{pnet_forward.1} parent=0
    #allocation2 [shape = 'u8[4096]{0}', space=vmem, size = 0x1000, scoped, tag = 'input window, operand 0, single buffered']
    #allocation3 [shape = 's32[1]{0}', space=sflag, size = 0x4, scoped, tag = 'scoped memory for pnet_forward.1']
    #allocation4 [shape = 'u8[1081344]{0}', space=vmem, size = 0x108000, scoped, tag = 'input window, operand 1, single buffered']
    #allocation5 [shape = 's32[1]{0}', space=sflag, size = 0x4, scoped, tag = 'scoped memory for pnet_forward.1']
    #allocation6 [shape = 'u8[524288]{0}', space=vmem, size = 0x80000, scoped, tag = 'input window, operand 2, single buffered']
    #allocation7 [shape = 'u8[262144]{0}', space=vmem, size = 0x40000, scoped, tag = 'input window, operand 3, single buffered']
    #allocation8 [shape = 's32[1]{0}', space=sflag, size = 0x4, scoped, tag = 'scoped memory for pnet_forward.1']
    #allocation9 [shape = 'u8[32768]{0}', space=vmem, size = 0x8000, scoped, tag = 'input window, operand 4, single buffered']
    %10 = vsyncpa [#allocation3], 0
    %11 = vsyncpa [#allocation5], 0
    %12 = vsyncpa [#allocation8], 0
    // Predicated region
    $region2: #{pnet_forward.1} parent=1 // pred_check
      _
    $region3: #{pnet_forward.1} parent=1 // pred_check_branch
      %14 = sbr.rel (0) target = $region5
    $region4: #{pnet_forward.1} parent=1 // pred_region
      %s16 = ssub.s32 128, 128
      %17 = vsyncadd [#allocation3], %s16
      %s19 = sshll.u32 [#allocation2], 4
      %s20 = int_to_ptr.vmem [resolvable:$true] %s19
      %22 = dma.hbm_to_vmem [thread:$0]  %s0, 128, %s20, [#allocation3]
    $region5: #{pnet_forward.1} parent=1 // pred_fallthru
      _
    // Predicated region
    $region6: #{pnet_forward.1} parent=1 // pred_check
      _
    $region7: #{pnet_forward.1} parent=1 // pred_check_branch
      %24 = sbr.rel (0) target = $region9
    $region8: #{pnet_forward.1} parent=1 // pred_region
      %s26 = ssub.s32 33792, 33792
      %27 = vsyncadd [#allocation5], %s26
      %s28 = sshll.u32 [#allocation4], 4
      %s29 = int_to_ptr.vmem [resolvable:$true] %s28
      %34 = dma.hbm_to_vmem [thread:$0]  %s1, 33792, %s29, [#allocation5], 256, 256, 16
    $region9: #{pnet_forward.1} parent=1 // pred_fallthru
      _
    // Predicated region
    $region10: #{pnet_forward.1} parent=1 // pred_check
      _
    $region11: #{pnet_forward.1} parent=1 // pred_check_branch
      %36 = sbr.rel (0) target = $region13
    $region12: #{pnet_forward.1} parent=1 // pred_region
      %s38 = ssub.s32 16384, 16384
      %39 = vsyncadd [#allocation5], %s38
      %s40 = sshll.u32 [#allocation6], 4
      %s41 = int_to_ptr.vmem [resolvable:$true] %s40
      %46 = dma.hbm_to_vmem [thread:$0]  %s2, 16384, %s41, [#allocation5], 128, 128, 8
    $region13: #{pnet_forward.1} parent=1 // pred_fallthru
      _
    // Predicated region
    $region14: #{pnet_forward.1} parent=1 // pred_check
      _
    $region15: #{pnet_forward.1} parent=1 // pred_check_branch
      %48 = sbr.rel (0) target = $region17
    $region16: #{pnet_forward.1} parent=1 // pred_region
      %s50 = ssub.s32 8192, 8192
      %51 = vsyncadd [#allocation8], %s50
      %s52 = sshll.u32 [#allocation7], 4
      %s53 = int_to_ptr.vmem [resolvable:$true] %s52
      %58 = dma.hbm_to_vmem [thread:$0]  %s3, 8192, %s53, [#allocation8], 64, 64, 4
    $region17: #{pnet_forward.1} parent=1 // pred_fallthru
      _
    // Predicated region
    $region18: #{pnet_forward.1} parent=1 // pred_check
      _
    $region19: #{pnet_forward.1} parent=1 // pred_check_branch
      %60 = sbr.rel (0) target = $region21
    $region20: #{pnet_forward.1} parent=1 // pred_region
      %s62 = ssub.s32 1024, 1024
      %63 = vsyncadd [#allocation8], %s62
      %s64 = sshll.u32 [#allocation9], 4
      %s65 = int_to_ptr.vmem [resolvable:$true] %s64
      %70 = dma.hbm_to_vmem [thread:$0]  %s4, 1024, %s65, [#allocation8], 512, 512, 32
    $region21: #{pnet_forward.1} parent=1 // pred_fallthru
      _
    // Predicated region
    $region22: #{pnet_forward.1} parent=1 // pred_check
      _
    $region23: #{pnet_forward.1} parent=1 // pred_check_branch
      %72 = sbr.rel (0) target = $region25
    $region24: #{pnet_forward.1} parent=1 // pred_region
      %73 = dma.done [#allocation3], 128
    $region25: #{pnet_forward.1} parent=1 // pred_fallthru
      _
    // Predicated region
    $region26: #{pnet_forward.1} parent=1 // pred_check
      _
    $region27: #{pnet_forward.1} parent=1 // pred_check_branch
      %75 = sbr.rel (0) target = $region29
    $region28: #{pnet_forward.1} parent=1 // pred_region
      %76 = dma.done [#allocation5], 33792
    $region29: #{pnet_forward.1} parent=1 // pred_fallthru
      _
    // Predicated region
    $region30: #{pnet_forward.1} parent=1 // pred_check
      _
    $region31: #{pnet_forward.1} parent=1 // pred_check_branch
      %78 = sbr.rel (0) target = $region33
    $region32: #{pnet_forward.1} parent=1 // pred_region
      %79 = dma.done [#allocation5], 16384
    $region33: #{pnet_forward.1} parent=1 // pred_fallthru
      _
    // Predicated region
    $region34: #{pnet_forward.1} parent=1 // pred_check
      _
    $region35: #{pnet_forward.1} parent=1 // pred_check_branch
      %81 = sbr.rel (0) target = $region37
    $region36: #{pnet_forward.1} parent=1 // pred_region
      %82 = dma.done [#allocation8], 8192
    $region37: #{pnet_forward.1} parent=1 // pred_fallthru
      _
    // Predicated region
    $region38: #{pnet_forward.1} parent=1 // pred_check
      _
    $region39: #{pnet_forward.1} parent=1 // pred_check_branch
      %84 = sbr.rel (0) target = $region41
    $region40: #{pnet_forward.1} parent=1 // pred_region
      %85 = dma.done [#allocation8], 1024
    $region41: #{pnet_forward.1} parent=1 // pred_fallthru
      _
    %v88 = vld [vmem:[#allocation2] sm:$0xff]
    %v89 = vpack.c.bf16 %v88, %v88
    %v90 = vld [vmem:[#allocation4] sm:$0xff]
    %v91 = vld [vmem:[#allocation4 + $0x8] sm:$0xff]
    %v92 = vld [vmem:[#allocation4 + $0x10] sm:$0xff]
    %v93 = vld [vmem:[#allocation4 + $0x18] sm:$0xff]
    %v94 = vld [vmem:[#allocation4 + $0x20] sm:$0xff]
    %v95 = vld [vmem:[#allocation4 + $0x28] sm:$0xff]
    %v96 = vld [vmem:[#allocation4 + $0x30] sm:$0xff]
    %v97 = vld [vmem:[#allocation4 + $0x38] sm:$0xff]
    %v98 = vld [vmem:[#allocation9] ss:$8 sm:$0xf]
    %v100 = vlaneseq
    %v101 = vshrl.u32 %v100, 7
    %v102 = vsub.s32 0, %v101
    %v103 = vrot.slane %v98, %v102
    %v104 = vlaneseq
    %v105 = vshrl.u32 %v104, 7
    %v106 = vsub.s32 1, %v105
    %v107 = vrot.slane %v98, %v106
    %v108 = vlaneseq
    %v109 = vshrl.u32 %v108, 7
    %v110 = vsub.s32 2, %v109
    %v111 = vrot.slane %v98, %v110
    %v112 = vlaneseq
    %v113 = vshrl.u32 %v112, 7
    %v114 = vsub.s32 3, %v113
    %v115 = vrot.slane %v98, %v114
    %v128 = vunpack.c.l.b16 %v90
    %v129 = vunpack.c.h.b16 %v90
    %v130 = vunpack.c.l.b16 %v91
    %v131 = vunpack.c.h.b16 %v91
    %v132 = vunpack.c.l.b16 %v92
    %v133 = vunpack.c.h.b16 %v92
    %v134 = vunpack.c.l.b16 %v93
    %v135 = vunpack.c.h.b16 %v93
    %v136 = vunpack.c.l.b16 %v94
    %v137 = vunpack.c.h.b16 %v94
    %v138 = vunpack.c.l.b16 %v95
    %v139 = vunpack.c.h.b16 %v95
    %v140 = vunpack.c.l.b16 %v96
    %v141 = vunpack.c.h.b16 %v96
    %v142 = vunpack.c.l.b16 %v97
    %v143 = vunpack.c.h.b16 %v97
    %v144 = vpack.c.b16 %v132, %v128
    %v145 = vpack.c.b16 %v133, %v129
    %v146 = vpack.c.b16 %v134, %v130
    %v147 = vpack.c.b16 %v135, %v131
    %v148 = vpack.c.b16 %v140, %v136
    %v149 = vpack.c.b16 %v141, %v137
    %v150 = vpack.c.b16 %v142, %v138
    %v151 = vpack.c.b16 %v143, %v139
    %vm160 = vcmask 261120
    %v162 = vsel %vm160, %v89, 0
    %164 = vmatprep.subr.bf16.mxu0 0
    %165 = vmatpush1.bf16.msra.mxu0 0
    %166 = vmatprep.subr.bf16.mxu0 0
    %167 = vmatpush1.bf16.msra.mxu0 0
    %168 = vmatprep.subr.bf16.mxu0 0
    %169 = vmatpush1.bf16.msra.mxu0 0
    %170 = vmatprep.subr.bf16.mxu0 0
    %171 = vmatpush1.bf16.msra.mxu0 0
    %172 = vmatprep.subr.bf16.mxu0 0
    %173 = vmatpush1.bf16.msra.mxu0 0
    %174 = vmatprep.subr.bf16.mxu0 0
    %175 = vmatpush1.bf16.msra.mxu0 0
    %176 = vmatprep.subr.bf16.mxu0 %v149
    %177 = vmatpush1.bf16.msra.mxu0 %v148
    %178 = vmatprep.subr.bf16.mxu0 %v145
    %179 = vmatpush1.bf16.msra.mxu0 %v144
    %180 = vmatprep.subr.bf16.mxu0 0
    %181 = vmatpush2.bf16.msra.mxu0 0
    %182 = vmatprep.subr.bf16.mxu0 0
    %183 = vmatpush2.bf16.msra.mxu0 0
    %184 = vmatprep.subr.bf16.mxu0 0
    %185 = vmatpush2.bf16.msra.mxu0 0
    %186 = vmatprep.subr.bf16.mxu0 0
    %187 = vmatpush2.bf16.msra.mxu0 0
    %188 = vmatprep.subr.bf16.mxu0 0
    %189 = vmatpush2.bf16.msra.mxu0 0
    %190 = vmatprep.subr.bf16.mxu0 0
    %191 = vmatpush2.bf16.msra.mxu0 0
    %192 = vmatprep.subr.bf16.mxu0 0
    %193 = vmatpush2.bf16.msra.mxu0 0
    %194 = vmatprep.subr.bf16.mxu0 0
    %195 = vmatpush2.bf16.msra.mxu0 0
    %196 = vmatprep.mubr.bf16.mxu0 0
    %197 = vmatmul.mubr.bf16.gmra.mxu0 %v162
    %v198 = vpop.f32.mrf.mxu0
    %v199 = vadd.f32 %v103, %v198
    %v200 = vpop.f32.mrf.mxu0
    %v201 = vadd.f32 %v107, %v200
    %v202 = vpop.f32.mrf.mxu0
    %v203 = vpop.f32.mrf.mxu0
    %204 = vdwg.mxu0
    %205 = vmatprep.subr.bf16.mxu0 0
    %206 = vmatpush1.bf16.msra.mxu0 0
    %207 = vmatprep.subr.bf16.mxu0 0
    %208 = vmatpush1.bf16.msra.mxu0 0
    %209 = vmatprep.subr.bf16.mxu0 0
    %210 = vmatpush1.bf16.msra.mxu0 0
    %211 = vmatprep.subr.bf16.mxu0 0
    %212 = vmatpush1.bf16.msra.mxu0 0
    %213 = vmatprep.subr.bf16.mxu0 0
    %214 = vmatpush1.bf16.msra.mxu0 0
    %215 = vmatprep.subr.bf16.mxu0 0
    %216 = vmatpush1.bf16.msra.mxu0 0
    %217 = vmatprep.subr.bf16.mxu0 %v151
    %218 = vmatpush1.bf16.msra.mxu0 %v150
    %219 = vmatprep.subr.bf16.mxu0 %v147
    %220 = vmatpush1.bf16.msra.mxu0 %v146
    %221 = vmatprep.subr.bf16.mxu0 0
    %222 = vmatpush2.bf16.msra.mxu0 0
    %223 = vmatprep.subr.bf16.mxu0 0
    %224 = vmatpush2.bf16.msra.mxu0 0
    %225 = vmatprep.subr.bf16.mxu0 0
    %226 = vmatpush2.bf16.msra.mxu0 0
    %227 = vmatprep.subr.bf16.mxu0 0
    %228 = vmatpush2.bf16.msra.mxu0 0
    %229 = vmatprep.subr.bf16.mxu0 0
    %230 = vmatpush2.bf16.msra.mxu0 0
    %231 = vmatprep.subr.bf16.mxu0 0
    %232 = vmatpush2.bf16.msra.mxu0 0
    %233 = vmatprep.subr.bf16.mxu0 0
    %234 = vmatpush2.bf16.msra.mxu0 0
    %235 = vmatprep.subr.bf16.mxu0 0
    %236 = vmatpush2.bf16.msra.mxu0 0
    %237 = vmatprep.mubr.bf16.mxu0 0
    %238 = vmatmul.mubr.bf16.gmra.mxu0 %v162
    %v239 = vpop.f32.mrf.mxu0
    %v240 = vadd.f32 %v111, %v239
    %v241 = vpop.f32.mrf.mxu0
    %v242 = vadd.f32 %v115, %v241
    %v243 = vpop.f32.mrf.mxu0
    %v244 = vpop.f32.mrf.mxu0
    %245 = vdwg.mxu0
    %v246 = vpack.c.bf16 %v199, %v199
    %v247 = vpack.c.bf16 %v201, %v201
    %v248 = vpack.c.bf16 %v240, %v240
    %v249 = vpack.c.bf16 %v242, %v242
    %v250 = vmul.bf16 %v246, 1009007652
    %v251 = vmul.bf16 %v247, 1009007652
    %v252 = vmul.bf16 %v248, 1009007652
    %v253 = vmul.bf16 %v249, 1009007652
    %v254 = vmax.bf16 %v246, %v250
    %v255 = vmax.bf16 %v247, %v251
    %v256 = vmax.bf16 %v248, %v252
    %v257 = vmax.bf16 %v249, %v253
    %v258 = vld [vmem:[#allocation4 + $0x40] sm:$0xff]
    %v259 = vld [vmem:[#allocation4 + $0x48] sm:$0xff]
    %v260 = vld [vmem:[#allocation4 + $0x50] sm:$0xff]
    %v261 = vld [vmem:[#allocation4 + $0x58] sm:$0xff]
    %v262 = vld [vmem:[#allocation4 + $0x60] sm:$0xff]
    %v263 = vld [vmem:[#allocation4 + $0x68] sm:$0xff]
    %v264 = vld [vmem:[#allocation4 + $0x70] sm:$0xff]
    %v265 = vld [vmem:[#allocation4 + $0x78] sm:$0xff]
    %v266 = vld [vmem:[#allocation4 + $0x80] sm:$0xff]
    %v267 = vld [vmem:[#allocation4 + $0x88] sm:$0xff]
    %v268 = vld [vmem:[#allocation4 + $0x90] sm:$0xff]
    %v269 = vld [vmem:[#allocation4 + $0x98] sm:$0xff]
    %v270 = vld [vmem:[#allocation4 + $0xa0] sm:$0xff]
    %v271 = vld [vmem:[#allocation4 + $0xa8] sm:$0xff]
    %v272 = vld [vmem:[#allocation4 + $0xb0] sm:$0xff]
    %v273 = vld [vmem:[#allocation4 + $0xb8] sm:$0xff]
    %v274 = vld [vmem:[#allocation4 + $0xc0] sm:$0xff]
    %v275 = vld [vmem:[#allocation4 + $0xc8] sm:$0xff]
    %v276 = vld [vmem:[#allocation4 + $0xd0] sm:$0xff]
    %v277 = vld [vmem:[#allocation4 + $0xd8] sm:$0xff]
    %v278 = vld [vmem:[#allocation4 + $0xe0] sm:$0xff]
    %v279 = vld [vmem:[#allocation4 + $0xe8] sm:$0xff]
    %v280 = vld [vmem:[#allocation4 + $0xf0] sm:$0xff]
    %v281 = vld [vmem:[#allocation4 + $0xf8] sm:$0xff]
    %v282 = vld [vmem:[#allocation4 + $0x100] sm:$0xff]
    %v283 = vld [vmem:[#allocation4 + $0x108] sm:$0xff]
    %v284 = vld [vmem:[#allocation4 + $0x110] sm:$0xff]
    %v285 = vld [vmem:[#allocation4 + $0x118] sm:$0xff]
    %v286 = vld [vmem:[#allocation4 + $0x120] sm:$0xff]
    %v287 = vld [vmem:[#allocation4 + $0x128] sm:$0xff]
    %v288 = vld [vmem:[#allocation4 + $0x130] sm:$0xff]
    %v289 = vld [vmem:[#allocation4 + $0x138] sm:$0xff]
    %v290 = vld [vmem:[#allocation4 + $0x140] sm:$0xff]
    %v291 = vld [vmem:[#allocation4 + $0x148] sm:$0xff]
    %v292 = vld [vmem:[#allocation4 + $0x150] sm:$0xff]
    %v293 = vld [vmem:[#allocation4 + $0x158] sm:$0xff]
    %v294 = vld [vmem:[#allocation4 + $0x160] sm:$0xff]
    %v295 = vld [vmem:[#allocation4 + $0x168] sm:$0xff]
    %v296 = vld [vmem:[#allocation4 + $0x170] sm:$0xff]
    %v297 = vld [vmem:[#allocation4 + $0x178] sm:$0xff]
    %v298 = vld [vmem:[#allocation4 + $0x180] sm:$0xff]
    %v299 = vld [vmem:[#allocation4 + $0x188] sm:$0xff]
    %v300 = vld [vmem:[#allocation4 + $0x190] sm:$0xff]
    %v301 = vld [vmem:[#allocation4 + $0x198] sm:$0xff]
    %v302 = vld [vmem:[#allocation4 + $0x1a0] sm:$0xff]
    %v303 = vld [vmem:[#allocation4 + $0x1a8] sm:$0xff]
    %v304 = vld [vmem:[#allocation4 + $0x1b0] sm:$0xff]
    %v305 = vld [vmem:[#allocation4 + $0x1b8] sm:$0xff]
    %v306 = vld [vmem:[#allocation4 + $0x1c0] sm:$0xff]
    %v307 = vld [vmem:[#allocation4 + $0x1c8] sm:$0xff]
    %v308 = vld [vmem:[#allocation4 + $0x1d0] sm:$0xff]
    %v309 = vld [vmem:[#allocation4 + $0x1d8] sm:$0xff]
    %v310 = vld [vmem:[#allocation4 + $0x1e0] sm:$0xff]
    %v311 = vld [vmem:[#allocation4 + $0x1e8] sm:$0xff]
    %v312 = vld [vmem:[#allocation4 + $0x1f0] sm:$0xff]
    %v313 = vld [vmem:[#allocation4 + $0x1f8] sm:$0xff]
    %v314 = vld [vmem:[#allocation4 + $0x200] sm:$0xff]
    %v315 = vld [vmem:[#allocation4 + $0x208] sm:$0xff]
    %v316 = vld [vmem:[#allocation4 + $0x210] sm:$0xff]
    %v317 = vld [vmem:[#allocation4 + $0x218] sm:$0xff]
    %v318 = vld [vmem:[#allocation4 + $0x220] sm:$0xff]
    %v319 = vld [vmem:[#allocation4 + $0x228] sm:$0xff]
    %v320 = vld [vmem:[#allocation4 + $0x230] sm:$0xff]
    %v321 = vld [vmem:[#allocation4 + $0x238] sm:$0xff]
    %v322 = vld [vmem:[#allocation4 + $0x240] sm:$0xff]
    %v323 = vld [vmem:[#allocation4 + $0x248] sm:$0xff]
    %v324 = vld [vmem:[#allocation4 + $0x250] sm:$0xff]
    %v325 = vld [vmem:[#allocation4 + $0x258] sm:$0xff]
    %v326 = vld [vmem:[#allocation4 + $0x260] sm:$0xff]
    %v327 = vld [vmem:[#allocation4 + $0x268] sm:$0xff]
    %v328 = vld [vmem:[#allocation4 + $0x270] sm:$0xff]
    %v329 = vld [vmem:[#allocation4 + $0x278] sm:$0xff]
    %v330 = vld [vmem:[#allocation4 + $0x280] sm:$0xff]
    %v331 = vld [vmem:[#allocation4 + $0x288] sm:$0xff]
    %v332 = vld [vmem:[#allocation4 + $0x290] sm:$0xff]
    %v333 = vld [vmem:[#allocation4 + $0x298] sm:$0xff]
    %v334 = vld [vmem:[#allocation4 + $0x2a0] sm:$0xff]
    %v335 = vld [vmem:[#allocation4 + $0x2a8] sm:$0xff]
    %v336 = vld [vmem:[#allocation4 + $0x2b0] sm:$0xff]
    %v337 = vld [vmem:[#allocation4 + $0x2b8] sm:$0xff]
    %v338 = vld [vmem:[#allocation4 + $0x2c0] sm:$0xff]
    %v339 = vld [vmem:[#allocation4 + $0x2c8] sm:$0xff]
    %v340 = vld [vmem:[#allocation4 + $0x2d0] sm:$0xff]
    %v341 = vld [vmem:[#allocation4 + $0x2d8] sm:$0xff]
    %v342 = vld [vmem:[#allocation4 + $0x2e0] sm:$0xff]
    %v343 = vld [vmem:[#allocation4 + $0x2e8] sm:$0xff]
    %v344 = vld [vmem:[#allocation4 + $0x2f0] sm:$0xff]
    %v345 = vld [vmem:[#allocation4 + $0x2f8] sm:$0xff]
    %v346 = vld [vmem:[#allocation4 + $0x300] sm:$0xff]
    %v347 = vld [vmem:[#allocation4 + $0x308] sm:$0xff]
    %v348 = vld [vmem:[#allocation4 + $0x310] sm:$0xff]
    %v349 = vld [vmem:[#allocation4 + $0x318] sm:$0xff]
    %v350 = vld [vmem:[#allocation4 + $0x320] sm:$0xff]
    %v351 = vld [vmem:[#allocation4 + $0x328] sm:$0xff]
    %v352 = vld [vmem:[#allocation4 + $0x330] sm:$0xff]
    %v353 = vld [vmem:[#allocation4 + $0x338] sm:$0xff]
    %v354 = vld [vmem:[#allocation4 + $0x340] sm:$0xff]
    %v355 = vld [vmem:[#allocation4 + $0x348] sm:$0xff]
    %v356 = vld [vmem:[#allocation4 + $0x350] sm:$0xff]
    %v357 = vld [vmem:[#allocation4 + $0x358] sm:$0xff]
    %v358 = vld [vmem:[#allocation4 + $0x360] sm:$0xff]
    %v359 = vld [vmem:[#allocation4 + $0x368] sm:$0xff]
    %v360 = vld [vmem:[#allocation4 + $0x370] sm:$0xff]
    %v361 = vld [vmem:[#allocation4 + $0x378] sm:$0xff]
    %v362 = vld [vmem:[#allocation4 + $0x380] sm:$0xff]
    %v363 = vld [vmem:[#allocation4 + $0x388] sm:$0xff]
    %v364 = vld [vmem:[#allocation4 + $0x390] sm:$0xff]
    %v365 = vld [vmem:[#allocation4 + $0x398] sm:$0xff]
    %v366 = vld [vmem:[#allocation4 + $0x3a0] sm:$0xff]
    %v367 = vld [vmem:[#allocation4 + $0x3a8] sm:$0xff]
    %v368 = vld [vmem:[#allocation4 + $0x3b0] sm:$0xff]
    %v369 = vld [vmem:[#allocation4 + $0x3b8] sm:$0xff]
    %v370 = vld [vmem:[#allocation4 + $0x3c0] sm:$0xff]
    %v371 = vld [vmem:[#allocation4 + $0x3c8] sm:$0xff]
    %v372 = vld [vmem:[#allocation4 + $0x3d0] sm:$0xff]
    %v373 = vld [vmem:[#allocation4 + $0x3d8] sm:$0xff]
    %v374 = vld [vmem:[#allocation4 + $0x3e0] sm:$0xff]
    %v375 = vld [vmem:[#allocation4 + $0x3e8] sm:$0xff]
    %v376 = vld [vmem:[#allocation4 + $0x3f0] sm:$0xff]
    %v377 = vld [vmem:[#allocation4 + $0x3f8] sm:$0xff]
    %v378 = vld [vmem:[#allocation4 + $0x400] sm:$0xff]
    %v379 = vld [vmem:[#allocation4 + $0x408] sm:$0xff]
    %v380 = vld [vmem:[#allocation4 + $0x410] sm:$0xff]
    %v381 = vld [vmem:[#allocation4 + $0x418] sm:$0xff]
    %v382 = vld [vmem:[#allocation4 + $0x420] sm:$0xff]
    %v383 = vld [vmem:[#allocation4 + $0x428] sm:$0xff]
    %v384 = vld [vmem:[#allocation4 + $0x430] sm:$0xff]
    %v385 = vld [vmem:[#allocation4 + $0x438] sm:$0xff]
    %s386 = scalar_lea.vmem [#allocation9], 1
    %v387 = vld [vmem:[%s386] ss:$8 sm:$0xf]
    %v389 = vlaneseq
    %v390 = vshrl.u32 %v389, 7
    %v391 = vsub.s32 0, %v390
    %v392 = vrot.slane %v387, %v391
    %v393 = vlaneseq
    %v394 = vshrl.u32 %v393, 7
    %v395 = vsub.s32 1, %v394
    %v396 = vrot.slane %v387, %v395
    %v397 = vlaneseq
    %v398 = vshrl.u32 %v397, 7
    %v399 = vsub.s32 2, %v398
    %v400 = vrot.slane %v387, %v399
    %v401 = vlaneseq
    %v402 = vshrl.u32 %v401, 7
    %v403 = vsub.s32 3, %v402
    %v404 = vrot.slane %v387, %v403
    %v537 = vunpack.c.l.b16 %v258
    %v538 = vunpack.c.h.b16 %v258
    %v539 = vunpack.c.l.b16 %v259
    %v540 = vunpack.c.h.b16 %v259
    %v541 = vunpack.c.l.b16 %v260
    %v542 = vunpack.c.h.b16 %v260
    %v543 = vunpack.c.l.b16 %v261
    %v544 = vunpack.c.h.b16 %v261
    %v545 = vunpack.c.l.b16 %v262
    %v546 = vunpack.c.h.b16 %v262
    %v547 = vunpack.c.l.b16 %v263
    %v548 = vunpack.c.h.b16 %v263
    %v549 = vunpack.c.l.b16 %v264
    %v550 = vunpack.c.h.b16 %v264
    %v551 = vunpack.c.l.b16 %v265
    %v552 = vunpack.c.h.b16 %v265
    %v553 = vunpack.c.l.b16 %v266
    %v554 = vunpack.c.h.b16 %v266
    %v555 = vunpack.c.l.b16 %v267
    %v556 = vunpack.c.h.b16 %v267
    %v557 = vunpack.c.l.b16 %v268
    %v558 = vunpack.c.h.b16 %v268
    %v559 = vunpack.c.l.b16 %v269
    %v560 = vunpack.c.h.b16 %v269
    %v561 = vunpack.c.l.b16 %v270
    %v562 = vunpack.c.h.b16 %v270
    %v563 = vunpack.c.l.b16 %v271
    %v564 = vunpack.c.h.b16 %v271
    %v565 = vunpack.c.l.b16 %v272
    %v566 = vunpack.c.h.b16 %v272
    %v567 = vunpack.c.l.b16 %v273
    %v568 = vunpack.c.h.b16 %v273
    %v569 = vunpack.c.l.b16 %v274
    %v570 = vunpack.c.h.b16 %v274
    %v571 = vunpack.c.l.b16 %v275
    %v572 = vunpack.c.h.b16 %v275
    %v573 = vunpack.c.l.b16 %v276
    %v574 = vunpack.c.h.b16 %v276
    %v575 = vunpack.c.l.b16 %v277
    %v576 = vunpack.c.h.b16 %v277
    %v577 = vunpack.c.l.b16 %v278
    %v578 = vunpack.c.h.b16 %v278
    %v579 = vunpack.c.l.b16 %v279
    %v580 = vunpack.c.h.b16 %v279
    %v581 = vunpack.c.l.b16 %v280
    %v582 = vunpack.c.h.b16 %v280
    %v583 = vunpack.c.l.b16 %v281
    %v584 = vunpack.c.h.b16 %v281
    %v585 = vunpack.c.l.b16 %v282
    %v586 = vunpack.c.h.b16 %v282
    %v587 = vunpack.c.l.b16 %v283
    %v588 = vunpack.c.h.b16 %v283
    %v589 = vunpack.c.l.b16 %v284
    %v590 = vunpack.c.h.b16 %v284
    %v591 = vunpack.c.l.b16 %v285
    %v592 = vunpack.c.h.b16 %v285
    %v593 = vunpack.c.l.b16 %v286
    %v594 = vunpack.c.h.b16 %v286
    %v595 = vunpack.c.l.b16 %v287
    %v596 = vunpack.c.h.b16 %v287
    %v597 = vunpack.c.l.b16 %v288
    %v598 = vunpack.c.h.b16 %v288
    %v599 = vunpack.c.l.b16 %v289
    %v600 = vunpack.c.h.b16 %v289
    %v601 = vunpack.c.l.b16 %v290
    %v602 = vunpack.c.h.b16 %v290
    %v603 = vunpack.c.l.b16 %v291
    %v604 = vunpack.c.h.b16 %v291
    %v605 = vunpack.c.l.b16 %v292
    %v606 = vunpack.c.h.b16 %v292
    %v607 = vunpack.c.l.b16 %v293
    %v608 = vunpack.c.h.b16 %v293
    %v609 = vunpack.c.l.b16 %v294
    %v610 = vunpack.c.h.b16 %v294
    %v611 = vunpack.c.l.b16 %v295
    %v612 = vunpack.c.h.b16 %v295
    %v613 = vunpack.c.l.b16 %v296
    %v614 = vunpack.c.h.b16 %v296
    %v615 = vunpack.c.l.b16 %v297
    %v616 = vunpack.c.h.b16 %v297
    %v617 = vunpack.c.l.b16 %v298
    %v618 = vunpack.c.h.b16 %v298
    %v619 = vunpack.c.l.b16 %v299
    %v620 = vunpack.c.h.b16 %v299
    %v621 = vunpack.c.l.b16 %v300
    %v622 = vunpack.c.h.b16 %v300
    %v623 = vunpack.c.l.b16 %v301
    %v624 = vunpack.c.h.b16 %v301
    %v625 = vunpack.c.l.b16 %v302
    %v626 = vunpack.c.h.b16 %v302
    %v627 = vunpack.c.l.b16 %v303
    %v628 = vunpack.c.h.b16 %v303
    %v629 = vunpack.c.l.b16 %v304
    %v630 = vunpack.c.h.b16 %v304
    %v631 = vunpack.c.l.b16 %v305
    %v632 = vunpack.c.h.b16 %v305
    %v633 = vunpack.c.l.b16 %v306
    %v634 = vunpack.c.h.b16 %v306
    %v635 = vunpack.c.l.b16 %v307
    %v636 = vunpack.c.h.b16 %v307
    %v637 = vunpack.c.l.b16 %v308
    %v638 = vunpack.c.h.b16 %v308
    %v639 = vunpack.c.l.b16 %v309
    %v640 = vunpack.c.h.b16 %v309
    %v641 = vunpack.c.l.b16 %v310
    %v642 = vunpack.c.h.b16 %v310
    %v643 = vunpack.c.l.b16 %v311
    %v644 = vunpack.c.h.b16 %v311
    %v645 = vunpack.c.l.b16 %v312
    %v646 = vunpack.c.h.b16 %v312
    %v647 = vunpack.c.l.b16 %v313
    %v648 = vunpack.c.h.b16 %v313
    %v649 = vunpack.c.l.b16 %v314
    %v650 = vunpack.c.h.b16 %v314
    %v651 = vunpack.c.l.b16 %v315
    %v652 = vunpack.c.h.b16 %v315
    %v653 = vunpack.c.l.b16 %v316
    %v654 = vunpack.c.h.b16 %v316
    %v655 = vunpack.c.l.b16 %v317
    %v656 = vunpack.c.h.b16 %v317
    %v657 = vunpack.c.l.b16 %v318
    %v658 = vunpack.c.h.b16 %v318
    %v659 = vunpack.c.l.b16 %v319
    %v660 = vunpack.c.h.b16 %v319
    %v661 = vunpack.c.l.b16 %v320
    %v662 = vunpack.c.h.b16 %v320
    %v663 = vunpack.c.l.b16 %v321
    %v664 = vunpack.c.h.b16 %v321
    %v665 = vunpack.c.l.b16 %v322
    %v666 = vunpack.c.h.b16 %v322
    %v667 = vunpack.c.l.b16 %v323
    %v668 = vunpack.c.h.b16 %v323
    %v669 = vunpack.c.l.b16 %v324
    %v670 = vunpack.c.h.b16 %v324
    %v671 = vunpack.c.l.b16 %v325
    %v672 = vunpack.c.h.b16 %v325
    %v673 = vunpack.c.l.b16 %v326
    %v674 = vunpack.c.h.b16 %v326
    %v675 = vunpack.c.l.b16 %v327
    %v676 = vunpack.c.h.b16 %v327
    %v677 = vunpack.c.l.b16 %v328
    %v678 = vunpack.c.h.b16 %v328
    %v679 = vunpack.c.l.b16 %v329
    %v680 = vunpack.c.h.b16 %v329
    %v681 = vunpack.c.l.b16 %v330
    %v682 = vunpack.c.h.b16 %v330
    %v683 = vunpack.c.l.b16 %v331
    %v684 = vunpack.c.h.b16 %v331
    %v685 = vunpack.c.l.b16 %v332
    %v686 = vunpack.c.h.b16 %v332
    %v687 = vunpack.c.l.b16 %v333
    %v688 = vunpack.c.h.b16 %v333
    %v689 = vunpack.c.l.b16 %v334
    %v690 = vunpack.c.h.b16 %v334
    %v691 = vunpack.c.l.b16 %v335
    %v692 = vunpack.c.h.b16 %v335
    %v693 = vunpack.c.l.b16 %v336
    %v694 = vunpack.c.h.b16 %v336
    %v695 = vunpack.c.l.b16 %v337
    %v696 = vunpack.c.h.b16 %v337
    %v697 = vunpack.c.l.b16 %v338
    %v698 = vunpack.c.h.b16 %v338
    %v699 = vunpack.c.l.b16 %v339
    %v700 = vunpack.c.h.b16 %v339
    %v701 = vunpack.c.l.b16 %v340
    %v702 = vunpack.c.h.b16 %v340
    %v703 = vunpack.c.l.b16 %v341
    %v704 = vunpack.c.h.b16 %v341
    %v705 = vunpack.c.l.b16 %v342
    %v706 = vunpack.c.h.b16 %v342
    %v707 = vunpack.c.l.b16 %v343
    %v708 = vunpack.c.h.b16 %v343
    %v709 = vunpack.c.l.b16 %v344
    %v710 = vunpack.c.h.b16 %v344
    %v711 = vunpack.c.l.b16 %v345
    %v712 = vunpack.c.h.b16 %v345
    %v713 = vunpack.c.l.b16 %v346
    %v714 = vunpack.c.h.b16 %v346
    %v715 = vunpack.c.l.b16 %v347
    %v716 = vunpack.c.h.b16 %v347
    %v717 = vunpack.c.l.b16 %v348
    %v718 = vunpack.c.h.b16 %v348
    %v719 = vunpack.c.l.b16 %v349
    %v720 = vunpack.c.h.b16 %v349
    %v721 = vunpack.c.l.b16 %v350
    %v722 = vunpack.c.h.b16 %v350
    %v723 = vunpack.c.l.b16 %v351
    %v724 = vunpack.c.h.b16 %v351
    %v725 = vunpack.c.l.b16 %v352
    %v726 = vunpack.c.h.b16 %v352
    %v727 = vunpack.c.l.b16 %v353
    %v728 = vunpack.c.h.b16 %v353
    %v729 = vunpack.c.l.b16 %v354
    %v730 = vunpack.c.h.b16 %v354
    %v731 = vunpack.c.l.b16 %v355
    %v732 = vunpack.c.h.b16 %v355
    %v733 = vunpack.c.l.b16 %v356
    %v734 = vunpack.c.h.b16 %v356
    %v735 = vunpack.c.l.b16 %v357
    %v736 = vunpack.c.h.b16 %v357
    %v737 = vunpack.c.l.b16 %v358
    %v738 = vunpack.c.h.b16 %v358
    %v739 = vunpack.c.l.b16 %v359
    %v740 = vunpack.c.h.b16 %v359
    %v741 = vunpack.c.l.b16 %v360
    %v742 = vunpack.c.h.b16 %v360
    %v743 = vunpack.c.l.b16 %v361
    %v744 = vunpack.c.h.b16 %v361
    %v745 = vunpack.c.l.b16 %v362
    %v746 = vunpack.c.h.b16 %v362
    %v747 = vunpack.c.l.b16 %v363
    %v748 = vunpack.c.h.b16 %v363
    %v749 = vunpack.c.l.b16 %v364
    %v750 = vunpack.c.h.b16 %v364
    %v751 = vunpack.c.l.b16 %v365
    %v752 = vunpack.c.h.b16 %v365
    %v753 = vunpack.c.l.b16 %v366
    %v754 = vunpack.c.h.b16 %v366
    %v755 = vunpack.c.l.b16 %v367
    %v756 = vunpack.c.h.b16 %v367
    %v757 = vunpack.c.l.b16 %v368
    %v758 = vunpack.c.h.b16 %v368
    %v759 = vunpack.c.l.b16 %v369
    %v760 = vunpack.c.h.b16 %v369
    %v761 = vunpack.c.l.b16 %v370
    %v762 = vunpack.c.h.b16 %v370
    %v763 = vunpack.c.l.b16 %v371
    %v764 = vunpack.c.h.b16 %v371
    %v765 = vunpack.c.l.b16 %v372
    %v766 = vunpack.c.h.b16 %v372
    %v767 = vunpack.c.l.b16 %v373
    %v768 = vunpack.c.h.b16 %v373
    %v769 = vunpack.c.l.b16 %v374
    %v770 = vunpack.c.h.b16 %v374
    %v771 = vunpack.c.l.b16 %v375
    %v772 = vunpack.c.h.b16 %v375
    %v773 = vunpack.c.l.b16 %v376
    %v774 = vunpack.c.h.b16 %v376
    %v775 = vunpack.c.l.b16 %v377
    %v776 = vunpack.c.h.b16 %v377
    %v777 = vunpack.c.l.b16 %v378
    %v778 = vunpack.c.h.b16 %v378
    %v779 = vunpack.c.l.b16 %v379
    %v780 = vunpack.c.h.b16 %v379
    %v781 = vunpack.c.l.b16 %v380
    %v782 = vunpack.c.h.b16 %v380
    %v783 = vunpack.c.l.b16 %v381
    %v784 = vunpack.c.h.b16 %v381
    %v785 = vunpack.c.l.b16 %v382
    %v786 = vunpack.c.h.b16 %v382
    %v787 = vunpack.c.l.b16 %v383
    %v788 = vunpack.c.h.b16 %v383
    %v789 = vunpack.c.l.b16 %v384
    %v790 = vunpack.c.h.b16 %v384
    %v791 = vunpack.c.l.b16 %v385
    %v792 = vunpack.c.h.b16 %v385
    %v793 = vpack.c.b16 %v541, %v537
    %v794 = vpack.c.b16 %v542, %v538
    %v795 = vpack.c.b16 %v543, %v539
    %v796 = vpack.c.b16 %v544, %v540
    %v797 = vpack.c.b16 %v549, %v545
    %v798 = vpack.c.b16 %v550, %v546
    %v799 = vpack.c.b16 %v551, %v547
    %v800 = vpack.c.b16 %v552, %v548
    %v801 = vpack.c.b16 %v557, %v553
    %v802 = vpack.c.b16 %v558, %v554
    %v803 = vpack.c.b16 %v559, %v555
    %v804 = vpack.c.b16 %v560, %v556
    %v805 = vpack.c.b16 %v565, %v561
    %v806 = vpack.c.b16 %v566, %v562
    %v807 = vpack.c.b16 %v567, %v563
    %v808 = vpack.c.b16 %v568, %v564
    %v809 = vpack.c.b16 %v573, %v569
    %v810 = vpack.c.b16 %v574, %v570
    %v811 = vpack.c.b16 %v575, %v571
    %v812 = vpack.c.b16 %v576, %v572
    %v813 = vpack.c.b16 %v581, %v577
    %v814 = vpack.c.b16 %v582, %v578
    %v815 = vpack.c.b16 %v583, %v579
    %v816 = vpack.c.b16 %v584, %v580
    %v817 = vpack.c.b16 %v589, %v585
    %v818 = vpack.c.b16 %v590, %v586
    %v819 = vpack.c.b16 %v591, %v587
    %v820 = vpack.c.b16 %v592, %v588
    %v821 = vpack.c.b16 %v597, %v593
    %v822 = vpack.c.b16 %v598, %v594
    %v823 = vpack.c.b16 %v599, %v595
    %v824 = vpack.c.b16 %v600, %v596
    %v825 = vpack.c.b16 %v605, %v601
    %v826 = vpack.c.b16 %v606, %v602
    %v827 = vpack.c.b16 %v607, %v603
    %v828 = vpack.c.b16 %v608, %v604
    %v829 = vpack.c.b16 %v613, %v609
    %v830 = vpack.c.b16 %v614, %v610
    %v831 = vpack.c.b16 %v615, %v611
    %v832 = vpack.c.b16 %v616, %v612
    %v833 = vpack.c.b16 %v621, %v617
    %v834 = vpack.c.b16 %v622, %v618
    %v835 = vpack.c.b16 %v623, %v619
    %v836 = vpack.c.b16 %v624, %v620
    %v837 = vpack.c.b16 %v629, %v625
    %v838 = vpack.c.b16 %v630, %v626
    %v839 = vpack.c.b16 %v631, %v627
    %v840 = vpack.c.b16 %v632, %v628
    %v841 = vpack.c.b16 %v637, %v633
    %v842 = vpack.c.b16 %v638, %v634
    %v843 = vpack.c.b16 %v639, %v635
    %v844 = vpack.c.b16 %v640, %v636
    %v845 = vpack.c.b16 %v645, %v641
    %v846 = vpack.c.b16 %v646, %v642
    %v847 = vpack.c.b16 %v647, %v643
    %v848 = vpack.c.b16 %v648, %v644
    %v849 = vpack.c.b16 %v653, %v649
    %v850 = vpack.c.b16 %v654, %v650
    %v851 = vpack.c.b16 %v655, %v651
    %v852 = vpack.c.b16 %v656, %v652
    %v853 = vpack.c.b16 %v661, %v657
    %v854 = vpack.c.b16 %v662, %v658
    %v855 = vpack.c.b16 %v663, %v659
    %v856 = vpack.c.b16 %v664, %v660
    %v857 = vpack.c.b16 %v669, %v665
    %v858 = vpack.c.b16 %v670, %v666
    %v859 = vpack.c.b16 %v671, %v667
    %v860 = vpack.c.b16 %v672, %v668
    %v861 = vpack.c.b16 %v677, %v673
    %v862 = vpack.c.b16 %v678, %v674
    %v863 = vpack.c.b16 %v679, %v675
    %v864 = vpack.c.b16 %v680, %v676
    %v865 = vpack.c.b16 %v685, %v681
    %v866 = vpack.c.b16 %v686, %v682
    %v867 = vpack.c.b16 %v687, %v683
    %v868 = vpack.c.b16 %v688, %v684
    %v869 = vpack.c.b16 %v693, %v689
    %v870 = vpack.c.b16 %v694, %v690
    %v871 = vpack.c.b16 %v695, %v691
    %v872 = vpack.c.b16 %v696, %v692
    %v873 = vpack.c.b16 %v701, %v697
    %v874 = vpack.c.b16 %v702, %v698
    %v875 = vpack.c.b16 %v703, %v699
    %v876 = vpack.c.b16 %v704, %v700
    %v877 = vpack.c.b16 %v709, %v705
    %v878 = vpack.c.b16 %v710, %v706
    %v879 = vpack.c.b16 %v711, %v707
    %v880 = vpack.c.b16 %v712, %v708
    %v881 = vpack.c.b16 %v717, %v713
    %v882 = vpack.c.b16 %v718, %v714
    %v883 = vpack.c.b16 %v719, %v715
    %v884 = vpack.c.b16 %v720, %v716
    %v885 = vpack.c.b16 %v725, %v721
    %v886 = vpack.c.b16 %v726, %v722
    %v887 = vpack.c.b16 %v727, %v723
    %v888 = vpack.c.b16 %v728, %v724
    %v889 = vpack.c.b16 %v733, %v729
    %v890 = vpack.c.b16 %v734, %v730
    %v891 = vpack.c.b16 %v735, %v731
    %v892 = vpack.c.b16 %v736, %v732
    %v893 = vpack.c.b16 %v741, %v737
    %v894 = vpack.c.b16 %v742, %v738
    %v895 = vpack.c.b16 %v743, %v739
    %v896 = vpack.c.b16 %v744, %v740
    %v897 = vpack.c.b16 %v749, %v745
    %v898 = vpack.c.b16 %v750, %v746
    %v899 = vpack.c.b16 %v751, %v747
    %v900 = vpack.c.b16 %v752, %v748
    %v901 = vpack.c.b16 %v757, %v753
    %v902 = vpack.c.b16 %v758, %v754
    %v903 = vpack.c.b16 %v759, %v755
    %v904 = vpack.c.b16 %v760, %v756
    %v905 = vpack.c.b16 %v765, %v761
    %v906 = vpack.c.b16 %v766, %v762
    %v907 = vpack.c.b16 %v767, %v763
    %v908 = vpack.c.b16 %v768, %v764
    %v909 = vpack.c.b16 %v773, %v769
    %v910 = vpack.c.b16 %v774, %v770
    %v911 = vpack.c.b16 %v775, %v771
    %v912 = vpack.c.b16 %v776, %v772
    %v913 = vpack.c.b16 %v781, %v777
    %v914 = vpack.c.b16 %v782, %v778
    %v915 = vpack.c.b16 %v783, %v779
    %v916 = vpack.c.b16 %v784, %v780
    %v917 = vpack.c.b16 %v789, %v785
    %v918 = vpack.c.b16 %v790, %v786
    %v919 = vpack.c.b16 %v791, %v787
    %v920 = vpack.c.b16 %v792, %v788
    %1049 = vmatprep.subr.bf16.mxu0 %v822
    %1050 = vmatpush1.bf16.msra.mxu0 %v821
    %1051 = vmatprep.subr.bf16.mxu0 %v818
    %1052 = vmatpush1.bf16.msra.mxu0 %v817
    %1053 = vmatprep.subr.bf16.mxu0 %v814
    %1054 = vmatpush1.bf16.msra.mxu0 %v813
    %1055 = vmatprep.subr.bf16.mxu0 %v810
    %1056 = vmatpush1.bf16.msra.mxu0 %v809
    %1057 = vmatprep.subr.bf16.mxu0 %v806
    %1058 = vmatpush1.bf16.msra.mxu0 %v805
    %1059 = vmatprep.subr.bf16.mxu0 %v802
    %1060 = vmatpush1.bf16.msra.mxu0 %v801
    %1061 = vmatprep.subr.bf16.mxu0 %v798
    %1062 = vmatpush1.bf16.msra.mxu0 %v797
    %1063 = vmatprep.subr.bf16.mxu0 %v794
    %1064 = vmatpush1.bf16.msra.mxu0 %v793
    %1065 = vmatprep.subr.bf16.mxu0 %v854
    %1066 = vmatpush2.bf16.msra.mxu0 %v853
    %1067 = vmatprep.subr.bf16.mxu0 %v850
    %1068 = vmatpush2.bf16.msra.mxu0 %v849
    %1069 = vmatprep.subr.bf16.mxu0 %v846
    %1070 = vmatpush2.bf16.msra.mxu0 %v845
    %1071 = vmatprep.subr.bf16.mxu0 %v842
    %1072 = vmatpush2.bf16.msra.mxu0 %v841
    %1073 = vmatprep.subr.bf16.mxu0 %v838
    %1074 = vmatpush2.bf16.msra.mxu0 %v837
    %1075 = vmatprep.subr.bf16.mxu0 %v834
    %1076 = vmatpush2.bf16.msra.mxu0 %v833
    %1077 = vmatprep.subr.bf16.mxu0 %v830
    %1078 = vmatpush2.bf16.msra.mxu0 %v829
    %1079 = vmatprep.subr.bf16.mxu0 %v826
    %1080 = vmatpush2.bf16.msra.mxu0 %v825
    %1081 = vmatprep.mubr.bf16.mxu0 %v255
    %1082 = vmatmul.mubr.bf16.gmra.mxu0 %v254
    %v1083 = vpop.f32.mrf.mxu0
    %v1084 = vadd.f32 %v392, %v1083
    %v1085 = vpop.f32.mrf.mxu0
    %v1086 = vadd.f32 %v396, %v1085
    %v1087 = vpop.f32.mrf.mxu0
    %v1088 = vpop.f32.mrf.mxu0
    %1089 = vdwg.mxu0
    %1090 = vmatprep.subr.bf16.mxu0 %v886
    %1091 = vmatpush1.bf16.msra.mxu0 %v885
    %1092 = vmatprep.subr.bf16.mxu0 %v882
    %1093 = vmatpush1.bf16.msra.mxu0 %v881
    %1094 = vmatprep.subr.bf16.mxu0 %v878
    %1095 = vmatpush1.bf16.msra.mxu0 %v877
    %1096 = vmatprep.subr.bf16.mxu0 %v874
    %1097 = vmatpush1.bf16.msra.mxu0 %v873
    %1098 = vmatprep.subr.bf16.mxu0 %v870
    %1099 = vmatpush1.bf16.msra.mxu0 %v869
    %1100 = vmatprep.subr.bf16.mxu0 %v866
    %1101 = vmatpush1.bf16.msra.mxu0 %v865
    %1102 = vmatprep.subr.bf16.mxu0 %v862
    %1103 = vmatpush1.bf16.msra.mxu0 %v861
    %1104 = vmatprep.subr.bf16.mxu0 %v858
    %1105 = vmatpush1.bf16.msra.mxu0 %v857
    %1106 = vmatprep.subr.bf16.mxu0 %v918
    %1107 = vmatpush2.bf16.msra.mxu0 %v917
    %1108 = vmatprep.subr.bf16.mxu0 %v914
    %1109 = vmatpush2.bf16.msra.mxu0 %v913
    %1110 = vmatprep.subr.bf16.mxu0 %v910
    %1111 = vmatpush2.bf16.msra.mxu0 %v909
    %1112 = vmatprep.subr.bf16.mxu0 %v906
    %1113 = vmatpush2.bf16.msra.mxu0 %v905
    %1114 = vmatprep.subr.bf16.mxu0 %v902
    %1115 = vmatpush2.bf16.msra.mxu0 %v901
    %1116 = vmatprep.subr.bf16.mxu0 %v898
    %1117 = vmatpush2.bf16.msra.mxu0 %v897
    %1118 = vmatprep.subr.bf16.mxu0 %v894
    %1119 = vmatpush2.bf16.msra.mxu0 %v893
    %1120 = vmatprep.subr.bf16.mxu0 %v890
    %1121 = vmatpush2.bf16.msra.mxu0 %v889
    %1122 = vmatprep.mubr.bf16.mxu0 %v257
    %1123 = vmatmul.mubr.bf16.gmra.mxu0 %v256
    %v1124 = vpop.f32.mrf.mxu0
    %v1125 = vadd.f32 %v1084, %v1124
    %v1126 = vpop.f32.mrf.mxu0
    %v1127 = vadd.f32 %v1086, %v1126
    %v1128 = vpop.f32.mrf.mxu0
    %v1129 = vpop.f32.mrf.mxu0
    %1130 = vdwg.mxu0
    %1131 = vmatprep.subr.bf16.mxu0 %v824
    %1132 = vmatpush1.bf16.msra.mxu0 %v823
    %1133 = vmatprep.subr.bf16.mxu0 %v820
    %1134 = vmatpush1.bf16.msra.mxu0 %v819
    %1135 = vmatprep.subr.bf16.mxu0 %v816
    %1136 = vmatpush1.bf16.msra.mxu0 %v815
    %1137 = vmatprep.subr.bf16.mxu0 %v812
    %1138 = vmatpush1.bf16.msra.mxu0 %v811
    %1139 = vmatprep.subr.bf16.mxu0 %v808
    %1140 = vmatpush1.bf16.msra.mxu0 %v807
    %1141 = vmatprep.subr.bf16.mxu0 %v804
    %1142 = vmatpush1.bf16.msra.mxu0 %v803
    %1143 = vmatprep.subr.bf16.mxu0 %v800
    %1144 = vmatpush1.bf16.msra.mxu0 %v799
    %1145 = vmatprep.subr.bf16.mxu0 %v796
    %1146 = vmatpush1.bf16.msra.mxu0 %v795
    %1147 = vmatprep.subr.bf16.mxu0 %v856
    %1148 = vmatpush2.bf16.msra.mxu0 %v855
    %1149 = vmatprep.subr.bf16.mxu0 %v852
    %1150 = vmatpush2.bf16.msra.mxu0 %v851
    %1151 = vmatprep.subr.bf16.mxu0 %v848
    %1152 = vmatpush2.bf16.msra.mxu0 %v847
    %1153 = vmatprep.subr.bf16.mxu0 %v844
    %1154 = vmatpush2.bf16.msra.mxu0 %v843
    %1155 = vmatprep.subr.bf16.mxu0 %v840
    %1156 = vmatpush2.bf16.msra.mxu0 %v839
    %1157 = vmatprep.subr.bf16.mxu0 %v836
    %1158 = vmatpush2.bf16.msra.mxu0 %v835
    %1159 = vmatprep.subr.bf16.mxu0 %v832
    %1160 = vmatpush2.bf16.msra.mxu0 %v831
    %1161 = vmatprep.subr.bf16.mxu0 %v828
    %1162 = vmatpush2.bf16.msra.mxu0 %v827
    %1163 = vmatprep.mubr.bf16.mxu0 %v255
    %1164 = vmatmul.mubr.bf16.gmra.mxu0 %v254
    %v1165 = vpop.f32.mrf.mxu0
    %v1166 = vadd.f32 %v400, %v1165
    %v1167 = vpop.f32.mrf.mxu0
    %v1168 = vadd.f32 %v404, %v1167
    %v1169 = vpop.f32.mrf.mxu0
    %v1170 = vpop.f32.mrf.mxu0
    %1171 = vdwg.mxu0
    %1172 = vmatprep.subr.bf16.mxu0 %v888
    %1173 = vmatpush1.bf16.msra.mxu0 %v887
    %1174 = vmatprep.subr.bf16.mxu0 %v884
    %1175 = vmatpush1.bf16.msra.mxu0 %v883
    %1176 = vmatprep.subr.bf16.mxu0 %v880
    %1177 = vmatpush1.bf16.msra.mxu0 %v879
    %1178 = vmatprep.subr.bf16.mxu0 %v876
    %1179 = vmatpush1.bf16.msra.mxu0 %v875
    %1180 = vmatprep.subr.bf16.mxu0 %v872
    %1181 = vmatpush1.bf16.msra.mxu0 %v871
    %1182 = vmatprep.subr.bf16.mxu0 %v868
    %1183 = vmatpush1.bf16.msra.mxu0 %v867
    %1184 = vmatprep.subr.bf16.mxu0 %v864
    %1185 = vmatpush1.bf16.msra.mxu0 %v863
    %1186 = vmatprep.subr.bf16.mxu0 %v860
    %1187 = vmatpush1.bf16.msra.mxu0 %v859
    %1188 = vmatprep.subr.bf16.mxu0 %v920
    %1189 = vmatpush2.bf16.msra.mxu0 %v919
    %1190 = vmatprep.subr.bf16.mxu0 %v916
    %1191 = vmatpush2.bf16.msra.mxu0 %v915
    %1192 = vmatprep.subr.bf16.mxu0 %v912
    %1193 = vmatpush2.bf16.msra.mxu0 %v911
    %1194 = vmatprep.subr.bf16.mxu0 %v908
    %1195 = vmatpush2.bf16.msra.mxu0 %v907
    %1196 = vmatprep.subr.bf16.mxu0 %v904
    %1197 = vmatpush2.bf16.msra.mxu0 %v903
    %1198 = vmatprep.subr.bf16.mxu0 %v900
    %1199 = vmatpush2.bf16.msra.mxu0 %v899
    %1200 = vmatprep.subr.bf16.mxu0 %v896
    %1201 = vmatpush2.bf16.msra.mxu0 %v895
    %1202 = vmatprep.subr.bf16.mxu0 %v892
    %1203 = vmatpush2.bf16.msra.mxu0 %v891
    %1204 = vmatprep.mubr.bf16.mxu0 %v257
    %1205 = vmatmul.mubr.bf16.gmra.mxu0 %v256
    %v1206 = vpop.f32.mrf.mxu0
    %v1207 = vadd.f32 %v1166, %v1206
    %v1208 = vpop.f32.mrf.mxu0
    %v1209 = vadd.f32 %v1168, %v1208
    %v1210 = vpop.f32.mrf.mxu0
    %v1211 = vpop.f32.mrf.mxu0
    %1212 = vdwg.mxu0
    %v1213 = vpack.c.bf16 %v1125, %v1125
    %v1214 = vpack.c.bf16 %v1127, %v1127
    %v1215 = vpack.c.bf16 %v1207, %v1207
    %v1216 = vpack.c.bf16 %v1209, %v1209
    %v1217 = vmul.bf16 %v1213, 1009007652
    %v1218 = vmul.bf16 %v1214, 1009007652
    %v1219 = vmul.bf16 %v1215, 1009007652
    %v1220 = vmul.bf16 %v1216, 1009007652
    %v1221 = vmax.bf16 %v1213, %v1217
    %v1222 = vmax.bf16 %v1214, %v1218
    %v1223 = vmax.bf16 %v1215, %v1219
    %v1224 = vmax.bf16 %v1216, %v1220
    %v1225 = vld [vmem:[#allocation4 + $0x440] sm:$0xff]
    %v1226 = vld [vmem:[#allocation4 + $0x448] sm:$0xff]
    %v1227 = vld [vmem:[#allocation4 + $0x450] sm:$0xff]
    %v1228 = vld [vmem:[#allocation4 + $0x458] sm:$0xff]
    %v1229 = vld [vmem:[#allocation4 + $0x460] sm:$0xff]
    %v1230 = vld [vmem:[#allocation4 + $0x468] sm:$0xff]
    %v1231 = vld [vmem:[#allocation4 + $0x470] sm:$0xff]
    %v1232 = vld [vmem:[#allocation4 + $0x478] sm:$0xff]
    %v1233 = vld [vmem:[#allocation4 + $0x480] sm:$0xff]
    %v1234 = vld [vmem:[#allocation4 + $0x488] sm:$0xff]
    %v1235 = vld [vmem:[#allocation4 + $0x490] sm:$0xff]
    %v1236 = vld [vmem:[#allocation4 + $0x498] sm:$0xff]
    %v1237 = vld [vmem:[#allocation4 + $0x4a0] sm:$0xff]
    %v1238 = vld [vmem:[#allocation4 + $0x4a8] sm:$0xff]
    %v1239 = vld [vmem:[#allocation4 + $0x4b0] sm:$0xff]
    %v1240 = vld [vmem:[#allocation4 + $0x4b8] sm:$0xff]
    %v1241 = vld [vmem:[#allocation4 + $0x4c0] sm:$0xff]
    %v1242 = vld [vmem:[#allocation4 + $0x4c8] sm:$0xff]
    %v1243 = vld [vmem:[#allocation4 + $0x4d0] sm:$0xff]
    %v1244 = vld [vmem:[#allocation4 + $0x4d8] sm:$0xff]
    %v1245 = vld [vmem:[#allocation4 + $0x4e0] sm:$0xff]
    %v1246 = vld [vmem:[#allocation4 + $0x4e8] sm:$0xff]
    %v1247 = vld [vmem:[#allocation4 + $0x4f0] sm:$0xff]
    %v1248 = vld [vmem:[#allocation4 + $0x4f8] sm:$0xff]
    %v1249 = vld [vmem:[#allocation4 + $0x500] sm:$0xff]
    %v1250 = vld [vmem:[#allocation4 + $0x508] sm:$0xff]
    %v1251 = vld [vmem:[#allocation4 + $0x510] sm:$0xff]
    %v1252 = vld [vmem:[#allocation4 + $0x518] sm:$0xff]
    %v1253 = vld [vmem:[#allocation4 + $0x520] sm:$0xff]
    %v1254 = vld [vmem:[#allocation4 + $0x528] sm:$0xff]
    %v1255 = vld [vmem:[#allocation4 + $0x530] sm:$0xff]
    %v1256 = vld [vmem:[#allocation4 + $0x538] sm:$0xff]
    %v1257 = vld [vmem:[#allocation4 + $0x540] sm:$0xff]
    %v1258 = vld [vmem:[#allocation4 + $0x548] sm:$0xff]
    %v1259 = vld [vmem:[#allocation4 + $0x550] sm:$0xff]
    %v1260 = vld [vmem:[#allocation4 + $0x558] sm:$0xff]
    %v1261 = vld [vmem:[#allocation4 + $0x560] sm:$0xff]
    %v1262 = vld [vmem:[#allocation4 + $0x568] sm:$0xff]
    %v1263 = vld [vmem:[#allocation4 + $0x570] sm:$0xff]
    %v1264 = vld [vmem:[#allocation4 + $0x578] sm:$0xff]
    %v1265 = vld [vmem:[#allocation4 + $0x580] sm:$0xff]
    %v1266 = vld [vmem:[#allocation4 + $0x588] sm:$0xff]
    %v1267 = vld [vmem:[#allocation4 + $0x590] sm:$0xff]
    %v1268 = vld [vmem:[#allocation4 + $0x598] sm:$0xff]
    %v1269 = vld [vmem:[#allocation4 + $0x5a0] sm:$0xff]
    %v1270 = vld [vmem:[#allocation4 + $0x5a8] sm:$0xff]
    %v1271 = vld [vmem:[#allocation4 + $0x5b0] sm:$0xff]
    %v1272 = vld [vmem:[#allocation4 + $0x5b8] sm:$0xff]
    %v1273 = vld [vmem:[#allocation4 + $0x5c0] sm:$0xff]
    %v1274 = vld [vmem:[#allocation4 + $0x5c8] sm:$0xff]
    %v1275 = vld [vmem:[#allocation4 + $0x5d0] sm:$0xff]
    %v1276 = vld [vmem:[#allocation4 + $0x5d8] sm:$0xff]
    %v1277 = vld [vmem:[#allocation4 + $0x5e0] sm:$0xff]
    %v1278 = vld [vmem:[#allocation4 + $0x5e8] sm:$0xff]
    %v1279 = vld [vmem:[#allocation4 + $0x5f0] sm:$0xff]
    %v1280 = vld [vmem:[#allocation4 + $0x5f8] sm:$0xff]
    %v1281 = vld [vmem:[#allocation4 + $0x600] sm:$0xff]
    %v1282 = vld [vmem:[#allocation4 + $0x608] sm:$0xff]
    %v1283 = vld [vmem:[#allocation4 + $0x610] sm:$0xff]
    %v1284 = vld [vmem:[#allocation4 + $0x618] sm:$0xff]
    %v1285 = vld [vmem:[#allocation4 + $0x620] sm:$0xff]
    %v1286 = vld [vmem:[#allocation4 + $0x628] sm:$0xff]
    %v1287 = vld [vmem:[#allocation4 + $0x630] sm:$0xff]
    %v1288 = vld [vmem:[#allocation4 + $0x638] sm:$0xff]
    %v1289 = vld [vmem:[#allocation4 + $0x640] sm:$0xff]
    %v1290 = vld [vmem:[#allocation4 + $0x648] sm:$0xff]
    %v1291 = vld [vmem:[#allocation4 + $0x650] sm:$0xff]
    %v1292 = vld [vmem:[#allocation4 + $0x658] sm:$0xff]
    %v1293 = vld [vmem:[#allocation4 + $0x660] sm:$0xff]
    %v1294 = vld [vmem:[#allocation4 + $0x668] sm:$0xff]
    %v1295 = vld [vmem:[#allocation4 + $0x670] sm:$0xff]
    %v1296 = vld [vmem:[#allocation4 + $0x678] sm:$0xff]
    %v1297 = vld [vmem:[#allocation4 + $0x680] sm:$0xff]
    %v1298 = vld [vmem:[#allocation4 + $0x688] sm:$0xff]
    %v1299 = vld [vmem:[#allocation4 + $0x690] sm:$0xff]
    %v1300 = vld [vmem:[#allocation4 + $0x698] sm:$0xff]
    %v1301 = vld [vmem:[#allocation4 + $0x6a0] sm:$0xff]
    %v1302 = vld [vmem:[#allocation4 + $0x6a8] sm:$0xff]
    %v1303 = vld [vmem:[#allocation4 + $0x6b0] sm:$0xff]
    %v1304 = vld [vmem:[#allocation4 + $0x6b8] sm:$0xff]
    %v1305 = vld [vmem:[#allocation4 + $0x6c0] sm:$0xff]
    %v1306 = vld [vmem:[#allocation4 + $0x6c8] sm:$0xff]
    %v1307 = vld [vmem:[#allocation4 + $0x6d0] sm:$0xff]
    %v1308 = vld [vmem:[#allocation4 + $0x6d8] sm:$0xff]
    %v1309 = vld [vmem:[#allocation4 + $0x6e0] sm:$0xff]
    %v1310 = vld [vmem:[#allocation4 + $0x6e8] sm:$0xff]
    %v1311 = vld [vmem:[#allocation4 + $0x6f0] sm:$0xff]
    %v1312 = vld [vmem:[#allocation4 + $0x6f8] sm:$0xff]
    %v1313 = vld [vmem:[#allocation4 + $0x700] sm:$0xff]
    %v1314 = vld [vmem:[#allocation4 + $0x708] sm:$0xff]
    %v1315 = vld [vmem:[#allocation4 + $0x710] sm:$0xff]
    %v1316 = vld [vmem:[#allocation4 + $0x718] sm:$0xff]
    %v1317 = vld [vmem:[#allocation4 + $0x720] sm:$0xff]
    %v1318 = vld [vmem:[#allocation4 + $0x728] sm:$0xff]
    %v1319 = vld [vmem:[#allocation4 + $0x730] sm:$0xff]
    %v1320 = vld [vmem:[#allocation4 + $0x738] sm:$0xff]
    %v1321 = vld [vmem:[#allocation4 + $0x740] sm:$0xff]
    %v1322 = vld [vmem:[#allocation4 + $0x748] sm:$0xff]
    %v1323 = vld [vmem:[#allocation4 + $0x750] sm:$0xff]
    %v1324 = vld [vmem:[#allocation4 + $0x758] sm:$0xff]
    %v1325 = vld [vmem:[#allocation4 + $0x760] sm:$0xff]
    %v1326 = vld [vmem:[#allocation4 + $0x768] sm:$0xff]
    %v1327 = vld [vmem:[#allocation4 + $0x770] sm:$0xff]
    %v1328 = vld [vmem:[#allocation4 + $0x778] sm:$0xff]
    %v1329 = vld [vmem:[#allocation4 + $0x780] sm:$0xff]
    %v1330 = vld [vmem:[#allocation4 + $0x788] sm:$0xff]
    %v1331 = vld [vmem:[#allocation4 + $0x790] sm:$0xff]
    %v1332 = vld [vmem:[#allocation4 + $0x798] sm:$0xff]
    %v1333 = vld [vmem:[#allocation4 + $0x7a0] sm:$0xff]
    %v1334 = vld [vmem:[#allocation4 + $0x7a8] sm:$0xff]
    %v1335 = vld [vmem:[#allocation4 + $0x7b0] sm:$0xff]
    %v1336 = vld [vmem:[#allocation4 + $0x7b8] sm:$0xff]
    %v1337 = vld [vmem:[#allocation4 + $0x7c0] sm:$0xff]
    %v1338 = vld [vmem:[#allocation4 + $0x7c8] sm:$0xff]
    %v1339 = vld [vmem:[#allocation4 + $0x7d0] sm:$0xff]
    %v1340 = vld [vmem:[#allocation4 + $0x7d8] sm:$0xff]
    %v1341 = vld [vmem:[#allocation4 + $0x7e0] sm:$0xff]
    %v1342 = vld [vmem:[#allocation4 + $0x7e8] sm:$0xff]
    %v1343 = vld [vmem:[#allocation4 + $0x7f0] sm:$0xff]
    %v1344 = vld [vmem:[#allocation4 + $0x7f8] sm:$0xff]
    %v1345 = vld [vmem:[#allocation4 + $0x800] sm:$0xff]
    %v1346 = vld [vmem:[#allocation4 + $0x808] sm:$0xff]
    %v1347 = vld [vmem:[#allocation4 + $0x810] sm:$0xff]
    %v1348 = vld [vmem:[#allocation4 + $0x818] sm:$0xff]
    %v1349 = vld [vmem:[#allocation4 + $0x820] sm:$0xff]
    %v1350 = vld [vmem:[#allocation4 + $0x828] sm:$0xff]
    %v1351 = vld [vmem:[#allocation4 + $0x830] sm:$0xff]
    %v1352 = vld [vmem:[#allocation4 + $0x838] sm:$0xff]
    %s1353 = scalar_lea.vmem [#allocation9], 2
    %v1354 = vld [vmem:[%s1353] ss:$8 sm:$0xf]
    %v1356 = vlaneseq
    %v1357 = vshrl.u32 %v1356, 7
    %v1358 = vsub.s32 0, %v1357
    %v1359 = vrot.slane %v1354, %v1358
    %v1360 = vlaneseq
    %v1361 = vshrl.u32 %v1360, 7
    %v1362 = vsub.s32 1, %v1361
    %v1363 = vrot.slane %v1354, %v1362
    %v1364 = vlaneseq
    %v1365 = vshrl.u32 %v1364, 7
    %v1366 = vsub.s32 2, %v1365
    %v1367 = vrot.slane %v1354, %v1366
    %v1368 = vlaneseq
    %v1369 = vshrl.u32 %v1368, 7
    %v1370 = vsub.s32 3, %v1369
    %v1371 = vrot.slane %v1354, %v1370
    %v1504 = vunpack.c.l.b16 %v1225
    %v1505 = vunpack.c.h.b16 %v1225
    %v1506 = vunpack.c.l.b16 %v1226
    %v1507 = vunpack.c.h.b16 %v1226
    %v1508 = vunpack.c.l.b16 %v1227
    %v1509 = vunpack.c.h.b16 %v1227
    %v1510 = vunpack.c.l.b16 %v1228
    %v1511 = vunpack.c.h.b16 %v1228
    %v1512 = vunpack.c.l.b16 %v1229
    %v1513 = vunpack.c.h.b16 %v1229
    %v1514 = vunpack.c.l.b16 %v1230
    %v1515 = vunpack.c.h.b16 %v1230
    %v1516 = vunpack.c.l.b16 %v1231
    %v1517 = vunpack.c.h.b16 %v1231
    %v1518 = vunpack.c.l.b16 %v1232
    %v1519 = vunpack.c.h.b16 %v1232
    %v1520 = vunpack.c.l.b16 %v1233
    %v1521 = vunpack.c.h.b16 %v1233
    %v1522 = vunpack.c.l.b16 %v1234
    %v1523 = vunpack.c.h.b16 %v1234
    %v1524 = vunpack.c.l.b16 %v1235
    %v1525 = vunpack.c.h.b16 %v1235
    %v1526 = vunpack.c.l.b16 %v1236
    %v1527 = vunpack.c.h.b16 %v1236
    %v1528 = vunpack.c.l.b16 %v1237
    %v1529 = vunpack.c.h.b16 %v1237
    %v1530 = vunpack.c.l.b16 %v1238
    %v1531 = vunpack.c.h.b16 %v1238
    %v1532 = vunpack.c.l.b16 %v1239
    %v1533 = vunpack.c.h.b16 %v1239
    %v1534 = vunpack.c.l.b16 %v1240
    %v1535 = vunpack.c.h.b16 %v1240
    %v1536 = vunpack.c.l.b16 %v1241
    %v1537 = vunpack.c.h.b16 %v1241
    %v1538 = vunpack.c.l.b16 %v1242
    %v1539 = vunpack.c.h.b16 %v1242
    %v1540 = vunpack.c.l.b16 %v1243
    %v1541 = vunpack.c.h.b16 %v1243
    %v1542 = vunpack.c.l.b16 %v1244
    %v1543 = vunpack.c.h.b16 %v1244
    %v1544 = vunpack.c.l.b16 %v1245
    %v1545 = vunpack.c.h.b16 %v1245
    %v1546 = vunpack.c.l.b16 %v1246
    %v1547 = vunpack.c.h.b16 %v1246
    %v1548 = vunpack.c.l.b16 %v1247
    %v1549 = vunpack.c.h.b16 %v1247
    %v1550 = vunpack.c.l.b16 %v1248
    %v1551 = vunpack.c.h.b16 %v1248
    %v1552 = vunpack.c.l.b16 %v1249
    %v1553 = vunpack.c.h.b16 %v1249
    %v1554 = vunpack.c.l.b16 %v1250
    %v1555 = vunpack.c.h.b16 %v1250
    %v1556 = vunpack.c.l.b16 %v1251
    %v1557 = vunpack.c.h.b16 %v1251
    %v1558 = vunpack.c.l.b16 %v1252
    %v1559 = vunpack.c.h.b16 %v1252
    %v1560 = vunpack.c.l.b16 %v1253
    %v1561 = vunpack.c.h.b16 %v1253
    %v1562 = vunpack.c.l.b16 %v1254
    %v1563 = vunpack.c.h.b16 %v1254
    %v1564 = vunpack.c.l.b16 %v1255
    %v1565 = vunpack.c.h.b16 %v1255
    %v1566 = vunpack.c.l.b16 %v1256
    %v1567 = vunpack.c.h.b16 %v1256
    %v1568 = vunpack.c.l.b16 %v1257
    %v1569 = vunpack.c.h.b16 %v1257
    %v1570 = vunpack.c.l.b16 %v1258
    %v1571 = vunpack.c.h.b16 %v1258
    %v1572 = vunpack.c.l.b16 %v1259
    %v1573 = vunpack.c.h.b16 %v1259
    %v1574 = vunpack.c.l.b16 %v1260
    %v1575 = vunpack.c.h.b16 %v1260
    %v1576 = vunpack.c.l.b16 %v1261
    %v1577 = vunpack.c.h.b16 %v1261
    %v1578 = vunpack.c.l.b16 %v1262
    %v1579 = vunpack.c.h.b16 %v1262
    %v1580 = vunpack.c.l.b16 %v1263
    %v1581 = vunpack.c.h.b16 %v1263
    %v1582 = vunpack.c.l.b16 %v1264
    %v1583 = vunpack.c.h.b16 %v1264
    %v1584 = vunpack.c.l.b16 %v1265
    %v1585 = vunpack.c.h.b16 %v1265
    %v1586 = vunpack.c.l.b16 %v1266
    %v1587 = vunpack.c.h.b16 %v1266
    %v1588 = vunpack.c.l.b16 %v1267
    %v1589 = vunpack.c.h.b16 %v1267
    %v1590 = vunpack.c.l.b16 %v1268
    %v1591 = vunpack.c.h.b16 %v1268
    %v1592 = vunpack.c.l.b16 %v1269
    %v1593 = vunpack.c.h.b16 %v1269
    %v1594 = vunpack.c.l.b16 %v1270
    %v1595 = vunpack.c.h.b16 %v1270
    %v1596 = vunpack.c.l.b16 %v1271
    %v1597 = vunpack.c.h.b16 %v1271
    %v1598 = vunpack.c.l.b16 %v1272
    %v1599 = vunpack.c.h.b16 %v1272
    %v1600 = vunpack.c.l.b16 %v1273
    %v1601 = vunpack.c.h.b16 %v1273
    %v1602 = vunpack.c.l.b16 %v1274
    %v1603 = vunpack.c.h.b16 %v1274
    %v1604 = vunpack.c.l.b16 %v1275
    %v1605 = vunpack.c.h.b16 %v1275
    %v1606 = vunpack.c.l.b16 %v1276
    %v1607 = vunpack.c.h.b16 %v1276
    %v1608 = vunpack.c.l.b16 %v1277
    %v1609 = vunpack.c.h.b16 %v1277
    %v1610 = vunpack.c.l.b16 %v1278
    %v1611 = vunpack.c.h.b16 %v1278
    %v1612 = vunpack.c.l.b16 %v1279
    %v1613 = vunpack.c.h.b16 %v1279
    %v1614 = vunpack.c.l.b16 %v1280
    %v1615 = vunpack.c.h.b16 %v1280
    %v1616 = vunpack.c.l.b16 %v1281
    %v1617 = vunpack.c.h.b16 %v1281
    %v1618 = vunpack.c.l.b16 %v1282
    %v1619 = vunpack.c.h.b16 %v1282
    %v1620 = vunpack.c.l.b16 %v1283
    %v1621 = vunpack.c.h.b16 %v1283
    %v1622 = vunpack.c.l.b16 %v1284
    %v1623 = vunpack.c.h.b16 %v1284
    %v1624 = vunpack.c.l.b16 %v1285
    %v1625 = vunpack.c.h.b16 %v1285
    %v1626 = vunpack.c.l.b16 %v1286
    %v1627 = vunpack.c.h.b16 %v1286
    %v1628 = vunpack.c.l.b16 %v1287
    %v1629 = vunpack.c.h.b16 %v1287
    %v1630 = vunpack.c.l.b16 %v1288
    %v1631 = vunpack.c.h.b16 %v1288
    %v1632 = vunpack.c.l.b16 %v1289
    %v1633 = vunpack.c.h.b16 %v1289
    %v1634 = vunpack.c.l.b16 %v1290
    %v1635 = vunpack.c.h.b16 %v1290
    %v1636 = vunpack.c.l.b16 %v1291
    %v1637 = vunpack.c.h.b16 %v1291
    %v1638 = vunpack.c.l.b16 %v1292
    %v1639 = vunpack.c.h.b16 %v1292
    %v1640 = vunpack.c.l.b16 %v1293
    %v1641 = vunpack.c.h.b16 %v1293
    %v1642 = vunpack.c.l.b16 %v1294
    %v1643 = vunpack.c.h.b16 %v1294
    %v1644 = vunpack.c.l.b16 %v1295
    %v1645 = vunpack.c.h.b16 %v1295
    %v1646 = vunpack.c.l.b16 %v1296
    %v1647 = vunpack.c.h.b16 %v1296
    %v1648 = vunpack.c.l.b16 %v1297
    %v1649 = vunpack.c.h.b16 %v1297
    %v1650 = vunpack.c.l.b16 %v1298
    %v1651 = vunpack.c.h.b16 %v1298
    %v1652 = vunpack.c.l.b16 %v1299
    %v1653 = vunpack.c.h.b16 %v1299
    %v1654 = vunpack.c.l.b16 %v1300
    %v1655 = vunpack.c.h.b16 %v1300
    %v1656 = vunpack.c.l.b16 %v1301
    %v1657 = vunpack.c.h.b16 %v1301
    %v1658 = vunpack.c.l.b16 %v1302
    %v1659 = vunpack.c.h.b16 %v1302
    %v1660 = vunpack.c.l.b16 %v1303
    %v1661 = vunpack.c.h.b16 %v1303
    %v1662 = vunpack.c.l.b16 %v1304
    %v1663 = vunpack.c.h.b16 %v1304
    %v1664 = vunpack.c.l.b16 %v1305
    %v1665 = vunpack.c.h.b16 %v1305
    %v1666 = vunpack.c.l.b16 %v1306
    %v1667 = vunpack.c.h.b16 %v1306
    %v1668 = vunpack.c.l.b16 %v1307
    %v1669 = vunpack.c.h.b16 %v1307
    %v1670 = vunpack.c.l.b16 %v1308
    %v1671 = vunpack.c.h.b16 %v1308
    %v1672 = vunpack.c.l.b16 %v1309
    %v1673 = vunpack.c.h.b16 %v1309
    %v1674 = vunpack.c.l.b16 %v1310
    %v1675 = vunpack.c.h.b16 %v1310
    %v1676 = vunpack.c.l.b16 %v1311
    %v1677 = vunpack.c.h.b16 %v1311
    %v1678 = vunpack.c.l.b16 %v1312
    %v1679 = vunpack.c.h.b16 %v1312
    %v1680 = vunpack.c.l.b16 %v1313
    %v1681 = vunpack.c.h.b16 %v1313
    %v1682 = vunpack.c.l.b16 %v1314
    %v1683 = vunpack.c.h.b16 %v1314
    %v1684 = vunpack.c.l.b16 %v1315
    %v1685 = vunpack.c.h.b16 %v1315
    %v1686 = vunpack.c.l.b16 %v1316
    %v1687 = vunpack.c.h.b16 %v1316
    %v1688 = vunpack.c.l.b16 %v1317
    %v1689 = vunpack.c.h.b16 %v1317
    %v1690 = vunpack.c.l.b16 %v1318
    %v1691 = vunpack.c.h.b16 %v1318
    %v1692 = vunpack.c.l.b16 %v1319
    %v1693 = vunpack.c.h.b16 %v1319
    %v1694 = vunpack.c.l.b16 %v1320
    %v1695 = vunpack.c.h.b16 %v1320
    %v1696 = vunpack.c.l.b16 %v1321
    %v1697 = vunpack.c.h.b16 %v1321
    %v1698 = vunpack.c.l.b16 %v1322
    %v1699 = vunpack.c.h.b16 %v1322
    %v1700 = vunpack.c.l.b16 %v1323
    %v1701 = vunpack.c.h.b16 %v1323
    %v1702 = vunpack.c.l.b16 %v1324
    %v1703 = vunpack.c.h.b16 %v1324
    %v1704 = vunpack.c.l.b16 %v1325
    %v1705 = vunpack.c.h.b16 %v1325
    %v1706 = vunpack.c.l.b16 %v1326
    %v1707 = vunpack.c.h.b16 %v1326
    %v1708 = vunpack.c.l.b16 %v1327
    %v1709 = vunpack.c.h.b16 %v1327
    %v1710 = vunpack.c.l.b16 %v1328
    %v1711 = vunpack.c.h.b16 %v1328
    %v1712 = vunpack.c.l.b16 %v1329
    %v1713 = vunpack.c.h.b16 %v1329
    %v1714 = vunpack.c.l.b16 %v1330
    %v1715 = vunpack.c.h.b16 %v1330
    %v1716 = vunpack.c.l.b16 %v1331
    %v1717 = vunpack.c.h.b16 %v1331
    %v1718 = vunpack.c.l.b16 %v1332
    %v1719 = vunpack.c.h.b16 %v1332
    %v1720 = vunpack.c.l.b16 %v1333
    %v1721 = vunpack.c.h.b16 %v1333
    %v1722 = vunpack.c.l.b16 %v1334
    %v1723 = vunpack.c.h.b16 %v1334
    %v1724 = vunpack.c.l.b16 %v1335
    %v1725 = vunpack.c.h.b16 %v1335
    %v1726 = vunpack.c.l.b16 %v1336
    %v1727 = vunpack.c.h.b16 %v1336
    %v1728 = vunpack.c.l.b16 %v1337
    %v1729 = vunpack.c.h.b16 %v1337
    %v1730 = vunpack.c.l.b16 %v1338
    %v1731 = vunpack.c.h.b16 %v1338
    %v1732 = vunpack.c.l.b16 %v1339
    %v1733 = vunpack.c.h.b16 %v1339
    %v1734 = vunpack.c.l.b16 %v1340
    %v1735 = vunpack.c.h.b16 %v1340
    %v1736 = vunpack.c.l.b16 %v1341
    %v1737 = vunpack.c.h.b16 %v1341
    %v1738 = vunpack.c.l.b16 %v1342
    %v1739 = vunpack.c.h.b16 %v1342
    %v1740 = vunpack.c.l.b16 %v1343
    %v1741 = vunpack.c.h.b16 %v1343
    %v1742 = vunpack.c.l.b16 %v1344
    %v1743 = vunpack.c.h.b16 %v1344
    %v1744 = vunpack.c.l.b16 %v1345
    %v1745 = vunpack.c.h.b16 %v1345
    %v1746 = vunpack.c.l.b16 %v1346
    %v1747 = vunpack.c.h.b16 %v1346
    %v1748 = vunpack.c.l.b16 %v1347
    %v1749 = vunpack.c.h.b16 %v1347
    %v1750 = vunpack.c.l.b16 %v1348
    %v1751 = vunpack.c.h.b16 %v1348
    %v1752 = vunpack.c.l.b16 %v1349
    %v1753 = vunpack.c.h.b16 %v1349
    %v1754 = vunpack.c.l.b16 %v1350
    %v1755 = vunpack.c.h.b16 %v1350
    %v1756 = vunpack.c.l.b16 %v1351
    %v1757 = vunpack.c.h.b16 %v1351
    %v1758 = vunpack.c.l.b16 %v1352
    %v1759 = vunpack.c.h.b16 %v1352
    %v1760 = vpack.c.b16 %v1508, %v1504
    %v1761 = vpack.c.b16 %v1509, %v1505
    %v1762 = vpack.c.b16 %v1510, %v1506
    %v1763 = vpack.c.b16 %v1511, %v1507
    %v1764 = vpack.c.b16 %v1516, %v1512
    %v1765 = vpack.c.b16 %v1517, %v1513
    %v1766 = vpack.c.b16 %v1518, %v1514
    %v1767 = vpack.c.b16 %v1519, %v1515
    %v1768 = vpack.c.b16 %v1524, %v1520
    %v1769 = vpack.c.b16 %v1525, %v1521
    %v1770 = vpack.c.b16 %v1526, %v1522
    %v1771 = vpack.c.b16 %v1527, %v1523
    %v1772 = vpack.c.b16 %v1532, %v1528
    %v1773 = vpack.c.b16 %v1533, %v1529
    %v1774 = vpack.c.b16 %v1534, %v1530
    %v1775 = vpack.c.b16 %v1535, %v1531
    %v1776 = vpack.c.b16 %v1540, %v1536
    %v1777 = vpack.c.b16 %v1541, %v1537
    %v1778 = vpack.c.b16 %v1542, %v1538
    %v1779 = vpack.c.b16 %v1543, %v1539
    %v1780 = vpack.c.b16 %v1548, %v1544
    %v1781 = vpack.c.b16 %v1549, %v1545
    %v1782 = vpack.c.b16 %v1550, %v1546
    %v1783 = vpack.c.b16 %v1551, %v1547
    %v1784 = vpack.c.b16 %v1556, %v1552
    %v1785 = vpack.c.b16 %v1557, %v1553
    %v1786 = vpack.c.b16 %v1558, %v1554
    %v1787 = vpack.c.b16 %v1559, %v1555
    %v1788 = vpack.c.b16 %v1564, %v1560
    %v1789 = vpack.c.b16 %v1565, %v1561
    %v1790 = vpack.c.b16 %v1566, %v1562
    %v1791 = vpack.c.b16 %v1567, %v1563
    %v1792 = vpack.c.b16 %v1572, %v1568
    %v1793 = vpack.c.b16 %v1573, %v1569
    %v1794 = vpack.c.b16 %v1574, %v1570
    %v1795 = vpack.c.b16 %v1575, %v1571
    %v1796 = vpack.c.b16 %v1580, %v1576
    %v1797 = vpack.c.b16 %v1581, %v1577
    %v1798 = vpack.c.b16 %v1582, %v1578
    %v1799 = vpack.c.b16 %v1583, %v1579
    %v1800 = vpack.c.b16 %v1588, %v1584
    %v1801 = vpack.c.b16 %v1589, %v1585
    %v1802 = vpack.c.b16 %v1590, %v1586
    %v1803 = vpack.c.b16 %v1591, %v1587
    %v1804 = vpack.c.b16 %v1596, %v1592
    %v1805 = vpack.c.b16 %v1597, %v1593
    %v1806 = vpack.c.b16 %v1598, %v1594
    %v1807 = vpack.c.b16 %v1599, %v1595
    %v1808 = vpack.c.b16 %v1604, %v1600
    %v1809 = vpack.c.b16 %v1605, %v1601
    %v1810 = vpack.c.b16 %v1606, %v1602
    %v1811 = vpack.c.b16 %v1607, %v1603
    %v1812 = vpack.c.b16 %v1612, %v1608
    %v1813 = vpack.c.b16 %v1613, %v1609
    %v1814 = vpack.c.b16 %v1614, %v1610
    %v1815 = vpack.c.b16 %v1615, %v1611
    %v1816 = vpack.c.b16 %v1620, %v1616
    %v1817 = vpack.c.b16 %v1621, %v1617
    %v1818 = vpack.c.b16 %v1622, %v1618
    %v1819 = vpack.c.b16 %v1623, %v1619
    %v1820 = vpack.c.b16 %v1628, %v1624
    %v1821 = vpack.c.b16 %v1629, %v1625
    %v1822 = vpack.c.b16 %v1630, %v1626
    %v1823 = vpack.c.b16 %v1631, %v1627
    %v1824 = vpack.c.b16 %v1636, %v1632
    %v1825 = vpack.c.b16 %v1637, %v1633
    %v1826 = vpack.c.b16 %v1638, %v1634
    %v1827 = vpack.c.b16 %v1639, %v1635
    %v1828 = vpack.c.b16 %v1644, %v1640
    %v1829 = vpack.c.b16 %v1645, %v1641
    %v1830 = vpack.c.b16 %v1646, %v1642
    %v1831 = vpack.c.b16 %v1647, %v1643
    %v1832 = vpack.c.b16 %v1652, %v1648
    %v1833 = vpack.c.b16 %v1653, %v1649
    %v1834 = vpack.c.b16 %v1654, %v1650
    %v1835 = vpack.c.b16 %v1655, %v1651
    %v1836 = vpack.c.b16 %v1660, %v1656
    %v1837 = vpack.c.b16 %v1661, %v1657
    %v1838 = vpack.c.b16 %v1662, %v1658
    %v1839 = vpack.c.b16 %v1663, %v1659
    %v1840 = vpack.c.b16 %v1668, %v1664
    %v1841 = vpack.c.b16 %v1669, %v1665
    %v1842 = vpack.c.b16 %v1670, %v1666
    %v1843 = vpack.c.b16 %v1671, %v1667
    %v1844 = vpack.c.b16 %v1676, %v1672
    %v1845 = vpack.c.b16 %v1677, %v1673
    %v1846 = vpack.c.b16 %v1678, %v1674
    %v1847 = vpack.c.b16 %v1679, %v1675
    %v1848 = vpack.c.b16 %v1684, %v1680
    %v1849 = vpack.c.b16 %v1685, %v1681
    %v1850 = vpack.c.b16 %v1686, %v1682
    %v1851 = vpack.c.b16 %v1687, %v1683
    %v1852 = vpack.c.b16 %v1692, %v1688
    %v1853 = vpack.c.b16 %v1693, %v1689
    %v1854 = vpack.c.b16 %v1694, %v1690
    %v1855 = vpack.c.b16 %v1695, %v1691
    %v1856 = vpack.c.b16 %v1700, %v1696
    %v1857 = vpack.c.b16 %v1701, %v1697
    %v1858 = vpack.c.b16 %v1702, %v1698
    %v1859 = vpack.c.b16 %v1703, %v1699
    %v1860 = vpack.c.b16 %v1708, %v1704
    %v1861 = vpack.c.b16 %v1709, %v1705
    %v1862 = vpack.c.b16 %v1710, %v1706
    %v1863 = vpack.c.b16 %v1711, %v1707
    %v1864 = vpack.c.b16 %v1716, %v1712
    %v1865 = vpack.c.b16 %v1717, %v1713
    %v1866 = vpack.c.b16 %v1718, %v1714
    %v1867 = vpack.c.b16 %v1719, %v1715
    %v1868 = vpack.c.b16 %v1724, %v1720
    %v1869 = vpack.c.b16 %v1725, %v1721
    %v1870 = vpack.c.b16 %v1726, %v1722
    %v1871 = vpack.c.b16 %v1727, %v1723
    %v1872 = vpack.c.b16 %v1732, %v1728
    %v1873 = vpack.c.b16 %v1733, %v1729
    %v1874 = vpack.c.b16 %v1734, %v1730
    %v1875 = vpack.c.b16 %v1735, %v1731
    %v1876 = vpack.c.b16 %v1740, %v1736
    %v1877 = vpack.c.b16 %v1741, %v1737
    %v1878 = vpack.c.b16 %v1742, %v1738
    %v1879 = vpack.c.b16 %v1743, %v1739
    %v1880 = vpack.c.b16 %v1748, %v1744
    %v1881 = vpack.c.b16 %v1749, %v1745
    %v1882 = vpack.c.b16 %v1750, %v1746
    %v1883 = vpack.c.b16 %v1751, %v1747
    %v1884 = vpack.c.b16 %v1756, %v1752
    %v1885 = vpack.c.b16 %v1757, %v1753
    %v1886 = vpack.c.b16 %v1758, %v1754
    %v1887 = vpack.c.b16 %v1759, %v1755
    %2016 = vmatprep.subr.bf16.mxu0 %v1789
    %2017 = vmatpush1.bf16.msra.mxu0 %v1788
    %2018 = vmatprep.subr.bf16.mxu0 %v1785
    %2019 = vmatpush1.bf16.msra.mxu0 %v1784
    %2020 = vmatprep.subr.bf16.mxu0 %v1781
    %2021 = vmatpush1.bf16.msra.mxu0 %v1780
    %2022 = vmatprep.subr.bf16.mxu0 %v1777
    %2023 = vmatpush1.bf16.msra.mxu0 %v1776
    %2024 = vmatprep.subr.bf16.mxu0 %v1773
    %2025 = vmatpush1.bf16.msra.mxu0 %v1772
    %2026 = vmatprep.subr.bf16.mxu0 %v1769
    %2027 = vmatpush1.bf16.msra.mxu0 %v1768
    %2028 = vmatprep.subr.bf16.mxu0 %v1765
    %2029 = vmatpush1.bf16.msra.mxu0 %v1764
    %2030 = vmatprep.subr.bf16.mxu0 %v1761
    %2031 = vmatpush1.bf16.msra.mxu0 %v1760
    %2032 = vmatprep.subr.bf16.mxu0 %v1821
    %2033 = vmatpush2.bf16.msra.mxu0 %v1820
    %2034 = vmatprep.subr.bf16.mxu0 %v1817
    %2035 = vmatpush2.bf16.msra.mxu0 %v1816
    %2036 = vmatprep.subr.bf16.mxu0 %v1813
    %2037 = vmatpush2.bf16.msra.mxu0 %v1812
    %2038 = vmatprep.subr.bf16.mxu0 %v1809
    %2039 = vmatpush2.bf16.msra.mxu0 %v1808
    %2040 = vmatprep.subr.bf16.mxu0 %v1805
    %2041 = vmatpush2.bf16.msra.mxu0 %v1804
    %2042 = vmatprep.subr.bf16.mxu0 %v1801
    %2043 = vmatpush2.bf16.msra.mxu0 %v1800
    %2044 = vmatprep.subr.bf16.mxu0 %v1797
    %2045 = vmatpush2.bf16.msra.mxu0 %v1796
    %2046 = vmatprep.subr.bf16.mxu0 %v1793
    %2047 = vmatpush2.bf16.msra.mxu0 %v1792
    %2048 = vmatprep.mubr.bf16.mxu0 %v1222
    %2049 = vmatmul.mubr.bf16.gmra.mxu0 %v1221
    %v2050 = vpop.f32.mrf.mxu0
    %v2051 = vadd.f32 %v1359, %v2050
    %v2052 = vpop.f32.mrf.mxu0
    %v2053 = vadd.f32 %v1363, %v2052
    %v2054 = vpop.f32.mrf.mxu0
    %v2055 = vpop.f32.mrf.mxu0
    %2056 = vdwg.mxu0
    %2057 = vmatprep.subr.bf16.mxu0 %v1853
    %2058 = vmatpush1.bf16.msra.mxu0 %v1852
    %2059 = vmatprep.subr.bf16.mxu0 %v1849
    %2060 = vmatpush1.bf16.msra.mxu0 %v1848
    %2061 = vmatprep.subr.bf16.mxu0 %v1845
    %2062 = vmatpush1.bf16.msra.mxu0 %v1844
    %2063 = vmatprep.subr.bf16.mxu0 %v1841
    %2064 = vmatpush1.bf16.msra.mxu0 %v1840
    %2065 = vmatprep.subr.bf16.mxu0 %v1837
    %2066 = vmatpush1.bf16.msra.mxu0 %v1836
    %2067 = vmatprep.subr.bf16.mxu0 %v1833
    %2068 = vmatpush1.bf16.msra.mxu0 %v1832
    %2069 = vmatprep.subr.bf16.mxu0 %v1829
    %2070 = vmatpush1.bf16.msra.mxu0 %v1828
    %2071 = vmatprep.subr.bf16.mxu0 %v1825
    %2072 = vmatpush1.bf16.msra.mxu0 %v1824
    %2073 = vmatprep.subr.bf16.mxu0 %v1885
    %2074 = vmatpush2.bf16.msra.mxu0 %v1884
    %2075 = vmatprep.subr.bf16.mxu0 %v1881
    %2076 = vmatpush2.bf16.msra.mxu0 %v1880
    %2077 = vmatprep.subr.bf16.mxu0 %v1877
    %2078 = vmatpush2.bf16.msra.mxu0 %v1876
    %2079 = vmatprep.subr.bf16.mxu0 %v1873
    %2080 = vmatpush2.bf16.msra.mxu0 %v1872
    %2081 = vmatprep.subr.bf16.mxu0 %v1869
    %2082 = vmatpush2.bf16.msra.mxu0 %v1868
    %2083 = vmatprep.subr.bf16.mxu0 %v1865
    %2084 = vmatpush2.bf16.msra.mxu0 %v1864
    %2085 = vmatprep.subr.bf16.mxu0 %v1861
    %2086 = vmatpush2.bf16.msra.mxu0 %v1860
    %2087 = vmatprep.subr.bf16.mxu0 %v1857
    %2088 = vmatpush2.bf16.msra.mxu0 %v1856
    %2089 = vmatprep.mubr.bf16.mxu0 %v1224
    %2090 = vmatmul.mubr.bf16.gmra.mxu0 %v1223
    %v2091 = vpop.f32.mrf.mxu0
    %v2092 = vadd.f32 %v2051, %v2091
    %v2093 = vpop.f32.mrf.mxu0
    %v2094 = vadd.f32 %v2053, %v2093
    %v2095 = vpop.f32.mrf.mxu0
    %v2096 = vpop.f32.mrf.mxu0
    %2097 = vdwg.mxu0
    %2098 = vmatprep.subr.bf16.mxu0 %v1791
    %2099 = vmatpush1.bf16.msra.mxu0 %v1790
    %2100 = vmatprep.subr.bf16.mxu0 %v1787
    %2101 = vmatpush1.bf16.msra.mxu0 %v1786
    %2102 = vmatprep.subr.bf16.mxu0 %v1783
    %2103 = vmatpush1.bf16.msra.mxu0 %v1782
    %2104 = vmatprep.subr.bf16.mxu0 %v1779
    %2105 = vmatpush1.bf16.msra.mxu0 %v1778
    %2106 = vmatprep.subr.bf16.mxu0 %v1775
    %2107 = vmatpush1.bf16.msra.mxu0 %v1774
    %2108 = vmatprep.subr.bf16.mxu0 %v1771
    %2109 = vmatpush1.bf16.msra.mxu0 %v1770
    %2110 = vmatprep.subr.bf16.mxu0 %v1767
    %2111 = vmatpush1.bf16.msra.mxu0 %v1766
    %2112 = vmatprep.subr.bf16.mxu0 %v1763
    %2113 = vmatpush1.bf16.msra.mxu0 %v1762
    %2114 = vmatprep.subr.bf16.mxu0 %v1823
    %2115 = vmatpush2.bf16.msra.mxu0 %v1822
    %2116 = vmatprep.subr.bf16.mxu0 %v1819
    %2117 = vmatpush2.bf16.msra.mxu0 %v1818
    %2118 = vmatprep.subr.bf16.mxu0 %v1815
    %2119 = vmatpush2.bf16.msra.mxu0 %v1814
    %2120 = vmatprep.subr.bf16.mxu0 %v1811
    %2121 = vmatpush2.bf16.msra.mxu0 %v1810
    %2122 = vmatprep.subr.bf16.mxu0 %v1807
    %2123 = vmatpush2.bf16.msra.mxu0 %v1806
    %2124 = vmatprep.subr.bf16.mxu0 %v1803
    %2125 = vmatpush2.bf16.msra.mxu0 %v1802
    %2126 = vmatprep.subr.bf16.mxu0 %v1799
    %2127 = vmatpush2.bf16.msra.mxu0 %v1798
    %2128 = vmatprep.subr.bf16.mxu0 %v1795
    %2129 = vmatpush2.bf16.msra.mxu0 %v1794
    %2130 = vmatprep.mubr.bf16.mxu0 %v1222
    %2131 = vmatmul.mubr.bf16.gmra.mxu0 %v1221
    %v2132 = vpop.f32.mrf.mxu0
    %v2133 = vadd.f32 %v1367, %v2132
    %v2134 = vpop.f32.mrf.mxu0
    %v2135 = vadd.f32 %v1371, %v2134
    %v2136 = vpop.f32.mrf.mxu0
    %v2137 = vpop.f32.mrf.mxu0
    %2138 = vdwg.mxu0
    %2139 = vmatprep.subr.bf16.mxu0 %v1855
    %2140 = vmatpush1.bf16.msra.mxu0 %v1854
    %2141 = vmatprep.subr.bf16.mxu0 %v1851
    %2142 = vmatpush1.bf16.msra.mxu0 %v1850
    %2143 = vmatprep.subr.bf16.mxu0 %v1847
    %2144 = vmatpush1.bf16.msra.mxu0 %v1846
    %2145 = vmatprep.subr.bf16.mxu0 %v1843
    %2146 = vmatpush1.bf16.msra.mxu0 %v1842
    %2147 = vmatprep.subr.bf16.mxu0 %v1839
    %2148 = vmatpush1.bf16.msra.mxu0 %v1838
    %2149 = vmatprep.subr.bf16.mxu0 %v1835
    %2150 = vmatpush1.bf16.msra.mxu0 %v1834
    %2151 = vmatprep.subr.bf16.mxu0 %v1831
    %2152 = vmatpush1.bf16.msra.mxu0 %v1830
    %2153 = vmatprep.subr.bf16.mxu0 %v1827
    %2154 = vmatpush1.bf16.msra.mxu0 %v1826
    %2155 = vmatprep.subr.bf16.mxu0 %v1887
    %2156 = vmatpush2.bf16.msra.mxu0 %v1886
    %2157 = vmatprep.subr.bf16.mxu0 %v1883
    %2158 = vmatpush2.bf16.msra.mxu0 %v1882
    %2159 = vmatprep.subr.bf16.mxu0 %v1879
    %2160 = vmatpush2.bf16.msra.mxu0 %v1878
    %2161 = vmatprep.subr.bf16.mxu0 %v1875
    %2162 = vmatpush2.bf16.msra.mxu0 %v1874
    %2163 = vmatprep.subr.bf16.mxu0 %v1871
    %2164 = vmatpush2.bf16.msra.mxu0 %v1870
    %2165 = vmatprep.subr.bf16.mxu0 %v1867
    %2166 = vmatpush2.bf16.msra.mxu0 %v1866
    %2167 = vmatprep.subr.bf16.mxu0 %v1863
    %2168 = vmatpush2.bf16.msra.mxu0 %v1862
    %2169 = vmatprep.subr.bf16.mxu0 %v1859
    %2170 = vmatpush2.bf16.msra.mxu0 %v1858
    %2171 = vmatprep.mubr.bf16.mxu0 %v1224
    %2172 = vmatmul.mubr.bf16.gmra.mxu0 %v1223
    %v2173 = vpop.f32.mrf.mxu0
    %v2174 = vadd.f32 %v2133, %v2173
    %v2175 = vpop.f32.mrf.mxu0
    %v2176 = vadd.f32 %v2135, %v2175
    %v2177 = vpop.f32.mrf.mxu0
    %v2178 = vpop.f32.mrf.mxu0
    %2179 = vdwg.mxu0
    %v2180 = vpack.c.bf16 %v2092, %v2092
    %v2181 = vpack.c.bf16 %v2094, %v2094
    %v2182 = vpack.c.bf16 %v2174, %v2174
    %v2183 = vpack.c.bf16 %v2176, %v2176
    %v2184 = vmul.bf16 %v2180, 1009007652
    %v2185 = vmul.bf16 %v2181, 1009007652
    %v2186 = vmul.bf16 %v2182, 1009007652
    %v2187 = vmul.bf16 %v2183, 1009007652
    %v2188 = vmax.bf16 %v2180, %v2184
    %v2189 = vmax.bf16 %v2181, %v2185
    %v2190 = vmax.bf16 %v2182, %v2186
    %v2191 = vmax.bf16 %v2183, %v2187
    %v2192 = vadd.bf16 %v254, %v2188
    %v2193 = vadd.bf16 %v255, %v2189
    %v2194 = vadd.bf16 %v256, %v2190
    %v2195 = vadd.bf16 %v257, %v2191
    %v2196 = vld [vmem:[#allocation6] sm:$0xff]
    %v2197 = vld [vmem:[#allocation6 + $0x8] sm:$0xff]
    %v2198 = vld [vmem:[#allocation6 + $0x10] sm:$0xff]
    %v2199 = vld [vmem:[#allocation6 + $0x18] sm:$0xff]
    %v2200 = vld [vmem:[#allocation6 + $0x20] sm:$0xff]
    %v2201 = vld [vmem:[#allocation6 + $0x28] sm:$0xff]
    %v2202 = vld [vmem:[#allocation6 + $0x30] sm:$0xff]
    %v2203 = vld [vmem:[#allocation6 + $0x38] sm:$0xff]
    %v2204 = vld [vmem:[#allocation6 + $0x40] sm:$0xff]
    %v2205 = vld [vmem:[#allocation6 + $0x48] sm:$0xff]
    %v2206 = vld [vmem:[#allocation6 + $0x50] sm:$0xff]
    %v2207 = vld [vmem:[#allocation6 + $0x58] sm:$0xff]
    %v2208 = vld [vmem:[#allocation6 + $0x60] sm:$0xff]
    %v2209 = vld [vmem:[#allocation6 + $0x68] sm:$0xff]
    %v2210 = vld [vmem:[#allocation6 + $0x70] sm:$0xff]
    %v2211 = vld [vmem:[#allocation6 + $0x78] sm:$0xff]
    %v2212 = vld [vmem:[#allocation6 + $0x80] sm:$0xff]
    %v2213 = vld [vmem:[#allocation6 + $0x88] sm:$0xff]
    %v2214 = vld [vmem:[#allocation6 + $0x90] sm:$0xff]
    %v2215 = vld [vmem:[#allocation6 + $0x98] sm:$0xff]
    %v2216 = vld [vmem:[#allocation6 + $0xa0] sm:$0xff]
    %v2217 = vld [vmem:[#allocation6 + $0xa8] sm:$0xff]
    %v2218 = vld [vmem:[#allocation6 + $0xb0] sm:$0xff]
    %v2219 = vld [vmem:[#allocation6 + $0xb8] sm:$0xff]
    %v2220 = vld [vmem:[#allocation6 + $0xc0] sm:$0xff]
    %v2221 = vld [vmem:[#allocation6 + $0xc8] sm:$0xff]
    %v2222 = vld [vmem:[#allocation6 + $0xd0] sm:$0xff]
    %v2223 = vld [vmem:[#allocation6 + $0xd8] sm:$0xff]
    %v2224 = vld [vmem:[#allocation6 + $0xe0] sm:$0xff]
    %v2225 = vld [vmem:[#allocation6 + $0xe8] sm:$0xff]
    %v2226 = vld [vmem:[#allocation6 + $0xf0] sm:$0xff]
    %v2227 = vld [vmem:[#allocation6 + $0xf8] sm:$0xff]
    %v2228 = vld [vmem:[#allocation6 + $0x100] sm:$0xff]
    %v2229 = vld [vmem:[#allocation6 + $0x108] sm:$0xff]
    %v2230 = vld [vmem:[#allocation6 + $0x110] sm:$0xff]
    %v2231 = vld [vmem:[#allocation6 + $0x118] sm:$0xff]
    %v2232 = vld [vmem:[#allocation6 + $0x120] sm:$0xff]
    %v2233 = vld [vmem:[#allocation6 + $0x128] sm:$0xff]
    %v2234 = vld [vmem:[#allocation6 + $0x130] sm:$0xff]
    %v2235 = vld [vmem:[#allocation6 + $0x138] sm:$0xff]
    %v2236 = vld [vmem:[#allocation6 + $0x140] sm:$0xff]
    %v2237 = vld [vmem:[#allocation6 + $0x148] sm:$0xff]
    %v2238 = vld [vmem:[#allocation6 + $0x150] sm:$0xff]
    %v2239 = vld [vmem:[#allocation6 + $0x158] sm:$0xff]
    %v2240 = vld [vmem:[#allocation6 + $0x160] sm:$0xff]
    %v2241 = vld [vmem:[#allocation6 + $0x168] sm:$0xff]
    %v2242 = vld [vmem:[#allocation6 + $0x170] sm:$0xff]
    %v2243 = vld [vmem:[#allocation6 + $0x178] sm:$0xff]
    %v2244 = vld [vmem:[#allocation6 + $0x180] sm:$0xff]
    %v2245 = vld [vmem:[#allocation6 + $0x188] sm:$0xff]
    %v2246 = vld [vmem:[#allocation6 + $0x190] sm:$0xff]
    %v2247 = vld [vmem:[#allocation6 + $0x198] sm:$0xff]
    %v2248 = vld [vmem:[#allocation6 + $0x1a0] sm:$0xff]
    %v2249 = vld [vmem:[#allocation6 + $0x1a8] sm:$0xff]
    %v2250 = vld [vmem:[#allocation6 + $0x1b0] sm:$0xff]
    %v2251 = vld [vmem:[#allocation6 + $0x1b8] sm:$0xff]
    %v2252 = vld [vmem:[#allocation6 + $0x1c0] sm:$0xff]
    %v2253 = vld [vmem:[#allocation6 + $0x1c8] sm:$0xff]
    %v2254 = vld [vmem:[#allocation6 + $0x1d0] sm:$0xff]
    %v2255 = vld [vmem:[#allocation6 + $0x1d8] sm:$0xff]
    %v2256 = vld [vmem:[#allocation6 + $0x1e0] sm:$0xff]
    %v2257 = vld [vmem:[#allocation6 + $0x1e8] sm:$0xff]
    %v2258 = vld [vmem:[#allocation6 + $0x1f0] sm:$0xff]
    %v2259 = vld [vmem:[#allocation6 + $0x1f8] sm:$0xff]
    %s2260 = scalar_lea.vmem [#allocation9], 3
    %v2261 = vld [vmem:[%s2260] ss:$8 sm:$0x3]
    %v2263 = vlaneseq
    %v2264 = vshrl.u32 %v2263, 7
    %v2265 = vsub.s32 0, %v2264
    %v2266 = vrot.slane %v2261, %v2265
    %v2267 = vlaneseq
    %v2268 = vshrl.u32 %v2267, 7
    %v2269 = vsub.s32 1, %v2268
    %v2270 = vrot.slane %v2261, %v2269
    %v2337 = vunpack.c.l.b16 %v2196
    %v2338 = vunpack.c.h.b16 %v2196
    %v2339 = vunpack.c.l.b16 %v2197
    %v2340 = vunpack.c.h.b16 %v2197
    %v2341 = vunpack.c.l.b16 %v2198
    %v2342 = vunpack.c.h.b16 %v2198
    %v2343 = vunpack.c.l.b16 %v2199
    %v2344 = vunpack.c.h.b16 %v2199
    %v2345 = vunpack.c.l.b16 %v2200
    %v2346 = vunpack.c.h.b16 %v2200
    %v2347 = vunpack.c.l.b16 %v2201
    %v2348 = vunpack.c.h.b16 %v2201
    %v2349 = vunpack.c.l.b16 %v2202
    %v2350 = vunpack.c.h.b16 %v2202
    %v2351 = vunpack.c.l.b16 %v2203
    %v2352 = vunpack.c.h.b16 %v2203
    %v2353 = vunpack.c.l.b16 %v2204
    %v2354 = vunpack.c.h.b16 %v2204
    %v2355 = vunpack.c.l.b16 %v2205
    %v2356 = vunpack.c.h.b16 %v2205
    %v2357 = vunpack.c.l.b16 %v2206
    %v2358 = vunpack.c.h.b16 %v2206
    %v2359 = vunpack.c.l.b16 %v2207
    %v2360 = vunpack.c.h.b16 %v2207
    %v2361 = vunpack.c.l.b16 %v2208
    %v2362 = vunpack.c.h.b16 %v2208
    %v2363 = vunpack.c.l.b16 %v2209
    %v2364 = vunpack.c.h.b16 %v2209
    %v2365 = vunpack.c.l.b16 %v2210
    %v2366 = vunpack.c.h.b16 %v2210
    %v2367 = vunpack.c.l.b16 %v2211
    %v2368 = vunpack.c.h.b16 %v2211
    %v2369 = vunpack.c.l.b16 %v2212
    %v2370 = vunpack.c.h.b16 %v2212
    %v2371 = vunpack.c.l.b16 %v2213
    %v2372 = vunpack.c.h.b16 %v2213
    %v2373 = vunpack.c.l.b16 %v2214
    %v2374 = vunpack.c.h.b16 %v2214
    %v2375 = vunpack.c.l.b16 %v2215
    %v2376 = vunpack.c.h.b16 %v2215
    %v2377 = vunpack.c.l.b16 %v2216
    %v2378 = vunpack.c.h.b16 %v2216
    %v2379 = vunpack.c.l.b16 %v2217
    %v2380 = vunpack.c.h.b16 %v2217
    %v2381 = vunpack.c.l.b16 %v2218
    %v2382 = vunpack.c.h.b16 %v2218
    %v2383 = vunpack.c.l.b16 %v2219
    %v2384 = vunpack.c.h.b16 %v2219
    %v2385 = vunpack.c.l.b16 %v2220
    %v2386 = vunpack.c.h.b16 %v2220
    %v2387 = vunpack.c.l.b16 %v2221
    %v2388 = vunpack.c.h.b16 %v2221
    %v2389 = vunpack.c.l.b16 %v2222
    %v2390 = vunpack.c.h.b16 %v2222
    %v2391 = vunpack.c.l.b16 %v2223
    %v2392 = vunpack.c.h.b16 %v2223
    %v2393 = vunpack.c.l.b16 %v2224
    %v2394 = vunpack.c.h.b16 %v2224
    %v2395 = vunpack.c.l.b16 %v2225
    %v2396 = vunpack.c.h.b16 %v2225
    %v2397 = vunpack.c.l.b16 %v2226
    %v2398 = vunpack.c.h.b16 %v2226
    %v2399 = vunpack.c.l.b16 %v2227
    %v2400 = vunpack.c.h.b16 %v2227
    %v2401 = vunpack.c.l.b16 %v2228
    %v2402 = vunpack.c.h.b16 %v2228
    %v2403 = vunpack.c.l.b16 %v2229
    %v2404 = vunpack.c.h.b16 %v2229
    %v2405 = vunpack.c.l.b16 %v2230
    %v2406 = vunpack.c.h.b16 %v2230
    %v2407 = vunpack.c.l.b16 %v2231
    %v2408 = vunpack.c.h.b16 %v2231
    %v2409 = vunpack.c.l.b16 %v2232
    %v2410 = vunpack.c.h.b16 %v2232
    %v2411 = vunpack.c.l.b16 %v2233
    %v2412 = vunpack.c.h.b16 %v2233
    %v2413 = vunpack.c.l.b16 %v2234
    %v2414 = vunpack.c.h.b16 %v2234
    %v2415 = vunpack.c.l.b16 %v2235
    %v2416 = vunpack.c.h.b16 %v2235
    %v2417 = vunpack.c.l.b16 %v2236
    %v2418 = vunpack.c.h.b16 %v2236
    %v2419 = vunpack.c.l.b16 %v2237
    %v2420 = vunpack.c.h.b16 %v2237
    %v2421 = vunpack.c.l.b16 %v2238
    %v2422 = vunpack.c.h.b16 %v2238
    %v2423 = vunpack.c.l.b16 %v2239
    %v2424 = vunpack.c.h.b16 %v2239
    %v2425 = vunpack.c.l.b16 %v2240
    %v2426 = vunpack.c.h.b16 %v2240
    %v2427 = vunpack.c.l.b16 %v2241
    %v2428 = vunpack.c.h.b16 %v2241
    %v2429 = vunpack.c.l.b16 %v2242
    %v2430 = vunpack.c.h.b16 %v2242
    %v2431 = vunpack.c.l.b16 %v2243
    %v2432 = vunpack.c.h.b16 %v2243
    %v2433 = vunpack.c.l.b16 %v2244
    %v2434 = vunpack.c.h.b16 %v2244
    %v2435 = vunpack.c.l.b16 %v2245
    %v2436 = vunpack.c.h.b16 %v2245
    %v2437 = vunpack.c.l.b16 %v2246
    %v2438 = vunpack.c.h.b16 %v2246
    %v2439 = vunpack.c.l.b16 %v2247
    %v2440 = vunpack.c.h.b16 %v2247
    %v2441 = vunpack.c.l.b16 %v2248
    %v2442 = vunpack.c.h.b16 %v2248
    %v2443 = vunpack.c.l.b16 %v2249
    %v2444 = vunpack.c.h.b16 %v2249
    %v2445 = vunpack.c.l.b16 %v2250
    %v2446 = vunpack.c.h.b16 %v2250
    %v2447 = vunpack.c.l.b16 %v2251
    %v2448 = vunpack.c.h.b16 %v2251
    %v2449 = vunpack.c.l.b16 %v2252
    %v2450 = vunpack.c.h.b16 %v2252
    %v2451 = vunpack.c.l.b16 %v2253
    %v2452 = vunpack.c.h.b16 %v2253
    %v2453 = vunpack.c.l.b16 %v2254
    %v2454 = vunpack.c.h.b16 %v2254
    %v2455 = vunpack.c.l.b16 %v2255
    %v2456 = vunpack.c.h.b16 %v2255
    %v2457 = vunpack.c.l.b16 %v2256
    %v2458 = vunpack.c.h.b16 %v2256
    %v2459 = vunpack.c.l.b16 %v2257
    %v2460 = vunpack.c.h.b16 %v2257
    %v2461 = vunpack.c.l.b16 %v2258
    %v2462 = vunpack.c.h.b16 %v2258
    %v2463 = vunpack.c.l.b16 %v2259
    %v2464 = vunpack.c.h.b16 %v2259
    %v2465 = vpack.c.b16 %v2339, %v2337
    %v2466 = vpack.c.b16 %v2340, %v2338
    %v2467 = vpack.c.b16 %v2343, %v2341
    %v2468 = vpack.c.b16 %v2344, %v2342
    %v2469 = vpack.c.b16 %v2347, %v2345
    %v2470 = vpack.c.b16 %v2348, %v2346
    %v2471 = vpack.c.b16 %v2351, %v2349
    %v2472 = vpack.c.b16 %v2352, %v2350
    %v2473 = vpack.c.b16 %v2355, %v2353
    %v2474 = vpack.c.b16 %v2356, %v2354
    %v2475 = vpack.c.b16 %v2359, %v2357
    %v2476 = vpack.c.b16 %v2360, %v2358
    %v2477 = vpack.c.b16 %v2363, %v2361
    %v2478 = vpack.c.b16 %v2364, %v2362
    %v2479 = vpack.c.b16 %v2367, %v2365
    %v2480 = vpack.c.b16 %v2368, %v2366
    %v2481 = vpack.c.b16 %v2371, %v2369
    %v2482 = vpack.c.b16 %v2372, %v2370
    %v2483 = vpack.c.b16 %v2375, %v2373
    %v2484 = vpack.c.b16 %v2376, %v2374
    %v2485 = vpack.c.b16 %v2379, %v2377
    %v2486 = vpack.c.b16 %v2380, %v2378
    %v2487 = vpack.c.b16 %v2383, %v2381
    %v2488 = vpack.c.b16 %v2384, %v2382
    %v2489 = vpack.c.b16 %v2387, %v2385
    %v2490 = vpack.c.b16 %v2388, %v2386
    %v2491 = vpack.c.b16 %v2391, %v2389
    %v2492 = vpack.c.b16 %v2392, %v2390
    %v2493 = vpack.c.b16 %v2395, %v2393
    %v2494 = vpack.c.b16 %v2396, %v2394
    %v2495 = vpack.c.b16 %v2399, %v2397
    %v2496 = vpack.c.b16 %v2400, %v2398
    %v2497 = vpack.c.b16 %v2403, %v2401
    %v2498 = vpack.c.b16 %v2404, %v2402
    %v2499 = vpack.c.b16 %v2407, %v2405
    %v2500 = vpack.c.b16 %v2408, %v2406
    %v2501 = vpack.c.b16 %v2411, %v2409
    %v2502 = vpack.c.b16 %v2412, %v2410
    %v2503 = vpack.c.b16 %v2415, %v2413
    %v2504 = vpack.c.b16 %v2416, %v2414
    %v2505 = vpack.c.b16 %v2419, %v2417
    %v2506 = vpack.c.b16 %v2420, %v2418
    %v2507 = vpack.c.b16 %v2423, %v2421
    %v2508 = vpack.c.b16 %v2424, %v2422
    %v2509 = vpack.c.b16 %v2427, %v2425
    %v2510 = vpack.c.b16 %v2428, %v2426
    %v2511 = vpack.c.b16 %v2431, %v2429
    %v2512 = vpack.c.b16 %v2432, %v2430
    %v2513 = vpack.c.b16 %v2435, %v2433
    %v2514 = vpack.c.b16 %v2436, %v2434
    %v2515 = vpack.c.b16 %v2439, %v2437
    %v2516 = vpack.c.b16 %v2440, %v2438
    %v2517 = vpack.c.b16 %v2443, %v2441
    %v2518 = vpack.c.b16 %v2444, %v2442
    %v2519 = vpack.c.b16 %v2447, %v2445
    %v2520 = vpack.c.b16 %v2448, %v2446
    %v2521 = vpack.c.b16 %v2451, %v2449
    %v2522 = vpack.c.b16 %v2452, %v2450
    %v2523 = vpack.c.b16 %v2455, %v2453
    %v2524 = vpack.c.b16 %v2456, %v2454
    %v2525 = vpack.c.b16 %v2459, %v2457
    %v2526 = vpack.c.b16 %v2460, %v2458
    %v2527 = vpack.c.b16 %v2463, %v2461
    %v2528 = vpack.c.b16 %v2464, %v2462
    %2593 = vmatprep.subr.bf16.mxu0 %v2480
    %2594 = vmatpush1.bf16.msra.mxu0 %v2479
    %2595 = vmatprep.subr.bf16.mxu0 %v2478
    %2596 = vmatpush1.bf16.msra.mxu0 %v2477
    %2597 = vmatprep.subr.bf16.mxu0 %v2476
    %2598 = vmatpush1.bf16.msra.mxu0 %v2475
    %2599 = vmatprep.subr.bf16.mxu0 %v2474
    %2600 = vmatpush1.bf16.msra.mxu0 %v2473
    %2601 = vmatprep.subr.bf16.mxu0 %v2472
    %2602 = vmatpush1.bf16.msra.mxu0 %v2471
    %2603 = vmatprep.subr.bf16.mxu0 %v2470
    %2604 = vmatpush1.bf16.msra.mxu0 %v2469
    %2605 = vmatprep.subr.bf16.mxu0 %v2468
    %2606 = vmatpush1.bf16.msra.mxu0 %v2467
    %2607 = vmatprep.subr.bf16.mxu0 %v2466
    %2608 = vmatpush1.bf16.msra.mxu0 %v2465
    %2609 = vmatprep.subr.bf16.mxu0 %v2496
    %2610 = vmatpush2.bf16.msra.mxu0 %v2495
    %2611 = vmatprep.subr.bf16.mxu0 %v2494
    %2612 = vmatpush2.bf16.msra.mxu0 %v2493
    %2613 = vmatprep.subr.bf16.mxu0 %v2492
    %2614 = vmatpush2.bf16.msra.mxu0 %v2491
    %2615 = vmatprep.subr.bf16.mxu0 %v2490
    %2616 = vmatpush2.bf16.msra.mxu0 %v2489
    %2617 = vmatprep.subr.bf16.mxu0 %v2488
    %2618 = vmatpush2.bf16.msra.mxu0 %v2487
    %2619 = vmatprep.subr.bf16.mxu0 %v2486
    %2620 = vmatpush2.bf16.msra.mxu0 %v2485
    %2621 = vmatprep.subr.bf16.mxu0 %v2484
    %2622 = vmatpush2.bf16.msra.mxu0 %v2483
    %2623 = vmatprep.subr.bf16.mxu0 %v2482
    %2624 = vmatpush2.bf16.msra.mxu0 %v2481
    %2625 = vmatprep.mubr.bf16.mxu0 %v2193
    %2626 = vmatmul.mubr.bf16.gmra.mxu0 %v2192
    %v2627 = vpop.f32.mrf.mxu0
    %v2628 = vadd.f32 %v2266, %v2627
    %v2629 = vpop.f32.mrf.mxu0
    %v2630 = vadd.f32 %v2270, %v2629
    %v2631 = vpop.f32.mrf.mxu0
    %v2632 = vpop.f32.mrf.mxu0
    %2633 = vdwg.mxu0
    %2634 = vmatprep.subr.bf16.mxu0 %v2512
    %2635 = vmatpush1.bf16.msra.mxu0 %v2511
    %2636 = vmatprep.subr.bf16.mxu0 %v2510
    %2637 = vmatpush1.bf16.msra.mxu0 %v2509
    %2638 = vmatprep.subr.bf16.mxu0 %v2508
    %2639 = vmatpush1.bf16.msra.mxu0 %v2507
    %2640 = vmatprep.subr.bf16.mxu0 %v2506
    %2641 = vmatpush1.bf16.msra.mxu0 %v2505
    %2642 = vmatprep.subr.bf16.mxu0 %v2504
    %2643 = vmatpush1.bf16.msra.mxu0 %v2503
    %2644 = vmatprep.subr.bf16.mxu0 %v2502
    %2645 = vmatpush1.bf16.msra.mxu0 %v2501
    %2646 = vmatprep.subr.bf16.mxu0 %v2500
    %2647 = vmatpush1.bf16.msra.mxu0 %v2499
    %2648 = vmatprep.subr.bf16.mxu0 %v2498
    %2649 = vmatpush1.bf16.msra.mxu0 %v2497
    %2650 = vmatprep.subr.bf16.mxu0 %v2528
    %2651 = vmatpush2.bf16.msra.mxu0 %v2527
    %2652 = vmatprep.subr.bf16.mxu0 %v2526
    %2653 = vmatpush2.bf16.msra.mxu0 %v2525
    %2654 = vmatprep.subr.bf16.mxu0 %v2524
    %2655 = vmatpush2.bf16.msra.mxu0 %v2523
    %2656 = vmatprep.subr.bf16.mxu0 %v2522
    %2657 = vmatpush2.bf16.msra.mxu0 %v2521
    %2658 = vmatprep.subr.bf16.mxu0 %v2520
    %2659 = vmatpush2.bf16.msra.mxu0 %v2519
    %2660 = vmatprep.subr.bf16.mxu0 %v2518
    %2661 = vmatpush2.bf16.msra.mxu0 %v2517
    %2662 = vmatprep.subr.bf16.mxu0 %v2516
    %2663 = vmatpush2.bf16.msra.mxu0 %v2515
    %2664 = vmatprep.subr.bf16.mxu0 %v2514
    %2665 = vmatpush2.bf16.msra.mxu0 %v2513
    %2666 = vmatprep.mubr.bf16.mxu0 %v2195
    %2667 = vmatmul.mubr.bf16.gmra.mxu0 %v2194
    %v2668 = vpop.f32.mrf.mxu0
    %v2669 = vadd.f32 %v2628, %v2668
    %v2670 = vpop.f32.mrf.mxu0
    %v2671 = vadd.f32 %v2630, %v2670
    %v2672 = vpop.f32.mrf.mxu0
    %v2673 = vpop.f32.mrf.mxu0
    %2674 = vdwg.mxu0
    %v2675 = vpack.c.bf16 %v2669, %v2669
    %v2676 = vpack.c.bf16 %v2671, %v2671
    %v2677 = vmul.bf16 %v2675, 1009007652
    %v2678 = vmul.bf16 %v2676, 1009007652
    %v2679 = vmax.bf16 %v2675, %v2677
    %v2680 = vmax.bf16 %v2676, %v2678
    %v2681 = vld [vmem:[#allocation6 + $0x200] sm:$0xff]
    %v2682 = vld [vmem:[#allocation6 + $0x208] sm:$0xff]
    %v2683 = vld [vmem:[#allocation6 + $0x210] sm:$0xff]
    %v2684 = vld [vmem:[#allocation6 + $0x218] sm:$0xff]
    %v2685 = vld [vmem:[#allocation6 + $0x220] sm:$0xff]
    %v2686 = vld [vmem:[#allocation6 + $0x228] sm:$0xff]
    %v2687 = vld [vmem:[#allocation6 + $0x230] sm:$0xff]
    %v2688 = vld [vmem:[#allocation6 + $0x238] sm:$0xff]
    %v2689 = vld [vmem:[#allocation6 + $0x240] sm:$0xff]
    %v2690 = vld [vmem:[#allocation6 + $0x248] sm:$0xff]
    %v2691 = vld [vmem:[#allocation6 + $0x250] sm:$0xff]
    %v2692 = vld [vmem:[#allocation6 + $0x258] sm:$0xff]
    %v2693 = vld [vmem:[#allocation6 + $0x260] sm:$0xff]
    %v2694 = vld [vmem:[#allocation6 + $0x268] sm:$0xff]
    %v2695 = vld [vmem:[#allocation6 + $0x270] sm:$0xff]
    %v2696 = vld [vmem:[#allocation6 + $0x278] sm:$0xff]
    %v2697 = vld [vmem:[#allocation6 + $0x280] sm:$0xff]
    %v2698 = vld [vmem:[#allocation6 + $0x288] sm:$0xff]
    %v2699 = vld [vmem:[#allocation6 + $0x290] sm:$0xff]
    %v2700 = vld [vmem:[#allocation6 + $0x298] sm:$0xff]
    %v2701 = vld [vmem:[#allocation6 + $0x2a0] sm:$0xff]
    %v2702 = vld [vmem:[#allocation6 + $0x2a8] sm:$0xff]
    %v2703 = vld [vmem:[#allocation6 + $0x2b0] sm:$0xff]
    %v2704 = vld [vmem:[#allocation6 + $0x2b8] sm:$0xff]
    %v2705 = vld [vmem:[#allocation6 + $0x2c0] sm:$0xff]
    %v2706 = vld [vmem:[#allocation6 + $0x2c8] sm:$0xff]
    %v2707 = vld [vmem:[#allocation6 + $0x2d0] sm:$0xff]
    %v2708 = vld [vmem:[#allocation6 + $0x2d8] sm:$0xff]
    %v2709 = vld [vmem:[#allocation6 + $0x2e0] sm:$0xff]
    %v2710 = vld [vmem:[#allocation6 + $0x2e8] sm:$0xff]
    %v2711 = vld [vmem:[#allocation6 + $0x2f0] sm:$0xff]
    %v2712 = vld [vmem:[#allocation6 + $0x2f8] sm:$0xff]
    %s2713 = scalar_lea.vmem [#allocation9], 4
    %v2714 = vld [vmem:[%s2713] ss:$8 sm:$0x3]
    %v2716 = vlaneseq
    %v2717 = vshrl.u32 %v2716, 7
    %v2718 = vsub.s32 0, %v2717
    %v2719 = vrot.slane %v2714, %v2718
    %v2720 = vlaneseq
    %v2721 = vshrl.u32 %v2720, 7
    %v2722 = vsub.s32 1, %v2721
    %v2723 = vrot.slane %v2714, %v2722
    %v2758 = vunpack.c.l.b16 %v2681
    %v2759 = vunpack.c.h.b16 %v2681
    %v2760 = vunpack.c.l.b16 %v2682
    %v2761 = vunpack.c.h.b16 %v2682
    %v2762 = vunpack.c.l.b16 %v2683
    %v2763 = vunpack.c.h.b16 %v2683
    %v2764 = vunpack.c.l.b16 %v2684
    %v2765 = vunpack.c.h.b16 %v2684
    %v2766 = vunpack.c.l.b16 %v2685
    %v2767 = vunpack.c.h.b16 %v2685
    %v2768 = vunpack.c.l.b16 %v2686
    %v2769 = vunpack.c.h.b16 %v2686
    %v2770 = vunpack.c.l.b16 %v2687
    %v2771 = vunpack.c.h.b16 %v2687
    %v2772 = vunpack.c.l.b16 %v2688
    %v2773 = vunpack.c.h.b16 %v2688
    %v2774 = vunpack.c.l.b16 %v2689
    %v2775 = vunpack.c.h.b16 %v2689
    %v2776 = vunpack.c.l.b16 %v2690
    %v2777 = vunpack.c.h.b16 %v2690
    %v2778 = vunpack.c.l.b16 %v2691
    %v2779 = vunpack.c.h.b16 %v2691
    %v2780 = vunpack.c.l.b16 %v2692
    %v2781 = vunpack.c.h.b16 %v2692
    %v2782 = vunpack.c.l.b16 %v2693
    %v2783 = vunpack.c.h.b16 %v2693
    %v2784 = vunpack.c.l.b16 %v2694
    %v2785 = vunpack.c.h.b16 %v2694
    %v2786 = vunpack.c.l.b16 %v2695
    %v2787 = vunpack.c.h.b16 %v2695
    %v2788 = vunpack.c.l.b16 %v2696
    %v2789 = vunpack.c.h.b16 %v2696
    %v2790 = vunpack.c.l.b16 %v2697
    %v2791 = vunpack.c.h.b16 %v2697
    %v2792 = vunpack.c.l.b16 %v2698
    %v2793 = vunpack.c.h.b16 %v2698
    %v2794 = vunpack.c.l.b16 %v2699
    %v2795 = vunpack.c.h.b16 %v2699
    %v2796 = vunpack.c.l.b16 %v2700
    %v2797 = vunpack.c.h.b16 %v2700
    %v2798 = vunpack.c.l.b16 %v2701
    %v2799 = vunpack.c.h.b16 %v2701
    %v2800 = vunpack.c.l.b16 %v2702
    %v2801 = vunpack.c.h.b16 %v2702
    %v2802 = vunpack.c.l.b16 %v2703
    %v2803 = vunpack.c.h.b16 %v2703
    %v2804 = vunpack.c.l.b16 %v2704
    %v2805 = vunpack.c.h.b16 %v2704
    %v2806 = vunpack.c.l.b16 %v2705
    %v2807 = vunpack.c.h.b16 %v2705
    %v2808 = vunpack.c.l.b16 %v2706
    %v2809 = vunpack.c.h.b16 %v2706
    %v2810 = vunpack.c.l.b16 %v2707
    %v2811 = vunpack.c.h.b16 %v2707
    %v2812 = vunpack.c.l.b16 %v2708
    %v2813 = vunpack.c.h.b16 %v2708
    %v2814 = vunpack.c.l.b16 %v2709
    %v2815 = vunpack.c.h.b16 %v2709
    %v2816 = vunpack.c.l.b16 %v2710
    %v2817 = vunpack.c.h.b16 %v2710
    %v2818 = vunpack.c.l.b16 %v2711
    %v2819 = vunpack.c.h.b16 %v2711
    %v2820 = vunpack.c.l.b16 %v2712
    %v2821 = vunpack.c.h.b16 %v2712
    %v2822 = vpack.c.b16 %v2760, %v2758
    %v2823 = vpack.c.b16 %v2761, %v2759
    %v2824 = vpack.c.b16 %v2764, %v2762
    %v2825 = vpack.c.b16 %v2765, %v2763
    %v2826 = vpack.c.b16 %v2768, %v2766
    %v2827 = vpack.c.b16 %v2769, %v2767
    %v2828 = vpack.c.b16 %v2772, %v2770
    %v2829 = vpack.c.b16 %v2773, %v2771
    %v2830 = vpack.c.b16 %v2776, %v2774
    %v2831 = vpack.c.b16 %v2777, %v2775
    %v2832 = vpack.c.b16 %v2780, %v2778
    %v2833 = vpack.c.b16 %v2781, %v2779
    %v2834 = vpack.c.b16 %v2784, %v2782
    %v2835 = vpack.c.b16 %v2785, %v2783
    %v2836 = vpack.c.b16 %v2788, %v2786
    %v2837 = vpack.c.b16 %v2789, %v2787
    %v2838 = vpack.c.b16 %v2792, %v2790
    %v2839 = vpack.c.b16 %v2793, %v2791
    %v2840 = vpack.c.b16 %v2796, %v2794
    %v2841 = vpack.c.b16 %v2797, %v2795
    %v2842 = vpack.c.b16 %v2800, %v2798
    %v2843 = vpack.c.b16 %v2801, %v2799
    %v2844 = vpack.c.b16 %v2804, %v2802
    %v2845 = vpack.c.b16 %v2805, %v2803
    %v2846 = vpack.c.b16 %v2808, %v2806
    %v2847 = vpack.c.b16 %v2809, %v2807
    %v2848 = vpack.c.b16 %v2812, %v2810
    %v2849 = vpack.c.b16 %v2813, %v2811
    %v2850 = vpack.c.b16 %v2816, %v2814
    %v2851 = vpack.c.b16 %v2817, %v2815
    %v2852 = vpack.c.b16 %v2820, %v2818
    %v2853 = vpack.c.b16 %v2821, %v2819
    %2886 = vmatprep.subr.bf16.mxu0 %v2837
    %2887 = vmatpush1.bf16.msra.mxu0 %v2836
    %2888 = vmatprep.subr.bf16.mxu0 %v2835
    %2889 = vmatpush1.bf16.msra.mxu0 %v2834
    %2890 = vmatprep.subr.bf16.mxu0 %v2833
    %2891 = vmatpush1.bf16.msra.mxu0 %v2832
    %2892 = vmatprep.subr.bf16.mxu0 %v2831
    %2893 = vmatpush1.bf16.msra.mxu0 %v2830
    %2894 = vmatprep.subr.bf16.mxu0 %v2829
    %2895 = vmatpush1.bf16.msra.mxu0 %v2828
    %2896 = vmatprep.subr.bf16.mxu0 %v2827
    %2897 = vmatpush1.bf16.msra.mxu0 %v2826
    %2898 = vmatprep.subr.bf16.mxu0 %v2825
    %2899 = vmatpush1.bf16.msra.mxu0 %v2824
    %2900 = vmatprep.subr.bf16.mxu0 %v2823
    %2901 = vmatpush1.bf16.msra.mxu0 %v2822
    %2902 = vmatprep.subr.bf16.mxu0 %v2853
    %2903 = vmatpush2.bf16.msra.mxu0 %v2852
    %2904 = vmatprep.subr.bf16.mxu0 %v2851
    %2905 = vmatpush2.bf16.msra.mxu0 %v2850
    %2906 = vmatprep.subr.bf16.mxu0 %v2849
    %2907 = vmatpush2.bf16.msra.mxu0 %v2848
    %2908 = vmatprep.subr.bf16.mxu0 %v2847
    %2909 = vmatpush2.bf16.msra.mxu0 %v2846
    %2910 = vmatprep.subr.bf16.mxu0 %v2845
    %2911 = vmatpush2.bf16.msra.mxu0 %v2844
    %2912 = vmatprep.subr.bf16.mxu0 %v2843
    %2913 = vmatpush2.bf16.msra.mxu0 %v2842
    %2914 = vmatprep.subr.bf16.mxu0 %v2841
    %2915 = vmatpush2.bf16.msra.mxu0 %v2840
    %2916 = vmatprep.subr.bf16.mxu0 %v2839
    %2917 = vmatpush2.bf16.msra.mxu0 %v2838
    %2918 = vmatprep.mubr.bf16.mxu0 %v2680
    %2919 = vmatmul.mubr.bf16.gmra.mxu0 %v2679
    %v2920 = vpop.f32.mrf.mxu0
    %v2921 = vadd.f32 %v2719, %v2920
    %v2922 = vpop.f32.mrf.mxu0
    %v2923 = vadd.f32 %v2723, %v2922
    %v2924 = vpop.f32.mrf.mxu0
    %v2925 = vpop.f32.mrf.mxu0
    %2926 = vdwg.mxu0
    %v2927 = vpack.c.bf16 %v2921, %v2921
    %v2928 = vpack.c.bf16 %v2923, %v2923
    %v2929 = vmul.bf16 %v2927, 1009007652
    %v2930 = vmul.bf16 %v2928, 1009007652
    %v2931 = vmax.bf16 %v2927, %v2929
    %v2932 = vmax.bf16 %v2928, %v2930
    %v2933 = vld [vmem:[#allocation6 + $0x300] sm:$0xff]
    %v2934 = vld [vmem:[#allocation6 + $0x308] sm:$0xff]
    %v2935 = vld [vmem:[#allocation6 + $0x310] sm:$0xff]
    %v2936 = vld [vmem:[#allocation6 + $0x318] sm:$0xff]
    %v2937 = vld [vmem:[#allocation6 + $0x320] sm:$0xff]
    %v2938 = vld [vmem:[#allocation6 + $0x328] sm:$0xff]
    %v2939 = vld [vmem:[#allocation6 + $0x330] sm:$0xff]
    %v2940 = vld [vmem:[#allocation6 + $0x338] sm:$0xff]
    %v2941 = vld [vmem:[#allocation6 + $0x340] sm:$0xff]
    %v2942 = vld [vmem:[#allocation6 + $0x348] sm:$0xff]
    %v2943 = vld [vmem:[#allocation6 + $0x350] sm:$0xff]
    %v2944 = vld [vmem:[#allocation6 + $0x358] sm:$0xff]
    %v2945 = vld [vmem:[#allocation6 + $0x360] sm:$0xff]
    %v2946 = vld [vmem:[#allocation6 + $0x368] sm:$0xff]
    %v2947 = vld [vmem:[#allocation6 + $0x370] sm:$0xff]
    %v2948 = vld [vmem:[#allocation6 + $0x378] sm:$0xff]
    %v2949 = vld [vmem:[#allocation6 + $0x380] sm:$0xff]
    %v2950 = vld [vmem:[#allocation6 + $0x388] sm:$0xff]
    %v2951 = vld [vmem:[#allocation6 + $0x390] sm:$0xff]
    %v2952 = vld [vmem:[#allocation6 + $0x398] sm:$0xff]
    %v2953 = vld [vmem:[#allocation6 + $0x3a0] sm:$0xff]
    %v2954 = vld [vmem:[#allocation6 + $0x3a8] sm:$0xff]
    %v2955 = vld [vmem:[#allocation6 + $0x3b0] sm:$0xff]
    %v2956 = vld [vmem:[#allocation6 + $0x3b8] sm:$0xff]
    %v2957 = vld [vmem:[#allocation6 + $0x3c0] sm:$0xff]
    %v2958 = vld [vmem:[#allocation6 + $0x3c8] sm:$0xff]
    %v2959 = vld [vmem:[#allocation6 + $0x3d0] sm:$0xff]
    %v2960 = vld [vmem:[#allocation6 + $0x3d8] sm:$0xff]
    %v2961 = vld [vmem:[#allocation6 + $0x3e0] sm:$0xff]
    %v2962 = vld [vmem:[#allocation6 + $0x3e8] sm:$0xff]
    %v2963 = vld [vmem:[#allocation6 + $0x3f0] sm:$0xff]
    %v2964 = vld [vmem:[#allocation6 + $0x3f8] sm:$0xff]
    %s2965 = scalar_lea.vmem [#allocation9], 5
    %v2966 = vld [vmem:[%s2965] ss:$8 sm:$0x3]
    %v2968 = vlaneseq
    %v2969 = vshrl.u32 %v2968, 7
    %v2970 = vsub.s32 0, %v2969
    %v2971 = vrot.slane %v2966, %v2970
    %v2972 = vlaneseq
    %v2973 = vshrl.u32 %v2972, 7
    %v2974 = vsub.s32 1, %v2973
    %v2975 = vrot.slane %v2966, %v2974
    %v3010 = vunpack.c.l.b16 %v2933
    %v3011 = vunpack.c.h.b16 %v2933
    %v3012 = vunpack.c.l.b16 %v2934
    %v3013 = vunpack.c.h.b16 %v2934
    %v3014 = vunpack.c.l.b16 %v2935
    %v3015 = vunpack.c.h.b16 %v2935
    %v3016 = vunpack.c.l.b16 %v2936
    %v3017 = vunpack.c.h.b16 %v2936
    %v3018 = vunpack.c.l.b16 %v2937
    %v3019 = vunpack.c.h.b16 %v2937
    %v3020 = vunpack.c.l.b16 %v2938
    %v3021 = vunpack.c.h.b16 %v2938
    %v3022 = vunpack.c.l.b16 %v2939
    %v3023 = vunpack.c.h.b16 %v2939
    %v3024 = vunpack.c.l.b16 %v2940
    %v3025 = vunpack.c.h.b16 %v2940
    %v3026 = vunpack.c.l.b16 %v2941
    %v3027 = vunpack.c.h.b16 %v2941
    %v3028 = vunpack.c.l.b16 %v2942
    %v3029 = vunpack.c.h.b16 %v2942
    %v3030 = vunpack.c.l.b16 %v2943
    %v3031 = vunpack.c.h.b16 %v2943
    %v3032 = vunpack.c.l.b16 %v2944
    %v3033 = vunpack.c.h.b16 %v2944
    %v3034 = vunpack.c.l.b16 %v2945
    %v3035 = vunpack.c.h.b16 %v2945
    %v3036 = vunpack.c.l.b16 %v2946
    %v3037 = vunpack.c.h.b16 %v2946
    %v3038 = vunpack.c.l.b16 %v2947
    %v3039 = vunpack.c.h.b16 %v2947
    %v3040 = vunpack.c.l.b16 %v2948
    %v3041 = vunpack.c.h.b16 %v2948
    %v3042 = vunpack.c.l.b16 %v2949
    %v3043 = vunpack.c.h.b16 %v2949
    %v3044 = vunpack.c.l.b16 %v2950
    %v3045 = vunpack.c.h.b16 %v2950
    %v3046 = vunpack.c.l.b16 %v2951
    %v3047 = vunpack.c.h.b16 %v2951
    %v3048 = vunpack.c.l.b16 %v2952
    %v3049 = vunpack.c.h.b16 %v2952
    %v3050 = vunpack.c.l.b16 %v2953
    %v3051 = vunpack.c.h.b16 %v2953
    %v3052 = vunpack.c.l.b16 %v2954
    %v3053 = vunpack.c.h.b16 %v2954
    %v3054 = vunpack.c.l.b16 %v2955
    %v3055 = vunpack.c.h.b16 %v2955
    %v3056 = vunpack.c.l.b16 %v2956
    %v3057 = vunpack.c.h.b16 %v2956
    %v3058 = vunpack.c.l.b16 %v2957
    %v3059 = vunpack.c.h.b16 %v2957
    %v3060 = vunpack.c.l.b16 %v2958
    %v3061 = vunpack.c.h.b16 %v2958
    %v3062 = vunpack.c.l.b16 %v2959
    %v3063 = vunpack.c.h.b16 %v2959
    %v3064 = vunpack.c.l.b16 %v2960
    %v3065 = vunpack.c.h.b16 %v2960
    %v3066 = vunpack.c.l.b16 %v2961
    %v3067 = vunpack.c.h.b16 %v2961
    %v3068 = vunpack.c.l.b16 %v2962
    %v3069 = vunpack.c.h.b16 %v2962
    %v3070 = vunpack.c.l.b16 %v2963
    %v3071 = vunpack.c.h.b16 %v2963
    %v3072 = vunpack.c.l.b16 %v2964
    %v3073 = vunpack.c.h.b16 %v2964
    %v3074 = vpack.c.b16 %v3012, %v3010
    %v3075 = vpack.c.b16 %v3013, %v3011
    %v3076 = vpack.c.b16 %v3016, %v3014
    %v3077 = vpack.c.b16 %v3017, %v3015
    %v3078 = vpack.c.b16 %v3020, %v3018
    %v3079 = vpack.c.b16 %v3021, %v3019
    %v3080 = vpack.c.b16 %v3024, %v3022
    %v3081 = vpack.c.b16 %v3025, %v3023
    %v3082 = vpack.c.b16 %v3028, %v3026
    %v3083 = vpack.c.b16 %v3029, %v3027
    %v3084 = vpack.c.b16 %v3032, %v3030
    %v3085 = vpack.c.b16 %v3033, %v3031
    %v3086 = vpack.c.b16 %v3036, %v3034
    %v3087 = vpack.c.b16 %v3037, %v3035
    %v3088 = vpack.c.b16 %v3040, %v3038
    %v3089 = vpack.c.b16 %v3041, %v3039
    %v3090 = vpack.c.b16 %v3044, %v3042
    %v3091 = vpack.c.b16 %v3045, %v3043
    %v3092 = vpack.c.b16 %v3048, %v3046
    %v3093 = vpack.c.b16 %v3049, %v3047
    %v3094 = vpack.c.b16 %v3052, %v3050
    %v3095 = vpack.c.b16 %v3053, %v3051
    %v3096 = vpack.c.b16 %v3056, %v3054
    %v3097 = vpack.c.b16 %v3057, %v3055
    %v3098 = vpack.c.b16 %v3060, %v3058
    %v3099 = vpack.c.b16 %v3061, %v3059
    %v3100 = vpack.c.b16 %v3064, %v3062
    %v3101 = vpack.c.b16 %v3065, %v3063
    %v3102 = vpack.c.b16 %v3068, %v3066
    %v3103 = vpack.c.b16 %v3069, %v3067
    %v3104 = vpack.c.b16 %v3072, %v3070
    %v3105 = vpack.c.b16 %v3073, %v3071
    %3138 = vmatprep.subr.bf16.mxu0 %v3089
    %3139 = vmatpush1.bf16.msra.mxu0 %v3088
    %3140 = vmatprep.subr.bf16.mxu0 %v3087
    %3141 = vmatpush1.bf16.msra.mxu0 %v3086
    %3142 = vmatprep.subr.bf16.mxu0 %v3085
    %3143 = vmatpush1.bf16.msra.mxu0 %v3084
    %3144 = vmatprep.subr.bf16.mxu0 %v3083
    %3145 = vmatpush1.bf16.msra.mxu0 %v3082
    %3146 = vmatprep.subr.bf16.mxu0 %v3081
    %3147 = vmatpush1.bf16.msra.mxu0 %v3080
    %3148 = vmatprep.subr.bf16.mxu0 %v3079
    %3149 = vmatpush1.bf16.msra.mxu0 %v3078
    %3150 = vmatprep.subr.bf16.mxu0 %v3077
    %3151 = vmatpush1.bf16.msra.mxu0 %v3076
    %3152 = vmatprep.subr.bf16.mxu0 %v3075
    %3153 = vmatpush1.bf16.msra.mxu0 %v3074
    %3154 = vmatprep.subr.bf16.mxu0 %v3105
    %3155 = vmatpush2.bf16.msra.mxu0 %v3104
    %3156 = vmatprep.subr.bf16.mxu0 %v3103
    %3157 = vmatpush2.bf16.msra.mxu0 %v3102
    %3158 = vmatprep.subr.bf16.mxu0 %v3101
    %3159 = vmatpush2.bf16.msra.mxu0 %v3100
    %3160 = vmatprep.subr.bf16.mxu0 %v3099
    %3161 = vmatpush2.bf16.msra.mxu0 %v3098
    %3162 = vmatprep.subr.bf16.mxu0 %v3097
    %3163 = vmatpush2.bf16.msra.mxu0 %v3096
    %3164 = vmatprep.subr.bf16.mxu0 %v3095
    %3165 = vmatpush2.bf16.msra.mxu0 %v3094
    %3166 = vmatprep.subr.bf16.mxu0 %v3093
    %3167 = vmatpush2.bf16.msra.mxu0 %v3092
    %3168 = vmatprep.subr.bf16.mxu0 %v3091
    %3169 = vmatpush2.bf16.msra.mxu0 %v3090
    %3170 = vmatprep.mubr.bf16.mxu0 %v2932
    %3171 = vmatmul.mubr.bf16.gmra.mxu0 %v2931
    %v3172 = vpop.f32.mrf.mxu0
    %v3173 = vadd.f32 %v2971, %v3172
    %v3174 = vpop.f32.mrf.mxu0
    %v3175 = vadd.f32 %v2975, %v3174
    %v3176 = vpop.f32.mrf.mxu0
    %v3177 = vpop.f32.mrf.mxu0
    %3178 = vdwg.mxu0
    %v3179 = vpack.c.bf16 %v3173, %v3173
    %v3180 = vpack.c.bf16 %v3175, %v3175
    %v3181 = vmul.bf16 %v3179, 1009007652
    %v3182 = vmul.bf16 %v3180, 1009007652
    %v3183 = vmax.bf16 %v3179, %v3181
    %v3184 = vmax.bf16 %v3180, %v3182
    %v3185 = vadd.bf16 %v2679, %v3183
    %v3186 = vadd.bf16 %v2680, %v3184
    %v3187 = vld [vmem:[#allocation7] sm:$0xf]
    %v3188 = vld [vmem:[#allocation7 + $0x4] sm:$0xf]
    %v3189 = vld [vmem:[#allocation7 + $0x8] sm:$0xf]
    %v3190 = vld [vmem:[#allocation7 + $0xc] sm:$0xf]
    %v3191 = vld [vmem:[#allocation7 + $0x10] sm:$0xf]
    %v3192 = vld [vmem:[#allocation7 + $0x14] sm:$0xf]
    %v3193 = vld [vmem:[#allocation7 + $0x18] sm:$0xf]
    %v3194 = vld [vmem:[#allocation7 + $0x1c] sm:$0xf]
    %v3195 = vld [vmem:[#allocation7 + $0x20] sm:$0xf]
    %v3196 = vld [vmem:[#allocation7 + $0x24] sm:$0xf]
    %v3197 = vld [vmem:[#allocation7 + $0x28] sm:$0xf]
    %v3198 = vld [vmem:[#allocation7 + $0x2c] sm:$0xf]
    %v3199 = vld [vmem:[#allocation7 + $0x30] sm:$0xf]
    %v3200 = vld [vmem:[#allocation7 + $0x34] sm:$0xf]
    %v3201 = vld [vmem:[#allocation7 + $0x38] sm:$0xf]
    %v3202 = vld [vmem:[#allocation7 + $0x3c] sm:$0xf]
    %v3203 = vld [vmem:[#allocation7 + $0x40] sm:$0xf]
    %v3204 = vld [vmem:[#allocation7 + $0x44] sm:$0xf]
    %v3205 = vld [vmem:[#allocation7 + $0x48] sm:$0xf]
    %v3206 = vld [vmem:[#allocation7 + $0x4c] sm:$0xf]
    %v3207 = vld [vmem:[#allocation7 + $0x50] sm:$0xf]
    %v3208 = vld [vmem:[#allocation7 + $0x54] sm:$0xf]
    %v3209 = vld [vmem:[#allocation7 + $0x58] sm:$0xf]
    %v3210 = vld [vmem:[#allocation7 + $0x5c] sm:$0xf]
    %v3211 = vld [vmem:[#allocation7 + $0x60] sm:$0xf]
    %v3212 = vld [vmem:[#allocation7 + $0x64] sm:$0xf]
    %v3213 = vld [vmem:[#allocation7 + $0x68] sm:$0xf]
    %v3214 = vld [vmem:[#allocation7 + $0x6c] sm:$0xf]
    %v3215 = vld [vmem:[#allocation7 + $0x70] sm:$0xf]
    %v3216 = vld [vmem:[#allocation7 + $0x74] sm:$0xf]
    %v3217 = vld [vmem:[#allocation7 + $0x78] sm:$0xf]
    %v3218 = vld [vmem:[#allocation7 + $0x7c] sm:$0xf]
    %v3219 = vld [vmem:[#allocation9 + $0x6] ss:$0 sm:$0xff]
    %v3252 = vunpack.c.l.b16 %v3187
    %v3253 = vunpack.c.l.b16 %v3188
    %v3254 = vunpack.c.l.b16 %v3189
    %v3255 = vunpack.c.l.b16 %v3190
    %v3256 = vunpack.c.l.b16 %v3191
    %v3257 = vunpack.c.l.b16 %v3192
    %v3258 = vunpack.c.l.b16 %v3193
    %v3259 = vunpack.c.l.b16 %v3194
    %v3260 = vunpack.c.l.b16 %v3195
    %v3261 = vunpack.c.l.b16 %v3196
    %v3262 = vunpack.c.l.b16 %v3197
    %v3263 = vunpack.c.l.b16 %v3198
    %v3264 = vunpack.c.l.b16 %v3199
    %v3265 = vunpack.c.l.b16 %v3200
    %v3266 = vunpack.c.l.b16 %v3201
    %v3267 = vunpack.c.l.b16 %v3202
    %v3268 = vunpack.c.l.b16 %v3203
    %v3269 = vunpack.c.l.b16 %v3204
    %v3270 = vunpack.c.l.b16 %v3205
    %v3271 = vunpack.c.l.b16 %v3206
    %v3272 = vunpack.c.l.b16 %v3207
    %v3273 = vunpack.c.l.b16 %v3208
    %v3274 = vunpack.c.l.b16 %v3209
    %v3275 = vunpack.c.l.b16 %v3210
    %v3276 = vunpack.c.l.b16 %v3211
    %v3277 = vunpack.c.l.b16 %v3212
    %v3278 = vunpack.c.l.b16 %v3213
    %v3279 = vunpack.c.l.b16 %v3214
    %v3280 = vunpack.c.l.b16 %v3215
    %v3281 = vunpack.c.l.b16 %v3216
    %v3282 = vunpack.c.l.b16 %v3217
    %v3283 = vunpack.c.l.b16 %v3218
    %v3284 = vpack.c.b16 %v3253, %v3252
    %v3285 = vpack.c.b16 %v3255, %v3254
    %v3286 = vpack.c.b16 %v3257, %v3256
    %v3287 = vpack.c.b16 %v3259, %v3258
    %v3288 = vpack.c.b16 %v3261, %v3260
    %v3289 = vpack.c.b16 %v3263, %v3262
    %v3290 = vpack.c.b16 %v3265, %v3264
    %v3291 = vpack.c.b16 %v3267, %v3266
    %v3292 = vpack.c.b16 %v3269, %v3268
    %v3293 = vpack.c.b16 %v3271, %v3270
    %v3294 = vpack.c.b16 %v3273, %v3272
    %v3295 = vpack.c.b16 %v3275, %v3274
    %v3296 = vpack.c.b16 %v3277, %v3276
    %v3297 = vpack.c.b16 %v3279, %v3278
    %v3298 = vpack.c.b16 %v3281, %v3280
    %v3299 = vpack.c.b16 %v3283, %v3282
    %3316 = vmatprep.subr.bf16.mxu0 0
    %3317 = vmatpush1.bf16.msra.mxu0 %v3291
    %3318 = vmatprep.subr.bf16.mxu0 0
    %3319 = vmatpush1.bf16.msra.mxu0 %v3290
    %3320 = vmatprep.subr.bf16.mxu0 0
    %3321 = vmatpush1.bf16.msra.mxu0 %v3289
    %3322 = vmatprep.subr.bf16.mxu0 0
    %3323 = vmatpush1.bf16.msra.mxu0 %v3288
    %3324 = vmatprep.subr.bf16.mxu0 0
    %3325 = vmatpush1.bf16.msra.mxu0 %v3287
    %3326 = vmatprep.subr.bf16.mxu0 0
    %3327 = vmatpush1.bf16.msra.mxu0 %v3286
    %3328 = vmatprep.subr.bf16.mxu0 0
    %3329 = vmatpush1.bf16.msra.mxu0 %v3285
    %3330 = vmatprep.subr.bf16.mxu0 0
    %3331 = vmatpush1.bf16.msra.mxu0 %v3284
    %3332 = vmatprep.subr.bf16.mxu0 0
    %3333 = vmatpush2.bf16.msra.mxu0 %v3299
    %3334 = vmatprep.subr.bf16.mxu0 0
    %3335 = vmatpush2.bf16.msra.mxu0 %v3298
    %3336 = vmatprep.subr.bf16.mxu0 0
    %3337 = vmatpush2.bf16.msra.mxu0 %v3297
    %3338 = vmatprep.subr.bf16.mxu0 0
    %3339 = vmatpush2.bf16.msra.mxu0 %v3296
    %3340 = vmatprep.subr.bf16.mxu0 0
    %3341 = vmatpush2.bf16.msra.mxu0 %v3295
    %3342 = vmatprep.subr.bf16.mxu0 0
    %3343 = vmatpush2.bf16.msra.mxu0 %v3294
    %3344 = vmatprep.subr.bf16.mxu0 0
    %3345 = vmatpush2.bf16.msra.mxu0 %v3293
    %3346 = vmatprep.subr.bf16.mxu0 0
    %3347 = vmatpush2.bf16.msra.mxu0 %v3292
    %3348 = vmatprep.mubr.bf16.mxu0 %v3186
    %3349 = vmatmul.mubr.bf16.gmra.mxu0 %v3185
    %v3350 = vpop.f32.mrf.mxu0
    %v3351 = vadd.f32 %v3219, %v3350
    %v3352 = vpop.f32.mrf.mxu0
    %v3353 = vpop.f32.mrf.mxu0
    %v3354 = vpop.f32.mrf.mxu0
    %3355 = vdwg.mxu0
    %v3356 = vpack.c.bf16 %v3351, %v3351
    %v3357 = vmul.bf16 %v3356, 1009007652
    %v3358 = vmax.bf16 %v3356, %v3357
    %v3359 = vld [vmem:[#allocation7 + $0x80] sm:$0xf]
    %v3360 = vld [vmem:[#allocation7 + $0x84] sm:$0xf]
    %v3361 = vld [vmem:[#allocation7 + $0x88] sm:$0xf]
    %v3362 = vld [vmem:[#allocation7 + $0x8c] sm:$0xf]
    %v3363 = vld [vmem:[#allocation7 + $0x90] sm:$0xf]
    %v3364 = vld [vmem:[#allocation7 + $0x94] sm:$0xf]
    %v3365 = vld [vmem:[#allocation7 + $0x98] sm:$0xf]
    %v3366 = vld [vmem:[#allocation7 + $0x9c] sm:$0xf]
    %v3367 = vld [vmem:[#allocation7 + $0xa0] sm:$0xf]
    %v3368 = vld [vmem:[#allocation7 + $0xa4] sm:$0xf]
    %v3369 = vld [vmem:[#allocation7 + $0xa8] sm:$0xf]
    %v3370 = vld [vmem:[#allocation7 + $0xac] sm:$0xf]
    %v3371 = vld [vmem:[#allocation7 + $0xb0] sm:$0xf]
    %v3372 = vld [vmem:[#allocation7 + $0xb4] sm:$0xf]
    %v3373 = vld [vmem:[#allocation7 + $0xb8] sm:$0xf]
    %v3374 = vld [vmem:[#allocation7 + $0xbc] sm:$0xf]
    %v3375 = vld [vmem:[#allocation9 + $0x7] ss:$0 sm:$0xff]
    %v3392 = vunpack.c.l.b16 %v3359
    %v3393 = vunpack.c.l.b16 %v3360
    %v3394 = vunpack.c.l.b16 %v3361
    %v3395 = vunpack.c.l.b16 %v3362
    %v3396 = vunpack.c.l.b16 %v3363
    %v3397 = vunpack.c.l.b16 %v3364
    %v3398 = vunpack.c.l.b16 %v3365
    %v3399 = vunpack.c.l.b16 %v3366
    %v3400 = vunpack.c.l.b16 %v3367
    %v3401 = vunpack.c.l.b16 %v3368
    %v3402 = vunpack.c.l.b16 %v3369
    %v3403 = vunpack.c.l.b16 %v3370
    %v3404 = vunpack.c.l.b16 %v3371
    %v3405 = vunpack.c.l.b16 %v3372
    %v3406 = vunpack.c.l.b16 %v3373
    %v3407 = vunpack.c.l.b16 %v3374
    %v3408 = vpack.c.b16 %v3393, %v3392
    %v3409 = vpack.c.b16 %v3395, %v3394
    %v3410 = vpack.c.b16 %v3397, %v3396
    %v3411 = vpack.c.b16 %v3399, %v3398
    %v3412 = vpack.c.b16 %v3401, %v3400
    %v3413 = vpack.c.b16 %v3403, %v3402
    %v3414 = vpack.c.b16 %v3405, %v3404
    %v3415 = vpack.c.b16 %v3407, %v3406
    %3424 = vmatprep.subr.bf16.mxu0 0
    %3425 = vmatpush1.bf16.msra.mxu0 %v3415
    %3426 = vmatprep.subr.bf16.mxu0 0
    %3427 = vmatpush1.bf16.msra.mxu0 %v3414
    %3428 = vmatprep.subr.bf16.mxu0 0
    %3429 = vmatpush1.bf16.msra.mxu0 %v3413
    %3430 = vmatprep.subr.bf16.mxu0 0
    %3431 = vmatpush1.bf16.msra.mxu0 %v3412
    %3432 = vmatprep.subr.bf16.mxu0 0
    %3433 = vmatpush1.bf16.msra.mxu0 %v3411
    %3434 = vmatprep.subr.bf16.mxu0 0
    %3435 = vmatpush1.bf16.msra.mxu0 %v3410
    %3436 = vmatprep.subr.bf16.mxu0 0
    %3437 = vmatpush1.bf16.msra.mxu0 %v3409
    %3438 = vmatprep.subr.bf16.mxu0 0
    %3439 = vmatpush1.bf16.msra.mxu0 %v3408
    %3440 = vmatprep.subr.bf16.mxu0 0
    %3441 = vmatpush2.bf16.msra.mxu0 0
    %3442 = vmatprep.subr.bf16.mxu0 0
    %3443 = vmatpush2.bf16.msra.mxu0 0
    %3444 = vmatprep.subr.bf16.mxu0 0
    %3445 = vmatpush2.bf16.msra.mxu0 0
    %3446 = vmatprep.subr.bf16.mxu0 0
    %3447 = vmatpush2.bf16.msra.mxu0 0
    %3448 = vmatprep.subr.bf16.mxu0 0
    %3449 = vmatpush2.bf16.msra.mxu0 0
    %3450 = vmatprep.subr.bf16.mxu0 0
    %3451 = vmatpush2.bf16.msra.mxu0 0
    %3452 = vmatprep.subr.bf16.mxu0 0
    %3453 = vmatpush2.bf16.msra.mxu0 0
    %3454 = vmatprep.subr.bf16.mxu0 0
    %3455 = vmatpush2.bf16.msra.mxu0 0
    %3456 = vmatprep.mubr.bf16.mxu0 0
    %3457 = vmatmul.mubr.bf16.gmra.mxu0 %v3358
    %v3458 = vpop.f32.mrf.mxu0
    %v3459 = vadd.f32 %v3375, %v3458
    %v3460 = vpop.f32.mrf.mxu0
    %v3461 = vpop.f32.mrf.mxu0
    %v3462 = vpop.f32.mrf.mxu0
    %3463 = vdwg.mxu0
    %v3464 = vpack.c.bf16 %v3459, %v3459
    %v3465 = vmul.bf16 %v3464, 1009007652
    %v3466 = vmax.bf16 %v3464, %v3465
    %v3467 = vld [vmem:[#allocation7 + $0xc0] sm:$0xf]
    %v3468 = vld [vmem:[#allocation7 + $0xc4] sm:$0xf]
    %v3469 = vld [vmem:[#allocation7 + $0xc8] sm:$0xf]
    %v3470 = vld [vmem:[#allocation7 + $0xcc] sm:$0xf]
    %v3471 = vld [vmem:[#allocation7 + $0xd0] sm:$0xf]
    %v3472 = vld [vmem:[#allocation7 + $0xd4] sm:$0xf]
    %v3473 = vld [vmem:[#allocation7 + $0xd8] sm:$0xf]
    %v3474 = vld [vmem:[#allocation7 + $0xdc] sm:$0xf]
    %v3475 = vld [vmem:[#allocation7 + $0xe0] sm:$0xf]
    %v3476 = vld [vmem:[#allocation7 + $0xe4] sm:$0xf]
    %v3477 = vld [vmem:[#allocation7 + $0xe8] sm:$0xf]
    %v3478 = vld [vmem:[#allocation7 + $0xec] sm:$0xf]
    %v3479 = vld [vmem:[#allocation7 + $0xf0] sm:$0xf]
    %v3480 = vld [vmem:[#allocation7 + $0xf4] sm:$0xf]
    %v3481 = vld [vmem:[#allocation7 + $0xf8] sm:$0xf]
    %v3482 = vld [vmem:[#allocation7 + $0xfc] sm:$0xf]
    %v3483 = vld [vmem:[#allocation9 + $0x20] ss:$0 sm:$0xff]
    %v3500 = vunpack.c.l.b16 %v3467
    %v3501 = vunpack.c.l.b16 %v3468
    %v3502 = vunpack.c.l.b16 %v3469
    %v3503 = vunpack.c.l.b16 %v3470
    %v3504 = vunpack.c.l.b16 %v3471
    %v3505 = vunpack.c.l.b16 %v3472
    %v3506 = vunpack.c.l.b16 %v3473
    %v3507 = vunpack.c.l.b16 %v3474
    %v3508 = vunpack.c.l.b16 %v3475
    %v3509 = vunpack.c.l.b16 %v3476
    %v3510 = vunpack.c.l.b16 %v3477
    %v3511 = vunpack.c.l.b16 %v3478
    %v3512 = vunpack.c.l.b16 %v3479
    %v3513 = vunpack.c.l.b16 %v3480
    %v3514 = vunpack.c.l.b16 %v3481
    %v3515 = vunpack.c.l.b16 %v3482
    %v3516 = vpack.c.b16 %v3501, %v3500
    %v3517 = vpack.c.b16 %v3503, %v3502
    %v3518 = vpack.c.b16 %v3505, %v3504
    %v3519 = vpack.c.b16 %v3507, %v3506
    %v3520 = vpack.c.b16 %v3509, %v3508
    %v3521 = vpack.c.b16 %v3511, %v3510
    %v3522 = vpack.c.b16 %v3513, %v3512
    %v3523 = vpack.c.b16 %v3515, %v3514
    %3532 = vmatprep.subr.bf16.mxu0 0
    %3533 = vmatpush1.bf16.msra.mxu0 %v3523
    %3534 = vmatprep.subr.bf16.mxu0 0
    %3535 = vmatpush1.bf16.msra.mxu0 %v3522
    %3536 = vmatprep.subr.bf16.mxu0 0
    %3537 = vmatpush1.bf16.msra.mxu0 %v3521
    %3538 = vmatprep.subr.bf16.mxu0 0
    %3539 = vmatpush1.bf16.msra.mxu0 %v3520
    %3540 = vmatprep.subr.bf16.mxu0 0
    %3541 = vmatpush1.bf16.msra.mxu0 %v3519
    %3542 = vmatprep.subr.bf16.mxu0 0
    %3543 = vmatpush1.bf16.msra.mxu0 %v3518
    %3544 = vmatprep.subr.bf16.mxu0 0
    %3545 = vmatpush1.bf16.msra.mxu0 %v3517
    %3546 = vmatprep.subr.bf16.mxu0 0
    %3547 = vmatpush1.bf16.msra.mxu0 %v3516
    %3548 = vmatprep.subr.bf16.mxu0 0
    %3549 = vmatpush2.bf16.msra.mxu0 0
    %3550 = vmatprep.subr.bf16.mxu0 0
    %3551 = vmatpush2.bf16.msra.mxu0 0
    %3552 = vmatprep.subr.bf16.mxu0 0
    %3553 = vmatpush2.bf16.msra.mxu0 0
    %3554 = vmatprep.subr.bf16.mxu0 0
    %3555 = vmatpush2.bf16.msra.mxu0 0
    %3556 = vmatprep.subr.bf16.mxu0 0
    %3557 = vmatpush2.bf16.msra.mxu0 0
    %3558 = vmatprep.subr.bf16.mxu0 0
    %3559 = vmatpush2.bf16.msra.mxu0 0
    %3560 = vmatprep.subr.bf16.mxu0 0
    %3561 = vmatpush2.bf16.msra.mxu0 0
    %3562 = vmatprep.subr.bf16.mxu0 0
    %3563 = vmatpush2.bf16.msra.mxu0 0
    %3564 = vmatprep.mubr.bf16.mxu0 0
    %3565 = vmatmul.mubr.bf16.gmra.mxu0 %v3466
    %v3566 = vpop.f32.mrf.mxu0
    %v3567 = vadd.f32 %v3483, %v3566
    %v3568 = vpop.f32.mrf.mxu0
    %v3569 = vpop.f32.mrf.mxu0
    %v3570 = vpop.f32.mrf.mxu0
    %3571 = vdwg.mxu0
    %v3572 = vpack.c.bf16 %v3567, %v3567
    %v3573 = vmul.bf16 %v3572, 1009007652
    %v3574 = vmax.bf16 %v3572, %v3573
    %v3575 = vadd.bf16 %v3358, %v3574
    %v3576 = vld [vmem:[#allocation7 + $0x100] sm:$0xf]
    %v3577 = vld [vmem:[#allocation7 + $0x104] sm:$0xf]
    %v3578 = vld [vmem:[#allocation7 + $0x108] sm:$0xf]
    %v3579 = vld [vmem:[#allocation7 + $0x10c] sm:$0xf]
    %v3580 = vld [vmem:[#allocation7 + $0x110] sm:$0xf]
    %v3581 = vld [vmem:[#allocation7 + $0x114] sm:$0xf]
    %v3582 = vld [vmem:[#allocation7 + $0x118] sm:$0xf]
    %v3583 = vld [vmem:[#allocation7 + $0x11c] sm:$0xf]
    %v3584 = vld [vmem:[#allocation7 + $0x120] sm:$0xf]
    %v3585 = vld [vmem:[#allocation7 + $0x124] sm:$0xf]
    %v3586 = vld [vmem:[#allocation7 + $0x128] sm:$0xf]
    %v3587 = vld [vmem:[#allocation7 + $0x12c] sm:$0xf]
    %v3588 = vld [vmem:[#allocation7 + $0x130] sm:$0xf]
    %v3589 = vld [vmem:[#allocation7 + $0x134] sm:$0xf]
    %v3590 = vld [vmem:[#allocation7 + $0x138] sm:$0xf]
    %v3591 = vld [vmem:[#allocation7 + $0x13c] sm:$0xf]
    %v3592 = vld [vmem:[#allocation9 + $0x21] ss:$0 sm:$0xff]
    %v3609 = vunpack.c.l.b16 %v3576
    %v3610 = vunpack.c.l.b16 %v3577
    %v3611 = vunpack.c.l.b16 %v3578
    %v3612 = vunpack.c.l.b16 %v3579
    %v3613 = vunpack.c.l.b16 %v3580
    %v3614 = vunpack.c.l.b16 %v3581
    %v3615 = vunpack.c.l.b16 %v3582
    %v3616 = vunpack.c.l.b16 %v3583
    %v3617 = vunpack.c.l.b16 %v3584
    %v3618 = vunpack.c.l.b16 %v3585
    %v3619 = vunpack.c.l.b16 %v3586
    %v3620 = vunpack.c.l.b16 %v3587
    %v3621 = vunpack.c.l.b16 %v3588
    %v3622 = vunpack.c.l.b16 %v3589
    %v3623 = vunpack.c.l.b16 %v3590
    %v3624 = vunpack.c.l.b16 %v3591
    %v3625 = vpack.c.b16 %v3610, %v3609
    %v3626 = vpack.c.b16 %v3612, %v3611
    %v3627 = vpack.c.b16 %v3614, %v3613
    %v3628 = vpack.c.b16 %v3616, %v3615
    %v3629 = vpack.c.b16 %v3618, %v3617
    %v3630 = vpack.c.b16 %v3620, %v3619
    %v3631 = vpack.c.b16 %v3622, %v3621
    %v3632 = vpack.c.b16 %v3624, %v3623
    %3641 = vmatprep.subr.bf16.mxu0 0
    %3642 = vmatpush1.bf16.msra.mxu0 %v3632
    %3643 = vmatprep.subr.bf16.mxu0 0
    %3644 = vmatpush1.bf16.msra.mxu0 %v3631
    %3645 = vmatprep.subr.bf16.mxu0 0
    %3646 = vmatpush1.bf16.msra.mxu0 %v3630
    %3647 = vmatprep.subr.bf16.mxu0 0
    %3648 = vmatpush1.bf16.msra.mxu0 %v3629
    %3649 = vmatprep.subr.bf16.mxu0 0
    %3650 = vmatpush1.bf16.msra.mxu0 %v3628
    %3651 = vmatprep.subr.bf16.mxu0 0
    %3652 = vmatpush1.bf16.msra.mxu0 %v3627
    %3653 = vmatprep.subr.bf16.mxu0 0
    %3654 = vmatpush1.bf16.msra.mxu0 %v3626
    %3655 = vmatprep.subr.bf16.mxu0 0
    %3656 = vmatpush1.bf16.msra.mxu0 %v3625
    %3657 = vmatprep.subr.bf16.mxu0 0
    %3658 = vmatpush2.bf16.msra.mxu0 0
    %3659 = vmatprep.subr.bf16.mxu0 0
    %3660 = vmatpush2.bf16.msra.mxu0 0
    %3661 = vmatprep.subr.bf16.mxu0 0
    %3662 = vmatpush2.bf16.msra.mxu0 0
    %3663 = vmatprep.subr.bf16.mxu0 0
    %3664 = vmatpush2.bf16.msra.mxu0 0
    %3665 = vmatprep.subr.bf16.mxu0 0
    %3666 = vmatpush2.bf16.msra.mxu0 0
    %3667 = vmatprep.subr.bf16.mxu0 0
    %3668 = vmatpush2.bf16.msra.mxu0 0
    %3669 = vmatprep.subr.bf16.mxu0 0
    %3670 = vmatpush2.bf16.msra.mxu0 0
    %3671 = vmatprep.subr.bf16.mxu0 0
    %3672 = vmatpush2.bf16.msra.mxu0 0
    %3673 = vmatprep.mubr.bf16.mxu0 0
    %3674 = vmatmul.mubr.bf16.gmra.mxu0 %v3575
    %v3675 = vpop.f32.mrf.mxu0
    %v3676 = vadd.f32 %v3592, %v3675
    %v3677 = vpop.f32.mrf.mxu0
    %v3678 = vpop.f32.mrf.mxu0
    %v3679 = vpop.f32.mrf.mxu0
    %3680 = vdwg.mxu0
    %v3681 = vpack.c.bf16 %v3676, %v3676
    %v3682 = vmul.bf16 %v3681, 1009007652
    %v3683 = vmax.bf16 %v3681, %v3682
    %v3684 = vld [vmem:[#allocation7 + $0x140] sm:$0xf]
    %v3685 = vld [vmem:[#allocation7 + $0x144] sm:$0xf]
    %v3686 = vld [vmem:[#allocation7 + $0x148] sm:$0xf]
    %v3687 = vld [vmem:[#allocation7 + $0x14c] sm:$0xf]
    %v3688 = vld [vmem:[#allocation7 + $0x150] sm:$0xf]
    %v3689 = vld [vmem:[#allocation7 + $0x154] sm:$0xf]
    %v3690 = vld [vmem:[#allocation7 + $0x158] sm:$0xf]
    %v3691 = vld [vmem:[#allocation7 + $0x15c] sm:$0xf]
    %v3692 = vld [vmem:[#allocation7 + $0x160] sm:$0xf]
    %v3693 = vld [vmem:[#allocation7 + $0x164] sm:$0xf]
    %v3694 = vld [vmem:[#allocation7 + $0x168] sm:$0xf]
    %v3695 = vld [vmem:[#allocation7 + $0x16c] sm:$0xf]
    %v3696 = vld [vmem:[#allocation7 + $0x170] sm:$0xf]
    %v3697 = vld [vmem:[#allocation7 + $0x174] sm:$0xf]
    %v3698 = vld [vmem:[#allocation7 + $0x178] sm:$0xf]
    %v3699 = vld [vmem:[#allocation7 + $0x17c] sm:$0xf]
    %v3700 = vld [vmem:[#allocation9 + $0x22] ss:$0 sm:$0xff]
    %v3717 = vunpack.c.l.b16 %v3684
    %v3718 = vunpack.c.l.b16 %v3685
    %v3719 = vunpack.c.l.b16 %v3686
    %v3720 = vunpack.c.l.b16 %v3687
    %v3721 = vunpack.c.l.b16 %v3688
    %v3722 = vunpack.c.l.b16 %v3689
    %v3723 = vunpack.c.l.b16 %v3690
    %v3724 = vunpack.c.l.b16 %v3691
    %v3725 = vunpack.c.l.b16 %v3692
    %v3726 = vunpack.c.l.b16 %v3693
    %v3727 = vunpack.c.l.b16 %v3694
    %v3728 = vunpack.c.l.b16 %v3695
    %v3729 = vunpack.c.l.b16 %v3696
    %v3730 = vunpack.c.l.b16 %v3697
    %v3731 = vunpack.c.l.b16 %v3698
    %v3732 = vunpack.c.l.b16 %v3699
    %v3733 = vpack.c.b16 %v3718, %v3717
    %v3734 = vpack.c.b16 %v3720, %v3719
    %v3735 = vpack.c.b16 %v3722, %v3721
    %v3736 = vpack.c.b16 %v3724, %v3723
    %v3737 = vpack.c.b16 %v3726, %v3725
    %v3738 = vpack.c.b16 %v3728, %v3727
    %v3739 = vpack.c.b16 %v3730, %v3729
    %v3740 = vpack.c.b16 %v3732, %v3731
    %3749 = vmatprep.subr.bf16.mxu0 0
    %3750 = vmatpush1.bf16.msra.mxu0 %v3740
    %3751 = vmatprep.subr.bf16.mxu0 0
    %3752 = vmatpush1.bf16.msra.mxu0 %v3739
    %3753 = vmatprep.subr.bf16.mxu0 0
    %3754 = vmatpush1.bf16.msra.mxu0 %v3738
    %3755 = vmatprep.subr.bf16.mxu0 0
    %3756 = vmatpush1.bf16.msra.mxu0 %v3737
    %3757 = vmatprep.subr.bf16.mxu0 0
    %3758 = vmatpush1.bf16.msra.mxu0 %v3736
    %3759 = vmatprep.subr.bf16.mxu0 0
    %3760 = vmatpush1.bf16.msra.mxu0 %v3735
    %3761 = vmatprep.subr.bf16.mxu0 0
    %3762 = vmatpush1.bf16.msra.mxu0 %v3734
    %3763 = vmatprep.subr.bf16.mxu0 0
    %3764 = vmatpush1.bf16.msra.mxu0 %v3733
    %3765 = vmatprep.subr.bf16.mxu0 0
    %3766 = vmatpush2.bf16.msra.mxu0 0
    %3767 = vmatprep.subr.bf16.mxu0 0
    %3768 = vmatpush2.bf16.msra.mxu0 0
    %3769 = vmatprep.subr.bf16.mxu0 0
    %3770 = vmatpush2.bf16.msra.mxu0 0
    %3771 = vmatprep.subr.bf16.mxu0 0
    %3772 = vmatpush2.bf16.msra.mxu0 0
    %3773 = vmatprep.subr.bf16.mxu0 0
    %3774 = vmatpush2.bf16.msra.mxu0 0
    %3775 = vmatprep.subr.bf16.mxu0 0
    %3776 = vmatpush2.bf16.msra.mxu0 0
    %3777 = vmatprep.subr.bf16.mxu0 0
    %3778 = vmatpush2.bf16.msra.mxu0 0
    %3779 = vmatprep.subr.bf16.mxu0 0
    %3780 = vmatpush2.bf16.msra.mxu0 0
    %3781 = vmatprep.mubr.bf16.mxu0 0
    %3782 = vmatmul.mubr.bf16.gmra.mxu0 %v3683
    %v3783 = vpop.f32.mrf.mxu0
    %v3784 = vadd.f32 %v3700, %v3783
    %v3785 = vpop.f32.mrf.mxu0
    %v3786 = vpop.f32.mrf.mxu0
    %v3787 = vpop.f32.mrf.mxu0
    %3788 = vdwg.mxu0
    %v3789 = vpack.c.bf16 %v3784, %v3784
    %v3790 = vmul.bf16 %v3789, 1009007652
    %v3791 = vmax.bf16 %v3789, %v3790
    %v3792 = vld [vmem:[#allocation7 + $0x180] sm:$0xf]
    %v3793 = vld [vmem:[#allocation7 + $0x184] sm:$0xf]
    %v3794 = vld [vmem:[#allocation7 + $0x188] sm:$0xf]
    %v3795 = vld [vmem:[#allocation7 + $0x18c] sm:$0xf]
    %v3796 = vld [vmem:[#allocation7 + $0x190] sm:$0xf]
    %v3797 = vld [vmem:[#allocation7 + $0x194] sm:$0xf]
    %v3798 = vld [vmem:[#allocation7 + $0x198] sm:$0xf]
    %v3799 = vld [vmem:[#allocation7 + $0x19c] sm:$0xf]
    %v3800 = vld [vmem:[#allocation7 + $0x1a0] sm:$0xf]
    %v3801 = vld [vmem:[#allocation7 + $0x1a4] sm:$0xf]
    %v3802 = vld [vmem:[#allocation7 + $0x1a8] sm:$0xf]
    %v3803 = vld [vmem:[#allocation7 + $0x1ac] sm:$0xf]
    %v3804 = vld [vmem:[#allocation7 + $0x1b0] sm:$0xf]
    %v3805 = vld [vmem:[#allocation7 + $0x1b4] sm:$0xf]
    %v3806 = vld [vmem:[#allocation7 + $0x1b8] sm:$0xf]
    %v3807 = vld [vmem:[#allocation7 + $0x1bc] sm:$0xf]
    %v3808 = vld [vmem:[#allocation9 + $0x23] ss:$0 sm:$0xff]
    %v3825 = vunpack.c.l.b16 %v3792
    %v3826 = vunpack.c.l.b16 %v3793
    %v3827 = vunpack.c.l.b16 %v3794
    %v3828 = vunpack.c.l.b16 %v3795
    %v3829 = vunpack.c.l.b16 %v3796
    %v3830 = vunpack.c.l.b16 %v3797
    %v3831 = vunpack.c.l.b16 %v3798
    %v3832 = vunpack.c.l.b16 %v3799
    %v3833 = vunpack.c.l.b16 %v3800
    %v3834 = vunpack.c.l.b16 %v3801
    %v3835 = vunpack.c.l.b16 %v3802
    %v3836 = vunpack.c.l.b16 %v3803
    %v3837 = vunpack.c.l.b16 %v3804
    %v3838 = vunpack.c.l.b16 %v3805
    %v3839 = vunpack.c.l.b16 %v3806
    %v3840 = vunpack.c.l.b16 %v3807
    %v3841 = vpack.c.b16 %v3826, %v3825
    %v3842 = vpack.c.b16 %v3828, %v3827
    %v3843 = vpack.c.b16 %v3830, %v3829
    %v3844 = vpack.c.b16 %v3832, %v3831
    %v3845 = vpack.c.b16 %v3834, %v3833
    %v3846 = vpack.c.b16 %v3836, %v3835
    %v3847 = vpack.c.b16 %v3838, %v3837
    %v3848 = vpack.c.b16 %v3840, %v3839
    %3857 = vmatprep.subr.bf16.mxu0 0
    %3858 = vmatpush1.bf16.msra.mxu0 %v3848
    %3859 = vmatprep.subr.bf16.mxu0 0
    %3860 = vmatpush1.bf16.msra.mxu0 %v3847
    %3861 = vmatprep.subr.bf16.mxu0 0
    %3862 = vmatpush1.bf16.msra.mxu0 %v3846
    %3863 = vmatprep.subr.bf16.mxu0 0
    %3864 = vmatpush1.bf16.msra.mxu0 %v3845
    %3865 = vmatprep.subr.bf16.mxu0 0
    %3866 = vmatpush1.bf16.msra.mxu0 %v3844
    %3867 = vmatprep.subr.bf16.mxu0 0
    %3868 = vmatpush1.bf16.msra.mxu0 %v3843
    %3869 = vmatprep.subr.bf16.mxu0 0
    %3870 = vmatpush1.bf16.msra.mxu0 %v3842
    %3871 = vmatprep.subr.bf16.mxu0 0
    %3872 = vmatpush1.bf16.msra.mxu0 %v3841
    %3873 = vmatprep.subr.bf16.mxu0 0
    %3874 = vmatpush2.bf16.msra.mxu0 0
    %3875 = vmatprep.subr.bf16.mxu0 0
    %3876 = vmatpush2.bf16.msra.mxu0 0
    %3877 = vmatprep.subr.bf16.mxu0 0
    %3878 = vmatpush2.bf16.msra.mxu0 0
    %3879 = vmatprep.subr.bf16.mxu0 0
    %3880 = vmatpush2.bf16.msra.mxu0 0
    %3881 = vmatprep.subr.bf16.mxu0 0
    %3882 = vmatpush2.bf16.msra.mxu0 0
    %3883 = vmatprep.subr.bf16.mxu0 0
    %3884 = vmatpush2.bf16.msra.mxu0 0
    %3885 = vmatprep.subr.bf16.mxu0 0
    %3886 = vmatpush2.bf16.msra.mxu0 0
    %3887 = vmatprep.subr.bf16.mxu0 0
    %3888 = vmatpush2.bf16.msra.mxu0 0
    %3889 = vmatprep.mubr.bf16.mxu0 0
    %3890 = vmatmul.mubr.bf16.gmra.mxu0 %v3791
    %v3891 = vpop.f32.mrf.mxu0
    %v3892 = vadd.f32 %v3808, %v3891
    %v3893 = vpop.f32.mrf.mxu0
    %v3894 = vpop.f32.mrf.mxu0
    %v3895 = vpop.f32.mrf.mxu0
    %3896 = vdwg.mxu0
    %v3897 = vpack.c.bf16 %v3892, %v3892
    %v3898 = vmul.bf16 %v3897, 1009007652
    %v3899 = vmax.bf16 %v3897, %v3898
    %v3900 = vadd.bf16 %v3683, %v3899
    %v3901 = vld [vmem:[#allocation7 + $0x1c0] sm:$0xf]
    %v3902 = vld [vmem:[#allocation7 + $0x1c4] sm:$0xf]
    %v3903 = vld [vmem:[#allocation7 + $0x1c8] sm:$0xf]
    %v3904 = vld [vmem:[#allocation7 + $0x1cc] sm:$0xf]
    %v3905 = vld [vmem:[#allocation7 + $0x1d0] sm:$0xf]
    %v3906 = vld [vmem:[#allocation7 + $0x1d4] sm:$0xf]
    %v3907 = vld [vmem:[#allocation7 + $0x1d8] sm:$0xf]
    %v3908 = vld [vmem:[#allocation7 + $0x1dc] sm:$0xf]
    %v3909 = vld [vmem:[#allocation7 + $0x1e0] sm:$0xf]
    %v3910 = vld [vmem:[#allocation7 + $0x1e4] sm:$0xf]
    %v3911 = vld [vmem:[#allocation7 + $0x1e8] sm:$0xf]
    %v3912 = vld [vmem:[#allocation7 + $0x1ec] sm:$0xf]
    %v3913 = vld [vmem:[#allocation7 + $0x1f0] sm:$0xf]
    %v3914 = vld [vmem:[#allocation7 + $0x1f4] sm:$0xf]
    %v3915 = vld [vmem:[#allocation7 + $0x1f8] sm:$0xf]
    %v3916 = vld [vmem:[#allocation7 + $0x1fc] sm:$0xf]
    %v3917 = vld [vmem:[#allocation9 + $0x24] ss:$0 sm:$0xff]
    %v3934 = vunpack.c.l.b16 %v3901
    %v3935 = vunpack.c.l.b16 %v3902
    %v3936 = vunpack.c.l.b16 %v3903
    %v3937 = vunpack.c.l.b16 %v3904
    %v3938 = vunpack.c.l.b16 %v3905
    %v3939 = vunpack.c.l.b16 %v3906
    %v3940 = vunpack.c.l.b16 %v3907
    %v3941 = vunpack.c.l.b16 %v3908
    %v3942 = vunpack.c.l.b16 %v3909
    %v3943 = vunpack.c.l.b16 %v3910
    %v3944 = vunpack.c.l.b16 %v3911
    %v3945 = vunpack.c.l.b16 %v3912
    %v3946 = vunpack.c.l.b16 %v3913
    %v3947 = vunpack.c.l.b16 %v3914
    %v3948 = vunpack.c.l.b16 %v3915
    %v3949 = vunpack.c.l.b16 %v3916
    %v3950 = vpack.c.b16 %v3935, %v3934
    %v3951 = vpack.c.b16 %v3937, %v3936
    %v3952 = vpack.c.b16 %v3939, %v3938
    %v3953 = vpack.c.b16 %v3941, %v3940
    %v3954 = vpack.c.b16 %v3943, %v3942
    %v3955 = vpack.c.b16 %v3945, %v3944
    %v3956 = vpack.c.b16 %v3947, %v3946
    %v3957 = vpack.c.b16 %v3949, %v3948
    %3966 = vmatprep.subr.bf16.mxu0 0
    %3967 = vmatpush1.bf16.msra.mxu0 %v3957
    %3968 = vmatprep.subr.bf16.mxu0 0
    %3969 = vmatpush1.bf16.msra.mxu0 %v3956
    %3970 = vmatprep.subr.bf16.mxu0 0
    %3971 = vmatpush1.bf16.msra.mxu0 %v3955
    %3972 = vmatprep.subr.bf16.mxu0 0
    %3973 = vmatpush1.bf16.msra.mxu0 %v3954
    %3974 = vmatprep.subr.bf16.mxu0 0
    %3975 = vmatpush1.bf16.msra.mxu0 %v3953
    %3976 = vmatprep.subr.bf16.mxu0 0
    %3977 = vmatpush1.bf16.msra.mxu0 %v3952
    %3978 = vmatprep.subr.bf16.mxu0 0
    %3979 = vmatpush1.bf16.msra.mxu0 %v3951
    %3980 = vmatprep.subr.bf16.mxu0 0
    %3981 = vmatpush1.bf16.msra.mxu0 %v3950
    %3982 = vmatprep.subr.bf16.mxu0 0
    %3983 = vmatpush2.bf16.msra.mxu0 0
    %3984 = vmatprep.subr.bf16.mxu0 0
    %3985 = vmatpush2.bf16.msra.mxu0 0
    %3986 = vmatprep.subr.bf16.mxu0 0
    %3987 = vmatpush2.bf16.msra.mxu0 0
    %3988 = vmatprep.subr.bf16.mxu0 0
    %3989 = vmatpush2.bf16.msra.mxu0 0
    %3990 = vmatprep.subr.bf16.mxu0 0
    %3991 = vmatpush2.bf16.msra.mxu0 0
    %3992 = vmatprep.subr.bf16.mxu0 0
    %3993 = vmatpush2.bf16.msra.mxu0 0
    %3994 = vmatprep.subr.bf16.mxu0 0
    %3995 = vmatpush2.bf16.msra.mxu0 0
    %3996 = vmatprep.subr.bf16.mxu0 0
    %3997 = vmatpush2.bf16.msra.mxu0 0
    %3998 = vmatprep.mubr.bf16.mxu0 0
    %3999 = vmatmul.mubr.bf16.gmra.mxu0 %v3900
    %v4000 = vpop.f32.mrf.mxu0
    %v4001 = vadd.f32 %v3917, %v4000
    %v4002 = vpop.f32.mrf.mxu0
    %v4003 = vpop.f32.mrf.mxu0
    %v4004 = vpop.f32.mrf.mxu0
    %4005 = vdwg.mxu0
    %v4006 = vpack.c.bf16 %v4001, %v4001
    %4007 = vst [vmem:[%s5] sm:$0xf] %v4006
    // Predicated region
    $region42: #{pnet_forward.1} parent=1 // pred_check
      _
    $region43: #{pnet_forward.1} parent=1 // pred_check_branch
      %4009 = sbr.rel (0) target = $region45
    $region44: #{pnet_forward.1} parent=1 // pred_region
      _
    $region45: #{pnet_forward.1} parent=1 // pred_fallthru
      _
    // Predicated region
    $region46: #{pnet_forward.1} parent=1 // pred_check
      _
    $region47: #{pnet_forward.1} parent=1 // pred_check_branch
      %4011 = sbr.rel (0) target = $region49
    $region48: #{pnet_forward.1} parent=1 // pred_region
      _
    $region49: #{pnet_forward.1} parent=1 // pred_fallthru
      _
    %4012 = vsyncpa [#allocation3], 1
    %4013 = vsyncpa [#allocation5], 1
    %4014 = vsyncpa [#allocation8], 1

</llo_original>
